<compile_context>
chip_gen: v5e
topology: v5e:2x2
jax: 0.10.0
libtpu: 0.0.40
codegen_flags: <defaults>
</compile_context>

<pallas_src>
import numpy as np
import jax
import jax.numpy as jnp
from jax import lax
from jax.experimental import pallas as pl
from jax.experimental.pallas import tpu as pltpu

K = 7          # kernel size
PAD = K // 2   # 3
EPS = 0.99     # 'ga' RBF eps used by the original module


# TODO(synk): the original module builds its weights with the `rbf` package
# ('ga' kernel, eps=0.99, derivative orders).  Those are analytic Gaussian
# derivatives, so we regenerate them in closed (separable) form instead of
# reading .pt files or importing rbf.
def _gauss_taps_1d(eps: float = EPS):
    """1D factors of the separable Gaussian-derivative kernels (float64)."""
    t = np.arange(K, dtype=np.float64) - PAD
    e2 = eps * eps
    g0 = np.exp(-e2 * t * t)                        # g
    g1 = -2.0 * e2 * t * g0                         # g'
    g2 = (4.0 * e2 * e2 * t * t - 2.0 * e2) * g0    # g''
    return g0, g1, g2


def _conv_matrix_right(taps, n):
    """B with (x @ B)[.., o] = sum_k taps[k] * x[.., clip(o - 3 + k, 0, n-1)].

    This is exactly a 7-tap cross-correlation along the last axis with
    replicate ("edge") padding folded into the first/last columns.
    """
    B = np.zeros((n, n), np.float64)
    for o in range(n):
        for k in range(K):
            i = min(max(o - PAD + k, 0), n - 1)
            B[i, o] += taps[k]
    return B


def _conv_matrix_left(taps, n):
    """A with (A @ x)[o, ..] = sum_k taps[k] * x[clip(o - 3 + k, 0, n-1), ..]."""
    return _conv_matrix_right(taps, n).T


def _diff_kernel(a_ref, b_ref, x_ref, out_ref):
    """One grid step: NB images stacked along sublanes, x_ref is (NB*H, W).

    a_ref: (3, R, R)  block-diagonal H-direction matrices (g, -g', g'')
    b_ref: (3, W, W)  W-direction matrices                (g, -g', g'')
    out_ref: (5, R, W) -> ux, uy, uxx, uyy, uxy
    """
    dot = lambda p, q: jnp.dot(p, q, preferred_element_type=jnp.float32,
                               precision=lax.Precision.HIGHEST)
    x = x_ref[...]                                  # (R, W) f32

    # W-direction separable passes (shared by all outputs).
    r_g = dot(x, b_ref[0])                          # row conv with g
    r_dx = dot(x, b_ref[1])                         # row conv with -g'
    r_xx = dot(x, b_ref[2])                         # row conv with g''

    # H-direction separable passes (block-diagonal left-multiplies).
    a_g, a_dy, a_dyy = a_ref[0], a_ref[1], a_ref[2]
    uy = dot(a_dy, r_g)
    out_ref[0] = dot(a_g, r_dx)                     # ux
    out_ref[1] = uy                                 # uy
    out_ref[2] = dot(a_g, r_xx)                     # uxx
    out_ref[3] = dot(a_dyy, r_g)                    # uyy
    out_ref[4] = dot(a_g, dot(uy, b_ref[1]))        # uxy = dx(uy), fused


@jax.jit
def diff_forward(u):
    """Diff(ord=2).forward(u): returns (ux, uy, uxx, uyy, uxy), each NCHW."""
    B, C, H, W = u.shape
    N = B * C

    # Images per grid step: cap the stacked-row count (the block-diagonal
    # H-matrix is (NB*H)^2 f32) and keep >= 2 grid steps when possible so both
    # v7x TensorCores get work under dimension_semantics=("parallel",).
    nb = max(1, min(N, 256 // max(H, 1)))
    steps = -(-N // nb)
    if steps < 2 and N > 1:
        nb = -(-N // 2)
        steps = -(-N // nb)
    if (nb * H) % 8 != 0:            # sublane-tile safety: fall back to 1 step
        nb, steps = N, 1
    R = nb * H
    Npad = steps * nb

    # Constant conv matrices (built at trace time; replicate-pad folded in).
    g0, g1, g2 = _gauss_taps_1d()
    b_g, b_dx, b_dxx = g0, -g1, g2                  # row (W / lane) taps
    a_g, a_dy, a_dyy = g0, -g1, g2                  # column (H / sublane) taps
    eye = np.eye(nb)
    A_all = np.stack([np.kron(eye, _conv_matrix_left(t, H))
                      for t in (a_g, a_dy, a_dyy)]).astype(np.float32)  # (3,R,R)
    B_all = np.stack([_conv_matrix_right(t, W)
                      for t in (b_g, b_dx, b_dxx)]).astype(np.float32)  # (3,W,W)

    x = u.reshape(N, H, W).astype(jnp.float32)
    if Npad != N:                                   # pad batch (sliced off later)
        x = jnp.concatenate([x, jnp.zeros((Npad - N, H, W), jnp.float32)], 0)
    x2 = x.reshape(Npad * H, W)                     # pure reshape, no transpose

    out = pl.pallas_call(
        _diff_kernel,
        out_shape=jax.ShapeDtypeStruct((5, Npad * H, W), jnp.float32),
        grid=(steps,),
        in_specs=[
            pl.BlockSpec((3, R, R), lambda i: (0, 0, 0)),   # H-dir matrices
            pl.BlockSpec((3, W, W), lambda i: (0, 0, 0)),   # W-dir matrices
            pl.BlockSpec((R, W), lambda i: (i, 0)),         # NB stacked images
        ],
        out_specs=pl.BlockSpec((5, R, W), lambda i: (0, i, 0)),
        compiler_params=pltpu.CompilerParams(
            dimension_semantics=("parallel",)),
    )(jnp.asarray(A_all), jnp.asarray(B_all), x2)

    # Pure reshapes / slice: no transpose passes over the 5x output.
    out = out.reshape(5, Npad, H, W)[:, :N].reshape(5, B, C, H, W)
    return out[0], out[1], out[2], out[3], out[4]


# ----------------------------------------------------------------------------
# Independent reference: 7x7 kernels in closed 2D form + XLA depthwise conv.
# ----------------------------------------------------------------------------
def _make_2d_kernels(eps: float = EPS):
    i = np.arange(K, dtype=np.float64)[:, None]
    j = np.arange(K, dtype=np.float64)[None, :]
    X, Y = j - PAD, PAD - i
    e2 = eps * eps
    Gk = np.exp(-e2 * (X * X + Y * Y))
    dX = -2.0 * e2 * X * Gk
    dY = -2.0 * e2 * Y * Gk
    dXX = (4.0 * e2 * e2 * X * X - 2.0 * e2) * Gk
    dYY = (4.0 * e2 * e2 * Y * Y - 2.0 * e2) * Gk
    return [np.asarray(k, np.float32) for k in (-dX, dY, dXX, dYY)]


def _ref_depthwise(u, k77):
    _, C, _, _ = u.shape
    up = jnp.pad(u, ((0, 0), (0, 0), (PAD, PAD), (PAD, PAD)), mode="edge")
    w = jnp.broadcast_to(jnp.asarray(k77).reshape(1, 1, K, K), (C, 1, K, K))
    return jax.lax.conv_general_dilated(
        up, w, window_strides=(1, 1), padding="VALID",
        dimension_numbers=("NCHW", "OIHW", "NCHW"), feature_group_count=C,
        precision=jax.lax.Precision.HIGHEST)


if __name__ == "__main__":
    key = jax.random.PRNGKey(0)
    u = jax.random.normal(key, (2, 4, 16, 16), dtype=jnp.float32)   # NCHW

    outs = diff_forward(u)
    outs = jax.block_until_ready(outs)

    kdx, kdy, kdxx, kdyy = _make_2d_kernels()
    ux_r = _ref_depthwise(u, kdx)
    uy_r = _ref_depthwise(u, kdy)
    uxx_r = _ref_depthwise(u, kdxx)
    uyy_r = _ref_depthwise(u, kdyy)
    uxy_r = _ref_depthwise(uy_r, kdx)

    for o, r in zip(outs, (ux_r, uy_r, uxx_r, uyy_r, uxy_r)):
        assert o.shape == r.shape and o.dtype == jnp.float32
        np.testing.assert_allclose(np.asarray(o), np.asarray(r),
                                   rtol=1e-4, atol=1e-4)
    print("KERNEL_OK")
</pallas_src>

<mosaic_0001>
module attributes {stable_mosaic.version = 11 : i64} {
  func.func @_diff_kernel(%arg0: i32, %arg1: memref<3x64x64xf32, #tpu.memory_space<vmem>>, %arg2: memref<3x16x16xf32, #tpu.memory_space<vmem>>, %arg3: memref<64x16xf32, #tpu.memory_space<vmem>>, %arg4: memref<5x64x16xf32, #tpu.memory_space<vmem>>) attributes {dimension_semantics = [#tpu.dimension_semantics<parallel>], iteration_bounds = array<i64: 2>, scalar_prefetch = 0 : i64, scratch_operands = 0 : i64, tpu.core_type = #tpu.core_type<tc>, window_params = [{pipeline_mode = #tpu.pipeline_mode<synchronous>, transform_indices = @transform_0, window_bounds = array<i64: 3, 64, 64>}, {pipeline_mode = #tpu.pipeline_mode<synchronous>, transform_indices = @transform_1, window_bounds = array<i64: 3, 16, 16>}, {transform_indices = @transform_2, window_bounds = array<i64: 64, 16>}, {transform_indices = @transform_3, window_bounds = array<i64: 5, 64, 16>}]} {
    %c0 = arith.constant 0 : index
    %c0_0 = arith.constant 0 : index
    %0 = vector.load %arg3[%c0, %c0_0] : memref<64x16xf32, #tpu.memory_space<vmem>>, vector<64x16xf32>
    %c0_1 = arith.constant 0 : index
    %c0_2 = arith.constant 0 : index
    %c0_3 = arith.constant 0 : index
    %1 = vector.load %arg2[%c0_1, %c0_2, %c0_3] : memref<3x16x16xf32, #tpu.memory_space<vmem>>, vector<1x16x16xf32>
    %2 = vector.shape_cast %1 : vector<1x16x16xf32> to vector<16x16xf32>
    %cst = arith.constant dense<0.000000e+00> : vector<64x16xf32>
    %3 = tpu.matmul %0, %2, %cst {dimension_numbers = #tpu.dot_dimension_numbers<[1], [0], [0], [1], [0, 0, 1, 1], [], []>, precision = #tpu.contract_precision<fp32>} : vector<64x16xf32>, vector<16x16xf32>, vector<64x16xf32> -> vector<64x16xf32>
    %c1 = arith.constant 1 : index
    %c0_4 = arith.constant 0 : index
    %c0_5 = arith.constant 0 : index
    %4 = vector.load %arg2[%c1, %c0_4, %c0_5] : memref<3x16x16xf32, #tpu.memory_space<vmem>>, vector<1x16x16xf32>
    %5 = vector.shape_cast %4 : vector<1x16x16xf32> to vector<16x16xf32>
    %cst_6 = arith.constant dense<0.000000e+00> : vector<64x16xf32>
    %6 = tpu.matmul %0, %5, %cst_6 {dimension_numbers = #tpu.dot_dimension_numbers<[1], [0], [0], [1], [0, 0, 1, 1], [], []>, precision = #tpu.contract_precision<fp32>} : vector<64x16xf32>, vector<16x16xf32>, vector<64x16xf32> -> vector<64x16xf32>
    %c2 = arith.constant 2 : index
    %c0_7 = arith.constant 0 : index
    %c0_8 = arith.constant 0 : index
    %7 = vector.load %arg2[%c2, %c0_7, %c0_8] : memref<3x16x16xf32, #tpu.memory_space<vmem>>, vector<1x16x16xf32>
    %8 = vector.shape_cast %7 : vector<1x16x16xf32> to vector<16x16xf32>
    %cst_9 = arith.constant dense<0.000000e+00> : vector<64x16xf32>
    %9 = tpu.matmul %0, %8, %cst_9 {dimension_numbers = #tpu.dot_dimension_numbers<[1], [0], [0], [1], [0, 0, 1, 1], [], []>, precision = #tpu.contract_precision<fp32>} : vector<64x16xf32>, vector<16x16xf32>, vector<64x16xf32> -> vector<64x16xf32>
    %c0_10 = arith.constant 0 : index
    %c0_11 = arith.constant 0 : index
    %c0_12 = arith.constant 0 : index
    %10 = vector.load %arg1[%c0_10, %c0_11, %c0_12] : memref<3x64x64xf32, #tpu.memory_space<vmem>>, vector<1x64x64xf32>
    %11 = vector.shape_cast %10 : vector<1x64x64xf32> to vector<64x64xf32>
    %c1_13 = arith.constant 1 : index
    %c0_14 = arith.constant 0 : index
    %c0_15 = arith.constant 0 : index
    %12 = vector.load %arg1[%c1_13, %c0_14, %c0_15] : memref<3x64x64xf32, #tpu.memory_space<vmem>>, vector<1x64x64xf32>
    %13 = vector.shape_cast %12 : vector<1x64x64xf32> to vector<64x64xf32>
    %c2_16 = arith.constant 2 : index
    %c0_17 = arith.constant 0 : index
    %c0_18 = arith.constant 0 : index
    %14 = vector.load %arg1[%c2_16, %c0_17, %c0_18] : memref<3x64x64xf32, #tpu.memory_space<vmem>>, vector<1x64x64xf32>
    %15 = vector.shape_cast %14 : vector<1x64x64xf32> to vector<64x64xf32>
    %cst_19 = arith.constant dense<0.000000e+00> : vector<64x16xf32>
    %16 = tpu.matmul %13, %3, %cst_19 {dimension_numbers = #tpu.dot_dimension_numbers<[1], [0], [0], [1], [0, 0, 1, 1], [], []>, precision = #tpu.contract_precision<fp32>} : vector<64x64xf32>, vector<64x16xf32>, vector<64x16xf32> -> vector<64x16xf32>
    %cst_20 = arith.constant dense<0.000000e+00> : vector<64x16xf32>
    %17 = tpu.matmul %11, %6, %cst_20 {dimension_numbers = #tpu.dot_dimension_numbers<[1], [0], [0], [1], [0, 0, 1, 1], [], []>, precision = #tpu.contract_precision<fp32>} : vector<64x64xf32>, vector<64x16xf32>, vector<64x16xf32> -> vector<64x16xf32>
    %c0_21 = arith.constant 0 : index
    %c0_22 = arith.constant 0 : index
    %c0_23 = arith.constant 0 : index
    %18 = vector.load %arg4[%c0_21, %c0_22, %c0_23] : memref<5x64x16xf32, #tpu.memory_space<vmem>>, vector<1x64x16xf32>
    %19 = vector.shape_cast %18 : vector<1x64x16xf32> to vector<64x16xf32>
    %20 = vector.shape_cast %17 : vector<64x16xf32> to vector<1x64x16xf32>
    tpu.vector_store %arg4[%c0_21, %c0_22, %c0_23], %20 {strides = array<i32>} : memref<5x64x16xf32, #tpu.memory_space<vmem>>, vector<1x64x16xf32>,
    %c1_24 = arith.constant 1 : index
    %c0_25 = arith.constant 0 : index
    %c0_26 = arith.constant 0 : index
    %21 = vector.load %arg4[%c1_24, %c0_25, %c0_26] : memref<5x64x16xf32, #tpu.memory_space<vmem>>, vector<1x64x16xf32>
    %22 = vector.shape_cast %21 : vector<1x64x16xf32> to vector<64x16xf32>
    %23 = vector.shape_cast %16 : vector<64x16xf32> to vector<1x64x16xf32>
    tpu.vector_store %arg4[%c1_24, %c0_25, %c0_26], %23 {strides = array<i32>} : memref<5x64x16xf32, #tpu.memory_space<vmem>>, vector<1x64x16xf32>,
    %cst_27 = arith.constant dense<0.000000e+00> : vector<64x16xf32>
    %24 = tpu.matmul %11, %9, %cst_27 {dimension_numbers = #tpu.dot_dimension_numbers<[1], [0], [0], [1], [0, 0, 1, 1], [], []>, precision = #tpu.contract_precision<fp32>} : vector<64x64xf32>, vector<64x16xf32>, vector<64x16xf32> -> vector<64x16xf32>
    %c2_28 = arith.constant 2 : index
    %c0_29 = arith.constant 0 : index
    %c0_30 = arith.constant 0 : index
    %25 = vector.load %arg4[%c2_28, %c0_29, %c0_30] : memref<5x64x16xf32, #tpu.memory_space<vmem>>, vector<1x64x16xf32>
    %26 = vector.shape_cast %25 : vector<1x64x16xf32> to vector<64x16xf32>
    %27 = vector.shape_cast %24 : vector<64x16xf32> to vector<1x64x16xf32>
    tpu.vector_store %arg4[%c2_28, %c0_29, %c0_30], %27 {strides = array<i32>} : memref<5x64x16xf32, #tpu.memory_space<vmem>>, vector<1x64x16xf32>,
    %cst_31 = arith.constant dense<0.000000e+00> : vector<64x16xf32>
    %28 = tpu.matmul %15, %3, %cst_31 {dimension_numbers = #tpu.dot_dimension_numbers<[1], [0], [0], [1], [0, 0, 1, 1], [], []>, precision = #tpu.contract_precision<fp32>} : vector<64x64xf32>, vector<64x16xf32>, vector<64x16xf32> -> vector<64x16xf32>
    %c3 = arith.constant 3 : index
    %c0_32 = arith.constant 0 : index
    %c0_33 = arith.constant 0 : index
    %29 = vector.load %arg4[%c3, %c0_32, %c0_33] : memref<5x64x16xf32, #tpu.memory_space<vmem>>, vector<1x64x16xf32>
    %30 = vector.shape_cast %29 : vector<1x64x16xf32> to vector<64x16xf32>
    %31 = vector.shape_cast %28 : vector<64x16xf32> to vector<1x64x16xf32>
    tpu.vector_store %arg4[%c3, %c0_32, %c0_33], %31 {strides = array<i32>} : memref<5x64x16xf32, #tpu.memory_space<vmem>>, vector<1x64x16xf32>,
    %c1_34 = arith.constant 1 : index
    %c0_35 = arith.constant 0 : index
    %c0_36 = arith.constant 0 : index
    %32 = vector.load %arg2[%c1_34, %c0_35, %c0_36] : memref<3x16x16xf32, #tpu.memory_space<vmem>>, vector<1x16x16xf32>
    %33 = vector.shape_cast %32 : vector<1x16x16xf32> to vector<16x16xf32>
    %cst_37 = arith.constant dense<0.000000e+00> : vector<64x16xf32>
    %34 = tpu.matmul %16, %33, %cst_37 {dimension_numbers = #tpu.dot_dimension_numbers<[1], [0], [0], [1], [0, 0, 1, 1], [], []>, precision = #tpu.contract_precision<fp32>} : vector<64x16xf32>, vector<16x16xf32>, vector<64x16xf32> -> vector<64x16xf32>
    %cst_38 = arith.constant dense<0.000000e+00> : vector<64x16xf32>
    %35 = tpu.matmul %11, %34, %cst_38 {dimension_numbers = #tpu.dot_dimension_numbers<[1], [0], [0], [1], [0, 0, 1, 1], [], []>, precision = #tpu.contract_precision<fp32>} : vector<64x64xf32>, vector<64x16xf32>, vector<64x16xf32> -> vector<64x16xf32>
    %c4 = arith.constant 4 : index
    %c0_39 = arith.constant 0 : index
    %c0_40 = arith.constant 0 : index
    %36 = vector.load %arg4[%c4, %c0_39, %c0_40] : memref<5x64x16xf32, #tpu.memory_space<vmem>>, vector<1x64x16xf32>
    %37 = vector.shape_cast %36 : vector<1x64x16xf32> to vector<64x16xf32>
    %38 = vector.shape_cast %35 : vector<64x16xf32> to vector<1x64x16xf32>
    tpu.vector_store %arg4[%c4, %c0_39, %c0_40], %38 {strides = array<i32>} : memref<5x64x16xf32, #tpu.memory_space<vmem>>, vector<1x64x16xf32>,
    return
  }
  func.func @transform_0(%arg0: i32) -> (i32, i32, i32) {
    %c0_i32 = arith.constant 0 : i32
    %c0_i32_0 = arith.constant 0 : i32
    %c0_i32_1 = arith.constant 0 : i32
    %c0_i32_2 = arith.constant 0 : i32
    return %c0_i32, %c0_i32_0, %c0_i32_1 : i32, i32, i32
  }
  func.func @transform_1(%arg0: i32) -> (i32, i32, i32) {
    %c0_i32 = arith.constant 0 : i32
    %c0_i32_0 = arith.constant 0 : i32
    %c0_i32_1 = arith.constant 0 : i32
    %c0_i32_2 = arith.constant 0 : i32
    return %c0_i32, %c0_i32_0, %c0_i32_1 : i32, i32, i32
  }
  func.func @transform_2(%arg0: i32) -> (i32, i32) {
    %c0_i32 = arith.constant 0 : i32
    %c0_i32_0 = arith.constant 0 : i32
    return %arg0, %c0_i32 : i32, i32
  }
  func.func @transform_3(%arg0: i32) -> (i32, i32, i32) {
    %c0_i32 = arith.constant 0 : i32
    %c0_i32_0 = arith.constant 0 : i32
    %c0_i32_1 = arith.constant 0 : i32
    return %c0_i32, %arg0, %c0_i32_0 : i32, i32, i32
  }
}

</mosaic_0001>

<llo_original>
// kernel: diff_forward.1
$region0: #{diff_forward.1}
  #allocation0 [shape = 'u32[]', space=smem, size = 0x4, offset = 0x4, fixed_abs, tag = 'smem constant byte address 0x4 - core index']
  #allocation1 [shape = 'u32[72,128]{1,0:T(1,128)}', space=vmem, size = 0x9000, scoped, tag = 'internal scratch']
  %s0 = inlined_call_operand.hbm [shape: f32[3,64,64], index: 0, kind: input, shape index: {}]
  %s1 = inlined_call_operand.hbm [shape: f32[3,16,16], index: 1, kind: input, shape index: {}]
  %s2 = inlined_call_operand.hbm [shape: f32[128,16], index: 2, kind: input, shape index: {}]
  %s3 = inlined_call_operand.vmem [shape: f32[5,128,16], index: 3, kind: output, shape index: {}]
  %s4 = sld [smem:[#allocation0]]
  $region91: #{diff_forward.1} parent=0
    _
  %s6 = ssub.s32 1, %s4
  %s7 = scalar_select 0, %s6, %s4
  $region1: #{diff_forward.1} parent=0
    #allocation2 [shape = 'u8[98304]{0}', space=vmem, size = 0x18000, scoped, tag = 'input window, operand 0, single buffered']
    #allocation3 [shape = 's32[2]{0}', space=sflag, size = 0x8, scoped, tag = 'scoped memory for diff_forward.1']
    #allocation4 [shape = 'u8[24576]{0}', space=vmem, size = 0x6000, scoped, tag = 'input window, operand 1, single buffered']
    #allocation5 [shape = 's32[1]{0}', space=sflag, size = 0x4, scoped, tag = 'scoped memory for diff_forward.1']
    #allocation6 [shape = 'u8[65536]{0}', space=vmem, size = 0x10000, scoped, tag = 'input window, operand 2']
    #allocation7 [shape = 'u8[327680]{0}', space=vmem, size = 0x50000, scoped, tag = 'output window, operand 0']
    %8 = vsyncpa [#allocation3], 0
    %9 = vsyncpa [#allocation5], 0
    loop: start=0, step=1, limit=4
    $region2: #{diff_forward.1} parent=1 // loop_pre_header
      _
    $region3: #{diff_forward.1} parent=1 // loop_header
      %s11 = sphi 0, %s15
      %p12 = scmp.ge.s32.totalorder %s11, 4
      %s19 = sphi 0, %s19
      %s21 = sphi 0, %s19
      %s22 = sphi 0, %s21
      %s36 = sphi 0, %s22
      %s40 = sphi 0, %s40
      %s42 = sphi 0, %s40
      %s43 = sphi 0, %s42
      %s57 = sphi 0, %s43
      %s63 = sphi 0, %s65
      %s66 = sphi 0, %s63
      %s67 = sphi 0, %s66
      %s83 = sphi 0, %s67
      %s89 = sphi 0, %s91
      %s92 = sphi 0, %s89
      %s93 = sphi 0, %s92
      %s109 = sphi 0, %s93
    $region4: #{diff_forward.1} parent=1 // loop_header_branch
      %14 = sbr.rel (%p12) target = $region8
    $region5: #{diff_forward.1} parent=1 // loop_body
      %s16 = ssub.s32 %s11, 1
      %s17 = ssub.s32 %s11, 2
      %s18 = sadd.s32 %s11, 1
      %s20 = sadd.s32 %s19, 1
      %p23 = scmp.eq.s32.totalorder %s11, 1
      %p24 = scmp.ne.s32.totalorder %s19, %s21
      %p25 = scmp.eq.s32.totalorder %s11, 0
      %p26 = por %p24, %p25
      %p27 = scmp.ne.s32.totalorder %s19, %s21
      %p28 = scmp.eq.s32.totalorder %s16, 1
      %p29 = por %p27, %p28
      %p30 = scmp.ne.s32.totalorder %s21, %s22
      %p31 = scmp.eq.s32.totalorder %s16, 0
      %p32 = por %p30, %p31
      %p33 = scmp.ne.s32.totalorder %s21, %s22
      %p34 = scmp.eq.s32.totalorder %s17, 1
      %p35 = por %p33, %p34
      %p37 = scmp.ne.s32.totalorder %s22, %s36
      %p38 = scmp.eq.s32.totalorder %s17, 0
      %p39 = por %p37, %p38
      %s41 = sadd.s32 %s40, 1
      %p44 = scmp.eq.s32.totalorder %s11, 1
      %p45 = scmp.ne.s32.totalorder %s40, %s42
      %p46 = scmp.eq.s32.totalorder %s11, 0
      %p47 = por %p45, %p46
      %p48 = scmp.ne.s32.totalorder %s40, %s42
      %p49 = scmp.eq.s32.totalorder %s16, 1
      %p50 = por %p48, %p49
      %p51 = scmp.ne.s32.totalorder %s42, %s43
      %p52 = scmp.eq.s32.totalorder %s16, 0
      %p53 = por %p51, %p52
      %p54 = scmp.ne.s32.totalorder %s42, %s43
      %p55 = scmp.eq.s32.totalorder %s17, 1
      %p56 = por %p54, %p55
      %p58 = scmp.ne.s32.totalorder %s43, %s57
      %p59 = scmp.eq.s32.totalorder %s17, 0
      %p60 = por %p58, %p59
      %s61 = ssub.s32 %s11, %s18
      %p62 = scmp.eq.s32.totalorder %s61, 0
      %s64 = sadd.s32 %s63, 1
      %s65 = scalar_select %p62, %s63, %s64
      %p68 = pneg %p62
      %p69 = scmp.eq.s32.totalorder %s11, 1
      %p70 = por %p68, %p69
      %p71 = scmp.ne.s32.totalorder %s63, %s66
      %p72 = scmp.eq.s32.totalorder %s11, 0
      %p73 = por %p71, %p72
      %p74 = scmp.ne.s32.totalorder %s63, %s66
      %p75 = scmp.eq.s32.totalorder %s16, 1
      %p76 = por %p74, %p75
      %p77 = scmp.ne.s32.totalorder %s66, %s67
      %p78 = scmp.eq.s32.totalorder %s16, 0
      %p79 = por %p77, %p78
      %p80 = scmp.ne.s32.totalorder %s66, %s67
      %p81 = scmp.eq.s32.totalorder %s17, 1
      %p82 = por %p80, %p81
      %p84 = scmp.ne.s32.totalorder %s67, %s83
      %p85 = scmp.eq.s32.totalorder %s17, 0
      %p86 = por %p84, %p85
      %s87 = ssub.s32 %s11, %s18
      %p88 = scmp.eq.s32.totalorder %s87, 0
      %s90 = sadd.s32 %s89, 1
      %s91 = scalar_select %p88, %s89, %s90
      %p94 = pneg %p88
      %p95 = scmp.eq.s32.totalorder %s11, 1
      %p96 = por %p94, %p95
      %p97 = scmp.ne.s32.totalorder %s89, %s92
      %p98 = scmp.eq.s32.totalorder %s11, 0
      %p99 = por %p97, %p98
      %p100 = scmp.ne.s32.totalorder %s89, %s92
      %p101 = scmp.eq.s32.totalorder %s16, 1
      %p102 = por %p100, %p101
      %p103 = scmp.ne.s32.totalorder %s92, %s93
      %p104 = scmp.eq.s32.totalorder %s16, 0
      %p105 = por %p103, %p104
      %p106 = scmp.ne.s32.totalorder %s92, %s93
      %p107 = scmp.eq.s32.totalorder %s17, 1
      %p108 = por %p106, %p107
      %p110 = scmp.ne.s32.totalorder %s93, %s109
      %p111 = scmp.eq.s32.totalorder %s17, 0
      %p112 = por %p110, %p111
      %p113 = scmp.le.s32.totalorder 1, %s11
      %p114 = scmp.lt.s32.totalorder %s11, 3
      %p115 = pnand %p113, %p114
      %p116 = pneg %p115
      // Predicated region
      $region9: #{diff_forward.1} parent=5 // pred_check
        _
      $region10: #{diff_forward.1} parent=5 // pred_check_branch
        %118 = sbr.rel (%p115) target = $region12
      $region11: #{diff_forward.1} parent=5 // pred_region
        %s119 = ssub.s32 %s11, 1
        // Predicated region
        $region13: #{diff_forward.1} parent=11 // pred_check
          %p120 = pneg %p32
        $region14: #{diff_forward.1} parent=11 // pred_check_branch
          %122 = sbr.rel (%p120) target = $region16
        $region15: #{diff_forward.1} parent=11 // pred_region
          %124 = vsyncadd [#allocation3], 0
          %s125 = sshll.u32 %s0, 4
          %s126 = int_to_ptr.hbm [resolvable:$true] %s125
          %s127 = sshll.u32 [#allocation2], 4
          %s128 = int_to_ptr.vmem [resolvable:$true] %s127
          %133 = dma.hbm_to_vmem [thread:$0]  %s126, 3072, %s128, [#allocation3], 128, 128, 8
        $region16: #{diff_forward.1} parent=11 // pred_fallthru
          _
        // Predicated region
        $region17: #{diff_forward.1} parent=11 // pred_check
          %p134 = pneg %p53
        $region18: #{diff_forward.1} parent=11 // pred_check_branch
          %136 = sbr.rel (%p134) target = $region20
        $region19: #{diff_forward.1} parent=11 // pred_region
          %138 = vsyncadd [#allocation5], 0
          %s139 = sshll.u32 %s1, 4
          %s140 = int_to_ptr.hbm [resolvable:$true] %s139
          %s141 = sshll.u32 [#allocation4], 4
          %s142 = int_to_ptr.vmem [resolvable:$true] %s141
          %147 = dma.hbm_to_vmem [thread:$0]  %s140, 768, %s142, [#allocation5], 128, 128, 8
        $region20: #{diff_forward.1} parent=11 // pred_fallthru
          _
      $region12: #{diff_forward.1} parent=5 // pred_fallthru
        _
      %p148 = scmp.lt.s32.totalorder %s11, 2
      // Predicated region
      $region21: #{diff_forward.1} parent=5 // pred_check
        %p149 = pneg %p148
      $region22: #{diff_forward.1} parent=5 // pred_check_branch
        %151 = sbr.rel (%p149) target = $region24
      $region23: #{diff_forward.1} parent=5 // pred_region
        // Predicated region
        $region25: #{diff_forward.1} parent=23 // pred_check
          %p152 = pneg %p73
        $region26: #{diff_forward.1} parent=23 // pred_check_branch
          %154 = sbr.rel (%p152) target = $region28
        $region27: #{diff_forward.1} parent=23 // pred_region
          %s155 = sand.u32 %s11, 1
          %s156 = scalar_lea.sflag [#allocation3], %s155
          %s157 = sand.u32 %s63, 1
          %s158 = smul.addr %s157, 64
          %s159 = scalar_lea.vmem [#allocation6], %s158
          %s160 = smul.u32 8, %s11
          %162 = vsyncadd %s156, 0
          %s163 = smul.addr %s160, 8
          %s164 = scalar_lea.hbm %s2, %s163
          %s165 = sshll.u32 %s164, 4
          %s166 = int_to_ptr.hbm [resolvable:$true] %s165
          %s167 = sshll.u32 %s159, 4
          %s168 = int_to_ptr.vmem [resolvable:$true] %s167
          %173 = dma.hbm_to_vmem [thread:$0]  %s166, 1024, %s168, %s156, 128, 128, 8
        $region28: #{diff_forward.1} parent=23 // pred_fallthru
          _
      $region24: #{diff_forward.1} parent=5 // pred_fallthru
        _
      %p174 = scmp.le.s32.totalorder 1, %s11
      %p175 = scmp.lt.s32.totalorder %s11, 3
      %p176 = pnand %p174, %p175
      %p177 = pneg %p176
      // Predicated region
      $region29: #{diff_forward.1} parent=5 // pred_check
        _
      $region30: #{diff_forward.1} parent=5 // pred_check_branch
        %179 = sbr.rel (%p176) target = $region32
      $region31: #{diff_forward.1} parent=5 // pred_region
        %s180 = ssub.s32 %s11, 1
        // Predicated region
        $region33: #{diff_forward.1} parent=31 // pred_check
          %p181 = pneg %p32
        $region34: #{diff_forward.1} parent=31 // pred_check_branch
          %183 = sbr.rel (%p181) target = $region36
        $region35: #{diff_forward.1} parent=31 // pred_region
          %185 = dma.done [#allocation3], 3072
        $region36: #{diff_forward.1} parent=31 // pred_fallthru
          _
        // Predicated region
        $region37: #{diff_forward.1} parent=31 // pred_check
          %p186 = pneg %p53
        $region38: #{diff_forward.1} parent=31 // pred_check_branch
          %188 = sbr.rel (%p186) target = $region40
        $region39: #{diff_forward.1} parent=31 // pred_region
          %190 = dma.done [#allocation5], 768
        $region40: #{diff_forward.1} parent=31 // pred_fallthru
          _
        %s191 = sand.u32 %s16, 1
        %s192 = scalar_lea.sflag [#allocation3], %s191
        %s193 = sand.u32 %s66, 1
        %s194 = smul.addr %s193, 64
        %s195 = scalar_lea.vmem [#allocation6], %s194
        // Predicated region
        $region41: #{diff_forward.1} parent=31 // pred_check
          %p196 = pneg %p79
        $region42: #{diff_forward.1} parent=31 // pred_check_branch
          %198 = sbr.rel (%p196) target = $region44
        $region43: #{diff_forward.1} parent=31 // pred_region
          %200 = dma.done %s192, 1024
        $region44: #{diff_forward.1} parent=31 // pred_fallthru
          _
        %p201 = pneg %p32
        %p202 = pneg %p29
        %p203 = pneg %p53
        %p204 = pneg %p50
        %s205 = sand.u32 %s16, 1
        %s206 = scalar_lea.sflag [#allocation3], %s205
        %s207 = sand.u32 %s66, 1
        %s208 = smul.addr %s207, 64
        %s209 = scalar_lea.vmem [#allocation6], %s208
        %p210 = pneg %p79
        %p211 = pneg %p76
        %p212 = pneg %p105
        %p213 = pneg %p102
        %s214 = sand.u32 %s92, 1
        %s215 = sand.u32 %s92, 1
        %s216 = smul.addr %s215, 320
        %s217 = scalar_lea.vmem [#allocation7], %s216
        %s218 = smul.u32 8, %s16
        %s219 = smul.u32 8, %s16
        %v220 = vld [vmem:[%s195] sm:$0xff]
        %v221 = vld [vmem:[%s195 + $0x8] sm:$0xff]
        %v222 = vld [vmem:[%s195 + $0x10] sm:$0xff]
        %v223 = vld [vmem:[%s195 + $0x18] sm:$0xff]
        %v224 = vld [vmem:[%s195 + $0x20] sm:$0xff]
        %v225 = vld [vmem:[%s195 + $0x28] sm:$0xff]
        %v226 = vld [vmem:[%s195 + $0x30] sm:$0xff]
        %v227 = vld [vmem:[%s195 + $0x38] sm:$0xff]
        %v228 = vld [vmem:[#allocation4] sm:$0xff]
        %v229 = vld [vmem:[#allocation4 + $0x8] sm:$0xff]
        %vm230 = vcmask 130048
        %v232 = vsel %vm230, %v220, 0
        %v235 = vsel %vm230, %v221, 0
        %v238 = vsel %vm230, %v222, 0
        %v241 = vsel %vm230, %v223, 0
        %v244 = vsel %vm230, %v224, 0
        %v247 = vsel %vm230, %v225, 0
        %v250 = vsel %vm230, %v226, 0
        %v253 = vsel %vm230, %v227, 0
        %255 = vmatpush.msra.mxu0 0.0
        %256 = vmatpush.msra.mxu0 0.0
        %257 = vmatpush.msra.mxu0 0.0
        %258 = vmatpush.msra.mxu0 0.0
        %259 = vmatpush.msra.mxu0 0.0
        %260 = vmatpush.msra.mxu0 0.0
        %261 = vmatpush.msra.mxu0 0.0
        %262 = vmatpush.msra.mxu0 0.0
        %263 = vmatpush.msra.mxu0 0.0
        %264 = vmatpush.msra.mxu0 0.0
        %265 = vmatpush.msra.mxu0 0.0
        %266 = vmatpush.msra.mxu0 0.0
        %267 = vmatpush.msra.mxu0 0.0
        %268 = vmatpush.msra.mxu0 0.0
        %v269 = vand.u32 %v229, 4294901760
        %270 = vmatpush.msra.mxu0 %v269
        %v271 = vand.u32 %v228, 4294901760
        %272 = vmatpush.msra.mxu0 %v271
        %v273 = vand.u32 %v232, 4294901760
        %v274 = vsub.f32 %v232, %v273
        %v275 = vand.u32 %v274, 4294901760
        %v276 = vsub.f32 %v274, %v275
        %v277 = vand.u32 %v276, 4294901760
        %278 = vmatmul.f32.gmra.mxu0 %v277
        %v279 = vpop.f32.mrf.mxu0
        %v280 = vadd.f32 0.0, %v279
        %v281 = vand.u32 %v235, 4294901760
        %v282 = vsub.f32 %v235, %v281
        %v283 = vand.u32 %v282, 4294901760
        %v284 = vsub.f32 %v282, %v283
        %v285 = vand.u32 %v284, 4294901760
        %286 = vmatmul.f32.gmra.mxu0 %v285
        %v287 = vpop.f32.mrf.mxu0
        %v288 = vadd.f32 0.0, %v287
        %v289 = vand.u32 %v238, 4294901760
        %v290 = vsub.f32 %v238, %v289
        %v291 = vand.u32 %v290, 4294901760
        %v292 = vsub.f32 %v290, %v291
        %v293 = vand.u32 %v292, 4294901760
        %294 = vmatmul.f32.gmra.mxu0 %v293
        %v295 = vpop.f32.mrf.mxu0
        %v296 = vadd.f32 0.0, %v295
        %v297 = vand.u32 %v241, 4294901760
        %v298 = vsub.f32 %v241, %v297
        %v299 = vand.u32 %v298, 4294901760
        %v300 = vsub.f32 %v298, %v299
        %v301 = vand.u32 %v300, 4294901760
        %302 = vmatmul.f32.gmra.mxu0 %v301
        %v303 = vpop.f32.mrf.mxu0
        %v304 = vadd.f32 0.0, %v303
        %v305 = vand.u32 %v244, 4294901760
        %v306 = vsub.f32 %v244, %v305
        %v307 = vand.u32 %v306, 4294901760
        %v308 = vsub.f32 %v306, %v307
        %v309 = vand.u32 %v308, 4294901760
        %310 = vmatmul.f32.gmra.mxu0 %v309
        %v311 = vpop.f32.mrf.mxu0
        %v312 = vadd.f32 0.0, %v311
        %v313 = vand.u32 %v247, 4294901760
        %v314 = vsub.f32 %v247, %v313
        %v315 = vand.u32 %v314, 4294901760
        %v316 = vsub.f32 %v314, %v315
        %v317 = vand.u32 %v316, 4294901760
        %318 = vmatmul.f32.gmra.mxu0 %v317
        %v319 = vpop.f32.mrf.mxu0
        %v320 = vadd.f32 0.0, %v319
        %v321 = vand.u32 %v250, 4294901760
        %v322 = vsub.f32 %v250, %v321
        %v323 = vand.u32 %v322, 4294901760
        %v324 = vsub.f32 %v322, %v323
        %v325 = vand.u32 %v324, 4294901760
        %326 = vmatmul.f32.gmra.mxu0 %v325
        %v327 = vpop.f32.mrf.mxu0
        %v328 = vadd.f32 0.0, %v327
        %v329 = vand.u32 %v253, 4294901760
        %v330 = vsub.f32 %v253, %v329
        %v331 = vand.u32 %v330, 4294901760
        %v332 = vsub.f32 %v330, %v331
        %v333 = vand.u32 %v332, 4294901760
        %334 = vmatmul.f32.gmra.mxu0 %v333
        %v335 = vpop.f32.mrf.mxu0
        %v336 = vadd.f32 0.0, %v335
        %337 = vdwg.mxu0
        %338 = vmatpush.msra.mxu0 0.0
        %339 = vmatpush.msra.mxu0 0.0
        %340 = vmatpush.msra.mxu0 0.0
        %341 = vmatpush.msra.mxu0 0.0
        %342 = vmatpush.msra.mxu0 0.0
        %343 = vmatpush.msra.mxu0 0.0
        %344 = vmatpush.msra.mxu0 0.0
        %345 = vmatpush.msra.mxu0 0.0
        %346 = vmatpush.msra.mxu0 0.0
        %347 = vmatpush.msra.mxu0 0.0
        %348 = vmatpush.msra.mxu0 0.0
        %349 = vmatpush.msra.mxu0 0.0
        %350 = vmatpush.msra.mxu0 0.0
        %351 = vmatpush.msra.mxu0 0.0
        %v352 = vand.u32 %v229, 4294901760
        %v353 = vsub.f32 %v229, %v352
        %v354 = vand.u32 %v353, 4294901760
        %v355 = vsub.f32 %v353, %v354
        %v356 = vand.u32 %v355, 4294901760
        %357 = vmatpush.msra.mxu0 %v356
        %v358 = vand.u32 %v228, 4294901760
        %v359 = vsub.f32 %v228, %v358
        %v360 = vand.u32 %v359, 4294901760
        %v361 = vsub.f32 %v359, %v360
        %v362 = vand.u32 %v361, 4294901760
        %363 = vmatpush.msra.mxu0 %v362
        %v364 = vand.u32 %v232, 4294901760
        %365 = vmatmul.f32.gmra.mxu0 %v364
        %v366 = vpop.f32.mrf.mxu0
        %v367 = vadd.f32 %v280, %v366
        %v368 = vand.u32 %v235, 4294901760
        %369 = vmatmul.f32.gmra.mxu0 %v368
        %v370 = vpop.f32.mrf.mxu0
        %v371 = vadd.f32 %v288, %v370
        %v372 = vand.u32 %v238, 4294901760
        %373 = vmatmul.f32.gmra.mxu0 %v372
        %v374 = vpop.f32.mrf.mxu0
        %v375 = vadd.f32 %v296, %v374
        %v376 = vand.u32 %v241, 4294901760
        %377 = vmatmul.f32.gmra.mxu0 %v376
        %v378 = vpop.f32.mrf.mxu0
        %v379 = vadd.f32 %v304, %v378
        %v380 = vand.u32 %v244, 4294901760
        %381 = vmatmul.f32.gmra.mxu0 %v380
        %v382 = vpop.f32.mrf.mxu0
        %v383 = vadd.f32 %v312, %v382
        %v384 = vand.u32 %v247, 4294901760
        %385 = vmatmul.f32.gmra.mxu0 %v384
        %v386 = vpop.f32.mrf.mxu0
        %v387 = vadd.f32 %v320, %v386
        %v388 = vand.u32 %v250, 4294901760
        %389 = vmatmul.f32.gmra.mxu0 %v388
        %v390 = vpop.f32.mrf.mxu0
        %v391 = vadd.f32 %v328, %v390
        %v392 = vand.u32 %v253, 4294901760
        %393 = vmatmul.f32.gmra.mxu0 %v392
        %v394 = vpop.f32.mrf.mxu0
        %v395 = vadd.f32 %v336, %v394
        %396 = vdwg.mxu0
        %397 = vmatpush.msra.mxu0 0.0
        %398 = vmatpush.msra.mxu0 0.0
        %399 = vmatpush.msra.mxu0 0.0
        %400 = vmatpush.msra.mxu0 0.0
        %401 = vmatpush.msra.mxu0 0.0
        %402 = vmatpush.msra.mxu0 0.0
        %403 = vmatpush.msra.mxu0 0.0
        %404 = vmatpush.msra.mxu0 0.0
        %405 = vmatpush.msra.mxu0 0.0
        %406 = vmatpush.msra.mxu0 0.0
        %407 = vmatpush.msra.mxu0 0.0
        %408 = vmatpush.msra.mxu0 0.0
        %409 = vmatpush.msra.mxu0 0.0
        %410 = vmatpush.msra.mxu0 0.0
        %v411 = vand.u32 %v229, 4294901760
        %v412 = vsub.f32 %v229, %v411
        %413 = vmatpush.msra.mxu0 %v412
        %v414 = vand.u32 %v228, 4294901760
        %v415 = vsub.f32 %v228, %v414
        %416 = vmatpush.msra.mxu0 %v415
        %v417 = vand.u32 %v232, 4294901760
        %v418 = vsub.f32 %v232, %v417
        %419 = vmatmul.f32.gmra.mxu0 %v418
        %v420 = vpop.f32.mrf.mxu0
        %v421 = vadd.f32 %v367, %v420
        %v422 = vand.u32 %v235, 4294901760
        %v423 = vsub.f32 %v235, %v422
        %424 = vmatmul.f32.gmra.mxu0 %v423
        %v425 = vpop.f32.mrf.mxu0
        %v426 = vadd.f32 %v371, %v425
        %v427 = vand.u32 %v238, 4294901760
        %v428 = vsub.f32 %v238, %v427
        %429 = vmatmul.f32.gmra.mxu0 %v428
        %v430 = vpop.f32.mrf.mxu0
        %v431 = vadd.f32 %v375, %v430
        %v432 = vand.u32 %v241, 4294901760
        %v433 = vsub.f32 %v241, %v432
        %434 = vmatmul.f32.gmra.mxu0 %v433
        %v435 = vpop.f32.mrf.mxu0
        %v436 = vadd.f32 %v379, %v435
        %v437 = vand.u32 %v244, 4294901760
        %v438 = vsub.f32 %v244, %v437
        %439 = vmatmul.f32.gmra.mxu0 %v438
        %v440 = vpop.f32.mrf.mxu0
        %v441 = vadd.f32 %v383, %v440
        %v442 = vand.u32 %v247, 4294901760
        %v443 = vsub.f32 %v247, %v442
        %444 = vmatmul.f32.gmra.mxu0 %v443
        %v445 = vpop.f32.mrf.mxu0
        %v446 = vadd.f32 %v387, %v445
        %v447 = vand.u32 %v250, 4294901760
        %v448 = vsub.f32 %v250, %v447
        %449 = vmatmul.f32.gmra.mxu0 %v448
        %v450 = vpop.f32.mrf.mxu0
        %v451 = vadd.f32 %v391, %v450
        %v452 = vand.u32 %v253, 4294901760
        %v453 = vsub.f32 %v253, %v452
        %454 = vmatmul.f32.gmra.mxu0 %v453
        %v455 = vpop.f32.mrf.mxu0
        %v456 = vadd.f32 %v395, %v455
        %457 = vdwg.mxu0
        %458 = vmatpush.msra.mxu0 0.0
        %459 = vmatpush.msra.mxu0 0.0
        %460 = vmatpush.msra.mxu0 0.0
        %461 = vmatpush.msra.mxu0 0.0
        %462 = vmatpush.msra.mxu0 0.0
        %463 = vmatpush.msra.mxu0 0.0
        %464 = vmatpush.msra.mxu0 0.0
        %465 = vmatpush.msra.mxu0 0.0
        %466 = vmatpush.msra.mxu0 0.0
        %467 = vmatpush.msra.mxu0 0.0
        %468 = vmatpush.msra.mxu0 0.0
        %469 = vmatpush.msra.mxu0 0.0
        %470 = vmatpush.msra.mxu0 0.0
        %471 = vmatpush.msra.mxu0 0.0
        %v472 = vand.u32 %v229, 4294901760
        %473 = vmatpush.msra.mxu0 %v472
        %v474 = vand.u32 %v228, 4294901760
        %475 = vmatpush.msra.mxu0 %v474
        %v476 = vand.u32 %v232, 4294901760
        %v477 = vsub.f32 %v232, %v476
        %v478 = vand.u32 %v477, 4294901760
        %479 = vmatmul.f32.gmra.mxu0 %v478
        %v480 = vpop.f32.mrf.mxu0
        %v481 = vadd.f32 %v421, %v480
        %v482 = vand.u32 %v235, 4294901760
        %v483 = vsub.f32 %v235, %v482
        %v484 = vand.u32 %v483, 4294901760
        %485 = vmatmul.f32.gmra.mxu0 %v484
        %v486 = vpop.f32.mrf.mxu0
        %v487 = vadd.f32 %v426, %v486
        %v488 = vand.u32 %v238, 4294901760
        %v489 = vsub.f32 %v238, %v488
        %v490 = vand.u32 %v489, 4294901760
        %491 = vmatmul.f32.gmra.mxu0 %v490
        %v492 = vpop.f32.mrf.mxu0
        %v493 = vadd.f32 %v431, %v492
        %v494 = vand.u32 %v241, 4294901760
        %v495 = vsub.f32 %v241, %v494
        %v496 = vand.u32 %v495, 4294901760
        %497 = vmatmul.f32.gmra.mxu0 %v496
        %v498 = vpop.f32.mrf.mxu0
        %v499 = vadd.f32 %v436, %v498
        %v500 = vand.u32 %v244, 4294901760
        %v501 = vsub.f32 %v244, %v500
        %v502 = vand.u32 %v501, 4294901760
        %503 = vmatmul.f32.gmra.mxu0 %v502
        %v504 = vpop.f32.mrf.mxu0
        %v505 = vadd.f32 %v441, %v504
        %v506 = vand.u32 %v247, 4294901760
        %v507 = vsub.f32 %v247, %v506
        %v508 = vand.u32 %v507, 4294901760
        %509 = vmatmul.f32.gmra.mxu0 %v508
        %v510 = vpop.f32.mrf.mxu0
        %v511 = vadd.f32 %v446, %v510
        %v512 = vand.u32 %v250, 4294901760
        %v513 = vsub.f32 %v250, %v512
        %v514 = vand.u32 %v513, 4294901760
        %515 = vmatmul.f32.gmra.mxu0 %v514
        %v516 = vpop.f32.mrf.mxu0
        %v517 = vadd.f32 %v451, %v516
        %v518 = vand.u32 %v253, 4294901760
        %v519 = vsub.f32 %v253, %v518
        %v520 = vand.u32 %v519, 4294901760
        %521 = vmatmul.f32.gmra.mxu0 %v520
        %v522 = vpop.f32.mrf.mxu0
        %v523 = vadd.f32 %v456, %v522
        %524 = vdwg.mxu0
        %525 = vmatpush.msra.mxu0 0.0
        %526 = vmatpush.msra.mxu0 0.0
        %527 = vmatpush.msra.mxu0 0.0
        %528 = vmatpush.msra.mxu0 0.0
        %529 = vmatpush.msra.mxu0 0.0
        %530 = vmatpush.msra.mxu0 0.0
        %531 = vmatpush.msra.mxu0 0.0
        %532 = vmatpush.msra.mxu0 0.0
        %533 = vmatpush.msra.mxu0 0.0
        %534 = vmatpush.msra.mxu0 0.0
        %535 = vmatpush.msra.mxu0 0.0
        %536 = vmatpush.msra.mxu0 0.0
        %537 = vmatpush.msra.mxu0 0.0
        %538 = vmatpush.msra.mxu0 0.0
        %v539 = vand.u32 %v229, 4294901760
        %v540 = vsub.f32 %v229, %v539
        %v541 = vand.u32 %v540, 4294901760
        %542 = vmatpush.msra.mxu0 %v541
        %v543 = vand.u32 %v228, 4294901760
        %v544 = vsub.f32 %v228, %v543
        %v545 = vand.u32 %v544, 4294901760
        %546 = vmatpush.msra.mxu0 %v545
        %v547 = vand.u32 %v232, 4294901760
        %548 = vmatmul.f32.gmra.mxu0 %v547
        %v549 = vpop.f32.mrf.mxu0
        %v550 = vadd.f32 %v481, %v549
        %v551 = vand.u32 %v235, 4294901760
        %552 = vmatmul.f32.gmra.mxu0 %v551
        %v553 = vpop.f32.mrf.mxu0
        %v554 = vadd.f32 %v487, %v553
        %v555 = vand.u32 %v238, 4294901760
        %556 = vmatmul.f32.gmra.mxu0 %v555
        %v557 = vpop.f32.mrf.mxu0
        %v558 = vadd.f32 %v493, %v557
        %v559 = vand.u32 %v241, 4294901760
        %560 = vmatmul.f32.gmra.mxu0 %v559
        %v561 = vpop.f32.mrf.mxu0
        %v562 = vadd.f32 %v499, %v561
        %v563 = vand.u32 %v244, 4294901760
        %564 = vmatmul.f32.gmra.mxu0 %v563
        %v565 = vpop.f32.mrf.mxu0
        %v566 = vadd.f32 %v505, %v565
        %v567 = vand.u32 %v247, 4294901760
        %568 = vmatmul.f32.gmra.mxu0 %v567
        %v569 = vpop.f32.mrf.mxu0
        %v570 = vadd.f32 %v511, %v569
        %v571 = vand.u32 %v250, 4294901760
        %572 = vmatmul.f32.gmra.mxu0 %v571
        %v573 = vpop.f32.mrf.mxu0
        %v574 = vadd.f32 %v517, %v573
        %v575 = vand.u32 %v253, 4294901760
        %576 = vmatmul.f32.gmra.mxu0 %v575
        %v577 = vpop.f32.mrf.mxu0
        %v578 = vadd.f32 %v523, %v577
        %579 = vdwg.mxu0
        %580 = vmatpush.msra.mxu0 0.0
        %581 = vmatpush.msra.mxu0 0.0
        %582 = vmatpush.msra.mxu0 0.0
        %583 = vmatpush.msra.mxu0 0.0
        %584 = vmatpush.msra.mxu0 0.0
        %585 = vmatpush.msra.mxu0 0.0
        %586 = vmatpush.msra.mxu0 0.0
        %587 = vmatpush.msra.mxu0 0.0
        %588 = vmatpush.msra.mxu0 0.0
        %589 = vmatpush.msra.mxu0 0.0
        %590 = vmatpush.msra.mxu0 0.0
        %591 = vmatpush.msra.mxu0 0.0
        %592 = vmatpush.msra.mxu0 0.0
        %593 = vmatpush.msra.mxu0 0.0
        %v594 = vand.u32 %v229, 4294901760
        %595 = vmatpush.msra.mxu0 %v594
        %v596 = vand.u32 %v228, 4294901760
        %597 = vmatpush.msra.mxu0 %v596
        %v598 = vand.u32 %v232, 4294901760
        %599 = vmatmul.f32.gmra.mxu0 %v598
        %v600 = vpop.f32.mrf.mxu0
        %v601 = vadd.f32 %v550, %v600
        %v602 = vand.u32 %v235, 4294901760
        %603 = vmatmul.f32.gmra.mxu0 %v602
        %v604 = vpop.f32.mrf.mxu0
        %v605 = vadd.f32 %v554, %v604
        %v606 = vand.u32 %v238, 4294901760
        %607 = vmatmul.f32.gmra.mxu0 %v606
        %v608 = vpop.f32.mrf.mxu0
        %v609 = vadd.f32 %v558, %v608
        %v610 = vand.u32 %v241, 4294901760
        %611 = vmatmul.f32.gmra.mxu0 %v610
        %v612 = vpop.f32.mrf.mxu0
        %v613 = vadd.f32 %v562, %v612
        %v614 = vand.u32 %v244, 4294901760
        %615 = vmatmul.f32.gmra.mxu0 %v614
        %v616 = vpop.f32.mrf.mxu0
        %v617 = vadd.f32 %v566, %v616
        %v618 = vand.u32 %v247, 4294901760
        %619 = vmatmul.f32.gmra.mxu0 %v618
        %v620 = vpop.f32.mrf.mxu0
        %v621 = vadd.f32 %v570, %v620
        %v622 = vand.u32 %v250, 4294901760
        %623 = vmatmul.f32.gmra.mxu0 %v622
        %v624 = vpop.f32.mrf.mxu0
        %v625 = vadd.f32 %v574, %v624
        %v626 = vand.u32 %v253, 4294901760
        %627 = vmatmul.f32.gmra.mxu0 %v626
        %v628 = vpop.f32.mrf.mxu0
        %v629 = vadd.f32 %v578, %v628
        %630 = vdwg.mxu0
        %s631 = scalar_lea.vmem [#allocation4], 16
        %v632 = vld [vmem:[%s631] sm:$0xff]
        %v633 = vld [vmem:[%s631 + $0x8] sm:$0xff]
        %634 = vmatpush.msra.mxu0 0.0
        %635 = vmatpush.msra.mxu0 0.0
        %636 = vmatpush.msra.mxu0 0.0
        %637 = vmatpush.msra.mxu0 0.0
        %638 = vmatpush.msra.mxu0 0.0
        %639 = vmatpush.msra.mxu0 0.0
        %640 = vmatpush.msra.mxu0 0.0
        %641 = vmatpush.msra.mxu0 0.0
        %642 = vmatpush.msra.mxu0 0.0
        %643 = vmatpush.msra.mxu0 0.0
        %644 = vmatpush.msra.mxu0 0.0
        %645 = vmatpush.msra.mxu0 0.0
        %646 = vmatpush.msra.mxu0 0.0
        %647 = vmatpush.msra.mxu0 0.0
        %v648 = vand.u32 %v633, 4294901760
        %649 = vmatpush.msra.mxu0 %v648
        %v650 = vand.u32 %v632, 4294901760
        %651 = vmatpush.msra.mxu0 %v650
        %v652 = vand.u32 %v232, 4294901760
        %v653 = vsub.f32 %v232, %v652
        %v654 = vand.u32 %v653, 4294901760
        %v655 = vsub.f32 %v653, %v654
        %v656 = vand.u32 %v655, 4294901760
        %657 = vmatmul.f32.gmra.mxu0 %v656
        %v658 = vpop.f32.mrf.mxu0
        %v659 = vadd.f32 0.0, %v658
        %v660 = vand.u32 %v235, 4294901760
        %v661 = vsub.f32 %v235, %v660
        %v662 = vand.u32 %v661, 4294901760
        %v663 = vsub.f32 %v661, %v662
        %v664 = vand.u32 %v663, 4294901760
        %665 = vmatmul.f32.gmra.mxu0 %v664
        %v666 = vpop.f32.mrf.mxu0
        %v667 = vadd.f32 0.0, %v666
        %v668 = vand.u32 %v238, 4294901760
        %v669 = vsub.f32 %v238, %v668
        %v670 = vand.u32 %v669, 4294901760
        %v671 = vsub.f32 %v669, %v670
        %v672 = vand.u32 %v671, 4294901760
        %673 = vmatmul.f32.gmra.mxu0 %v672
        %v674 = vpop.f32.mrf.mxu0
        %v675 = vadd.f32 0.0, %v674
        %v676 = vand.u32 %v241, 4294901760
        %v677 = vsub.f32 %v241, %v676
        %v678 = vand.u32 %v677, 4294901760
        %v679 = vsub.f32 %v677, %v678
        %v680 = vand.u32 %v679, 4294901760
        %681 = vmatmul.f32.gmra.mxu0 %v680
        %v682 = vpop.f32.mrf.mxu0
        %v683 = vadd.f32 0.0, %v682
        %v684 = vand.u32 %v244, 4294901760
        %v685 = vsub.f32 %v244, %v684
        %v686 = vand.u32 %v685, 4294901760
        %v687 = vsub.f32 %v685, %v686
        %v688 = vand.u32 %v687, 4294901760
        %689 = vmatmul.f32.gmra.mxu0 %v688
        %v690 = vpop.f32.mrf.mxu0
        %v691 = vadd.f32 0.0, %v690
        %v692 = vand.u32 %v247, 4294901760
        %v693 = vsub.f32 %v247, %v692
        %v694 = vand.u32 %v693, 4294901760
        %v695 = vsub.f32 %v693, %v694
        %v696 = vand.u32 %v695, 4294901760
        %697 = vmatmul.f32.gmra.mxu0 %v696
        %v698 = vpop.f32.mrf.mxu0
        %v699 = vadd.f32 0.0, %v698
        %v700 = vand.u32 %v250, 4294901760
        %v701 = vsub.f32 %v250, %v700
        %v702 = vand.u32 %v701, 4294901760
        %v703 = vsub.f32 %v701, %v702
        %v704 = vand.u32 %v703, 4294901760
        %705 = vmatmul.f32.gmra.mxu0 %v704
        %v706 = vpop.f32.mrf.mxu0
        %v707 = vadd.f32 0.0, %v706
        %v708 = vand.u32 %v253, 4294901760
        %v709 = vsub.f32 %v253, %v708
        %v710 = vand.u32 %v709, 4294901760
        %v711 = vsub.f32 %v709, %v710
        %v712 = vand.u32 %v711, 4294901760
        %713 = vmatmul.f32.gmra.mxu0 %v712
        %v714 = vpop.f32.mrf.mxu0
        %v715 = vadd.f32 0.0, %v714
        %716 = vdwg.mxu0
        %717 = vmatpush.msra.mxu0 0.0
        %718 = vmatpush.msra.mxu0 0.0
        %719 = vmatpush.msra.mxu0 0.0
        %720 = vmatpush.msra.mxu0 0.0
        %721 = vmatpush.msra.mxu0 0.0
        %722 = vmatpush.msra.mxu0 0.0
        %723 = vmatpush.msra.mxu0 0.0
        %724 = vmatpush.msra.mxu0 0.0
        %725 = vmatpush.msra.mxu0 0.0
        %726 = vmatpush.msra.mxu0 0.0
        %727 = vmatpush.msra.mxu0 0.0
        %728 = vmatpush.msra.mxu0 0.0
        %729 = vmatpush.msra.mxu0 0.0
        %730 = vmatpush.msra.mxu0 0.0
        %v731 = vand.u32 %v633, 4294901760
        %v732 = vsub.f32 %v633, %v731
        %v733 = vand.u32 %v732, 4294901760
        %v734 = vsub.f32 %v732, %v733
        %v735 = vand.u32 %v734, 4294901760
        %736 = vmatpush.msra.mxu0 %v735
        %v737 = vand.u32 %v632, 4294901760
        %v738 = vsub.f32 %v632, %v737
        %v739 = vand.u32 %v738, 4294901760
        %v740 = vsub.f32 %v738, %v739
        %v741 = vand.u32 %v740, 4294901760
        %742 = vmatpush.msra.mxu0 %v741
        %v743 = vand.u32 %v232, 4294901760
        %744 = vmatmul.f32.gmra.mxu0 %v743
        %v745 = vpop.f32.mrf.mxu0
        %v746 = vadd.f32 %v659, %v745
        %v747 = vand.u32 %v235, 4294901760
        %748 = vmatmul.f32.gmra.mxu0 %v747
        %v749 = vpop.f32.mrf.mxu0
        %v750 = vadd.f32 %v667, %v749
        %v751 = vand.u32 %v238, 4294901760
        %752 = vmatmul.f32.gmra.mxu0 %v751
        %v753 = vpop.f32.mrf.mxu0
        %v754 = vadd.f32 %v675, %v753
        %v755 = vand.u32 %v241, 4294901760
        %756 = vmatmul.f32.gmra.mxu0 %v755
        %v757 = vpop.f32.mrf.mxu0
        %v758 = vadd.f32 %v683, %v757
        %v759 = vand.u32 %v244, 4294901760
        %760 = vmatmul.f32.gmra.mxu0 %v759
        %v761 = vpop.f32.mrf.mxu0
        %v762 = vadd.f32 %v691, %v761
        %v763 = vand.u32 %v247, 4294901760
        %764 = vmatmul.f32.gmra.mxu0 %v763
        %v765 = vpop.f32.mrf.mxu0
        %v766 = vadd.f32 %v699, %v765
        %v767 = vand.u32 %v250, 4294901760
        %768 = vmatmul.f32.gmra.mxu0 %v767
        %v769 = vpop.f32.mrf.mxu0
        %v770 = vadd.f32 %v707, %v769
        %v771 = vand.u32 %v253, 4294901760
        %772 = vmatmul.f32.gmra.mxu0 %v771
        %v773 = vpop.f32.mrf.mxu0
        %v774 = vadd.f32 %v715, %v773
        %775 = vdwg.mxu0
        %776 = vmatpush.msra.mxu0 0.0
        %777 = vmatpush.msra.mxu0 0.0
        %778 = vmatpush.msra.mxu0 0.0
        %779 = vmatpush.msra.mxu0 0.0
        %780 = vmatpush.msra.mxu0 0.0
        %781 = vmatpush.msra.mxu0 0.0
        %782 = vmatpush.msra.mxu0 0.0
        %783 = vmatpush.msra.mxu0 0.0
        %784 = vmatpush.msra.mxu0 0.0
        %785 = vmatpush.msra.mxu0 0.0
        %786 = vmatpush.msra.mxu0 0.0
        %787 = vmatpush.msra.mxu0 0.0
        %788 = vmatpush.msra.mxu0 0.0
        %789 = vmatpush.msra.mxu0 0.0
        %v790 = vand.u32 %v633, 4294901760
        %v791 = vsub.f32 %v633, %v790
        %792 = vmatpush.msra.mxu0 %v791
        %v793 = vand.u32 %v632, 4294901760
        %v794 = vsub.f32 %v632, %v793
        %795 = vmatpush.msra.mxu0 %v794
        %v796 = vand.u32 %v232, 4294901760
        %v797 = vsub.f32 %v232, %v796
        %798 = vmatmul.f32.gmra.mxu0 %v797
        %v799 = vpop.f32.mrf.mxu0
        %v800 = vadd.f32 %v746, %v799
        %v801 = vand.u32 %v235, 4294901760
        %v802 = vsub.f32 %v235, %v801
        %803 = vmatmul.f32.gmra.mxu0 %v802
        %v804 = vpop.f32.mrf.mxu0
        %v805 = vadd.f32 %v750, %v804
        %v806 = vand.u32 %v238, 4294901760
        %v807 = vsub.f32 %v238, %v806
        %808 = vmatmul.f32.gmra.mxu0 %v807
        %v809 = vpop.f32.mrf.mxu0
        %v810 = vadd.f32 %v754, %v809
        %v811 = vand.u32 %v241, 4294901760
        %v812 = vsub.f32 %v241, %v811
        %813 = vmatmul.f32.gmra.mxu0 %v812
        %v814 = vpop.f32.mrf.mxu0
        %v815 = vadd.f32 %v758, %v814
        %v816 = vand.u32 %v244, 4294901760
        %v817 = vsub.f32 %v244, %v816
        %818 = vmatmul.f32.gmra.mxu0 %v817
        %v819 = vpop.f32.mrf.mxu0
        %v820 = vadd.f32 %v762, %v819
        %v821 = vand.u32 %v247, 4294901760
        %v822 = vsub.f32 %v247, %v821
        %823 = vmatmul.f32.gmra.mxu0 %v822
        %v824 = vpop.f32.mrf.mxu0
        %v825 = vadd.f32 %v766, %v824
        %v826 = vand.u32 %v250, 4294901760
        %v827 = vsub.f32 %v250, %v826
        %828 = vmatmul.f32.gmra.mxu0 %v827
        %v829 = vpop.f32.mrf.mxu0
        %v830 = vadd.f32 %v770, %v829
        %v831 = vand.u32 %v253, 4294901760
        %v832 = vsub.f32 %v253, %v831
        %833 = vmatmul.f32.gmra.mxu0 %v832
        %v834 = vpop.f32.mrf.mxu0
        %v835 = vadd.f32 %v774, %v834
        %836 = vdwg.mxu0
        %837 = vmatpush.msra.mxu0 0.0
        %838 = vmatpush.msra.mxu0 0.0
        %839 = vmatpush.msra.mxu0 0.0
        %840 = vmatpush.msra.mxu0 0.0
        %841 = vmatpush.msra.mxu0 0.0
        %842 = vmatpush.msra.mxu0 0.0
        %843 = vmatpush.msra.mxu0 0.0
        %844 = vmatpush.msra.mxu0 0.0
        %845 = vmatpush.msra.mxu0 0.0
        %846 = vmatpush.msra.mxu0 0.0
        %847 = vmatpush.msra.mxu0 0.0
        %848 = vmatpush.msra.mxu0 0.0
        %849 = vmatpush.msra.mxu0 0.0
        %850 = vmatpush.msra.mxu0 0.0
        %v851 = vand.u32 %v633, 4294901760
        %852 = vmatpush.msra.mxu0 %v851
        %v853 = vand.u32 %v632, 4294901760
        %854 = vmatpush.msra.mxu0 %v853
        %v855 = vand.u32 %v232, 4294901760
        %v856 = vsub.f32 %v232, %v855
        %v857 = vand.u32 %v856, 4294901760
        %858 = vmatmul.f32.gmra.mxu0 %v857
        %v859 = vpop.f32.mrf.mxu0
        %v860 = vadd.f32 %v800, %v859
        %v861 = vand.u32 %v235, 4294901760
        %v862 = vsub.f32 %v235, %v861
        %v863 = vand.u32 %v862, 4294901760
        %864 = vmatmul.f32.gmra.mxu0 %v863
        %v865 = vpop.f32.mrf.mxu0
        %v866 = vadd.f32 %v805, %v865
        %v867 = vand.u32 %v238, 4294901760
        %v868 = vsub.f32 %v238, %v867
        %v869 = vand.u32 %v868, 4294901760
        %870 = vmatmul.f32.gmra.mxu0 %v869
        %v871 = vpop.f32.mrf.mxu0
        %v872 = vadd.f32 %v810, %v871
        %v873 = vand.u32 %v241, 4294901760
        %v874 = vsub.f32 %v241, %v873
        %v875 = vand.u32 %v874, 4294901760
        %876 = vmatmul.f32.gmra.mxu0 %v875
        %v877 = vpop.f32.mrf.mxu0
        %v878 = vadd.f32 %v815, %v877
        %v879 = vand.u32 %v244, 4294901760
        %v880 = vsub.f32 %v244, %v879
        %v881 = vand.u32 %v880, 4294901760
        %882 = vmatmul.f32.gmra.mxu0 %v881
        %v883 = vpop.f32.mrf.mxu0
        %v884 = vadd.f32 %v820, %v883
        %v885 = vand.u32 %v247, 4294901760
        %v886 = vsub.f32 %v247, %v885
        %v887 = vand.u32 %v886, 4294901760
        %888 = vmatmul.f32.gmra.mxu0 %v887
        %v889 = vpop.f32.mrf.mxu0
        %v890 = vadd.f32 %v825, %v889
        %v891 = vand.u32 %v250, 4294901760
        %v892 = vsub.f32 %v250, %v891
        %v893 = vand.u32 %v892, 4294901760
        %894 = vmatmul.f32.gmra.mxu0 %v893
        %v895 = vpop.f32.mrf.mxu0
        %v896 = vadd.f32 %v830, %v895
        %v897 = vand.u32 %v253, 4294901760
        %v898 = vsub.f32 %v253, %v897
        %v899 = vand.u32 %v898, 4294901760
        %900 = vmatmul.f32.gmra.mxu0 %v899
        %v901 = vpop.f32.mrf.mxu0
        %v902 = vadd.f32 %v835, %v901
        %903 = vdwg.mxu0
        %904 = vmatpush.msra.mxu0 0.0
        %905 = vmatpush.msra.mxu0 0.0
        %906 = vmatpush.msra.mxu0 0.0
        %907 = vmatpush.msra.mxu0 0.0
        %908 = vmatpush.msra.mxu0 0.0
        %909 = vmatpush.msra.mxu0 0.0
        %910 = vmatpush.msra.mxu0 0.0
        %911 = vmatpush.msra.mxu0 0.0
        %912 = vmatpush.msra.mxu0 0.0
        %913 = vmatpush.msra.mxu0 0.0
        %914 = vmatpush.msra.mxu0 0.0
        %915 = vmatpush.msra.mxu0 0.0
        %916 = vmatpush.msra.mxu0 0.0
        %917 = vmatpush.msra.mxu0 0.0
        %v918 = vand.u32 %v633, 4294901760
        %v919 = vsub.f32 %v633, %v918
        %v920 = vand.u32 %v919, 4294901760
        %921 = vmatpush.msra.mxu0 %v920
        %v922 = vand.u32 %v632, 4294901760
        %v923 = vsub.f32 %v632, %v922
        %v924 = vand.u32 %v923, 4294901760
        %925 = vmatpush.msra.mxu0 %v924
        %v926 = vand.u32 %v232, 4294901760
        %927 = vmatmul.f32.gmra.mxu0 %v926
        %v928 = vpop.f32.mrf.mxu0
        %v929 = vadd.f32 %v860, %v928
        %v930 = vand.u32 %v235, 4294901760
        %931 = vmatmul.f32.gmra.mxu0 %v930
        %v932 = vpop.f32.mrf.mxu0
        %v933 = vadd.f32 %v866, %v932
        %v934 = vand.u32 %v238, 4294901760
        %935 = vmatmul.f32.gmra.mxu0 %v934
        %v936 = vpop.f32.mrf.mxu0
        %v937 = vadd.f32 %v872, %v936
        %v938 = vand.u32 %v241, 4294901760
        %939 = vmatmul.f32.gmra.mxu0 %v938
        %v940 = vpop.f32.mrf.mxu0
        %v941 = vadd.f32 %v878, %v940
        %v942 = vand.u32 %v244, 4294901760
        %943 = vmatmul.f32.gmra.mxu0 %v942
        %v944 = vpop.f32.mrf.mxu0
        %v945 = vadd.f32 %v884, %v944
        %v946 = vand.u32 %v247, 4294901760
        %947 = vmatmul.f32.gmra.mxu0 %v946
        %v948 = vpop.f32.mrf.mxu0
        %v949 = vadd.f32 %v890, %v948
        %v950 = vand.u32 %v250, 4294901760
        %951 = vmatmul.f32.gmra.mxu0 %v950
        %v952 = vpop.f32.mrf.mxu0
        %v953 = vadd.f32 %v896, %v952
        %v954 = vand.u32 %v253, 4294901760
        %955 = vmatmul.f32.gmra.mxu0 %v954
        %v956 = vpop.f32.mrf.mxu0
        %v957 = vadd.f32 %v902, %v956
        %958 = vdwg.mxu0
        %959 = vmatpush.msra.mxu0 0.0
        %960 = vmatpush.msra.mxu0 0.0
        %961 = vmatpush.msra.mxu0 0.0
        %962 = vmatpush.msra.mxu0 0.0
        %963 = vmatpush.msra.mxu0 0.0
        %964 = vmatpush.msra.mxu0 0.0
        %965 = vmatpush.msra.mxu0 0.0
        %966 = vmatpush.msra.mxu0 0.0
        %967 = vmatpush.msra.mxu0 0.0
        %968 = vmatpush.msra.mxu0 0.0
        %969 = vmatpush.msra.mxu0 0.0
        %970 = vmatpush.msra.mxu0 0.0
        %971 = vmatpush.msra.mxu0 0.0
        %972 = vmatpush.msra.mxu0 0.0
        %v973 = vand.u32 %v633, 4294901760
        %974 = vmatpush.msra.mxu0 %v973
        %v975 = vand.u32 %v632, 4294901760
        %976 = vmatpush.msra.mxu0 %v975
        %v977 = vand.u32 %v232, 4294901760
        %978 = vmatmul.f32.gmra.mxu0 %v977
        %v979 = vpop.f32.mrf.mxu0
        %v980 = vadd.f32 %v929, %v979
        %v981 = vand.u32 %v235, 4294901760
        %982 = vmatmul.f32.gmra.mxu0 %v981
        %v983 = vpop.f32.mrf.mxu0
        %v984 = vadd.f32 %v933, %v983
        %v985 = vand.u32 %v238, 4294901760
        %986 = vmatmul.f32.gmra.mxu0 %v985
        %v987 = vpop.f32.mrf.mxu0
        %v988 = vadd.f32 %v937, %v987
        %v989 = vand.u32 %v241, 4294901760
        %990 = vmatmul.f32.gmra.mxu0 %v989
        %v991 = vpop.f32.mrf.mxu0
        %v992 = vadd.f32 %v941, %v991
        %v993 = vand.u32 %v244, 4294901760
        %994 = vmatmul.f32.gmra.mxu0 %v993
        %v995 = vpop.f32.mrf.mxu0
        %v996 = vadd.f32 %v945, %v995
        %v997 = vand.u32 %v247, 4294901760
        %998 = vmatmul.f32.gmra.mxu0 %v997
        %v999 = vpop.f32.mrf.mxu0
        %v1000 = vadd.f32 %v949, %v999
        %v1001 = vand.u32 %v250, 4294901760
        %1002 = vmatmul.f32.gmra.mxu0 %v1001
        %v1003 = vpop.f32.mrf.mxu0
        %v1004 = vadd.f32 %v953, %v1003
        %v1005 = vand.u32 %v253, 4294901760
        %1006 = vmatmul.f32.gmra.mxu0 %v1005
        %v1007 = vpop.f32.mrf.mxu0
        %v1008 = vadd.f32 %v957, %v1007
        %1009 = vdwg.mxu0
        %s1010 = scalar_lea.vmem [#allocation4], 32
        %v1011 = vld [vmem:[%s1010] sm:$0xff]
        %v1012 = vld [vmem:[%s1010 + $0x8] sm:$0xff]
        %1013 = vmatpush.msra.mxu0 0.0
        %1014 = vmatpush.msra.mxu0 0.0
        %1015 = vmatpush.msra.mxu0 0.0
        %1016 = vmatpush.msra.mxu0 0.0
        %1017 = vmatpush.msra.mxu0 0.0
        %1018 = vmatpush.msra.mxu0 0.0
        %1019 = vmatpush.msra.mxu0 0.0
        %1020 = vmatpush.msra.mxu0 0.0
        %1021 = vmatpush.msra.mxu0 0.0
        %1022 = vmatpush.msra.mxu0 0.0
        %1023 = vmatpush.msra.mxu0 0.0
        %1024 = vmatpush.msra.mxu0 0.0
        %1025 = vmatpush.msra.mxu0 0.0
        %1026 = vmatpush.msra.mxu0 0.0
        %v1027 = vand.u32 %v1012, 4294901760
        %1028 = vmatpush.msra.mxu0 %v1027
        %v1029 = vand.u32 %v1011, 4294901760
        %1030 = vmatpush.msra.mxu0 %v1029
        %v1031 = vand.u32 %v232, 4294901760
        %v1032 = vsub.f32 %v232, %v1031
        %v1033 = vand.u32 %v1032, 4294901760
        %v1034 = vsub.f32 %v1032, %v1033
        %v1035 = vand.u32 %v1034, 4294901760
        %1036 = vmatmul.f32.gmra.mxu0 %v1035
        %v1037 = vpop.f32.mrf.mxu0
        %v1038 = vadd.f32 0.0, %v1037
        %v1039 = vand.u32 %v235, 4294901760
        %v1040 = vsub.f32 %v235, %v1039
        %v1041 = vand.u32 %v1040, 4294901760
        %v1042 = vsub.f32 %v1040, %v1041
        %v1043 = vand.u32 %v1042, 4294901760
        %1044 = vmatmul.f32.gmra.mxu0 %v1043
        %v1045 = vpop.f32.mrf.mxu0
        %v1046 = vadd.f32 0.0, %v1045
        %v1047 = vand.u32 %v238, 4294901760
        %v1048 = vsub.f32 %v238, %v1047
        %v1049 = vand.u32 %v1048, 4294901760
        %v1050 = vsub.f32 %v1048, %v1049
        %v1051 = vand.u32 %v1050, 4294901760
        %1052 = vmatmul.f32.gmra.mxu0 %v1051
        %v1053 = vpop.f32.mrf.mxu0
        %v1054 = vadd.f32 0.0, %v1053
        %v1055 = vand.u32 %v241, 4294901760
        %v1056 = vsub.f32 %v241, %v1055
        %v1057 = vand.u32 %v1056, 4294901760
        %v1058 = vsub.f32 %v1056, %v1057
        %v1059 = vand.u32 %v1058, 4294901760
        %1060 = vmatmul.f32.gmra.mxu0 %v1059
        %v1061 = vpop.f32.mrf.mxu0
        %v1062 = vadd.f32 0.0, %v1061
        %v1063 = vand.u32 %v244, 4294901760
        %v1064 = vsub.f32 %v244, %v1063
        %v1065 = vand.u32 %v1064, 4294901760
        %v1066 = vsub.f32 %v1064, %v1065
        %v1067 = vand.u32 %v1066, 4294901760
        %1068 = vmatmul.f32.gmra.mxu0 %v1067
        %v1069 = vpop.f32.mrf.mxu0
        %v1070 = vadd.f32 0.0, %v1069
        %v1071 = vand.u32 %v247, 4294901760
        %v1072 = vsub.f32 %v247, %v1071
        %v1073 = vand.u32 %v1072, 4294901760
        %v1074 = vsub.f32 %v1072, %v1073
        %v1075 = vand.u32 %v1074, 4294901760
        %1076 = vmatmul.f32.gmra.mxu0 %v1075
        %v1077 = vpop.f32.mrf.mxu0
        %v1078 = vadd.f32 0.0, %v1077
        %v1079 = vand.u32 %v250, 4294901760
        %v1080 = vsub.f32 %v250, %v1079
        %v1081 = vand.u32 %v1080, 4294901760
        %v1082 = vsub.f32 %v1080, %v1081
        %v1083 = vand.u32 %v1082, 4294901760
        %1084 = vmatmul.f32.gmra.mxu0 %v1083
        %v1085 = vpop.f32.mrf.mxu0
        %v1086 = vadd.f32 0.0, %v1085
        %v1087 = vand.u32 %v253, 4294901760
        %v1088 = vsub.f32 %v253, %v1087
        %v1089 = vand.u32 %v1088, 4294901760
        %v1090 = vsub.f32 %v1088, %v1089
        %v1091 = vand.u32 %v1090, 4294901760
        %1092 = vmatmul.f32.gmra.mxu0 %v1091
        %v1093 = vpop.f32.mrf.mxu0
        %v1094 = vadd.f32 0.0, %v1093
        %1095 = vdwg.mxu0
        %1096 = vmatpush.msra.mxu0 0.0
        %1097 = vmatpush.msra.mxu0 0.0
        %1098 = vmatpush.msra.mxu0 0.0
        %1099 = vmatpush.msra.mxu0 0.0
        %1100 = vmatpush.msra.mxu0 0.0
        %1101 = vmatpush.msra.mxu0 0.0
        %1102 = vmatpush.msra.mxu0 0.0
        %1103 = vmatpush.msra.mxu0 0.0
        %1104 = vmatpush.msra.mxu0 0.0
        %1105 = vmatpush.msra.mxu0 0.0
        %1106 = vmatpush.msra.mxu0 0.0
        %1107 = vmatpush.msra.mxu0 0.0
        %1108 = vmatpush.msra.mxu0 0.0
        %1109 = vmatpush.msra.mxu0 0.0
        %v1110 = vand.u32 %v1012, 4294901760
        %v1111 = vsub.f32 %v1012, %v1110
        %v1112 = vand.u32 %v1111, 4294901760
        %v1113 = vsub.f32 %v1111, %v1112
        %v1114 = vand.u32 %v1113, 4294901760
        %1115 = vmatpush.msra.mxu0 %v1114
        %v1116 = vand.u32 %v1011, 4294901760
        %v1117 = vsub.f32 %v1011, %v1116
        %v1118 = vand.u32 %v1117, 4294901760
        %v1119 = vsub.f32 %v1117, %v1118
        %v1120 = vand.u32 %v1119, 4294901760
        %1121 = vmatpush.msra.mxu0 %v1120
        %v1122 = vand.u32 %v232, 4294901760
        %1123 = vmatmul.f32.gmra.mxu0 %v1122
        %v1124 = vpop.f32.mrf.mxu0
        %v1125 = vadd.f32 %v1038, %v1124
        %v1126 = vand.u32 %v235, 4294901760
        %1127 = vmatmul.f32.gmra.mxu0 %v1126
        %v1128 = vpop.f32.mrf.mxu0
        %v1129 = vadd.f32 %v1046, %v1128
        %v1130 = vand.u32 %v238, 4294901760
        %1131 = vmatmul.f32.gmra.mxu0 %v1130
        %v1132 = vpop.f32.mrf.mxu0
        %v1133 = vadd.f32 %v1054, %v1132
        %v1134 = vand.u32 %v241, 4294901760
        %1135 = vmatmul.f32.gmra.mxu0 %v1134
        %v1136 = vpop.f32.mrf.mxu0
        %v1137 = vadd.f32 %v1062, %v1136
        %v1138 = vand.u32 %v244, 4294901760
        %1139 = vmatmul.f32.gmra.mxu0 %v1138
        %v1140 = vpop.f32.mrf.mxu0
        %v1141 = vadd.f32 %v1070, %v1140
        %v1142 = vand.u32 %v247, 4294901760
        %1143 = vmatmul.f32.gmra.mxu0 %v1142
        %v1144 = vpop.f32.mrf.mxu0
        %v1145 = vadd.f32 %v1078, %v1144
        %v1146 = vand.u32 %v250, 4294901760
        %1147 = vmatmul.f32.gmra.mxu0 %v1146
        %v1148 = vpop.f32.mrf.mxu0
        %v1149 = vadd.f32 %v1086, %v1148
        %v1150 = vand.u32 %v253, 4294901760
        %1151 = vmatmul.f32.gmra.mxu0 %v1150
        %v1152 = vpop.f32.mrf.mxu0
        %v1153 = vadd.f32 %v1094, %v1152
        %1154 = vdwg.mxu0
        %1155 = vmatpush.msra.mxu0 0.0
        %1156 = vmatpush.msra.mxu0 0.0
        %1157 = vmatpush.msra.mxu0 0.0
        %1158 = vmatpush.msra.mxu0 0.0
        %1159 = vmatpush.msra.mxu0 0.0
        %1160 = vmatpush.msra.mxu0 0.0
        %1161 = vmatpush.msra.mxu0 0.0
        %1162 = vmatpush.msra.mxu0 0.0
        %1163 = vmatpush.msra.mxu0 0.0
        %1164 = vmatpush.msra.mxu0 0.0
        %1165 = vmatpush.msra.mxu0 0.0
        %1166 = vmatpush.msra.mxu0 0.0
        %1167 = vmatpush.msra.mxu0 0.0
        %1168 = vmatpush.msra.mxu0 0.0
        %v1169 = vand.u32 %v1012, 4294901760
        %v1170 = vsub.f32 %v1012, %v1169
        %1171 = vmatpush.msra.mxu0 %v1170
        %v1172 = vand.u32 %v1011, 4294901760
        %v1173 = vsub.f32 %v1011, %v1172
        %1174 = vmatpush.msra.mxu0 %v1173
        %v1175 = vand.u32 %v232, 4294901760
        %v1176 = vsub.f32 %v232, %v1175
        %1177 = vmatmul.f32.gmra.mxu0 %v1176
        %v1178 = vpop.f32.mrf.mxu0
        %v1179 = vadd.f32 %v1125, %v1178
        %v1180 = vand.u32 %v235, 4294901760
        %v1181 = vsub.f32 %v235, %v1180
        %1182 = vmatmul.f32.gmra.mxu0 %v1181
        %v1183 = vpop.f32.mrf.mxu0
        %v1184 = vadd.f32 %v1129, %v1183
        %v1185 = vand.u32 %v238, 4294901760
        %v1186 = vsub.f32 %v238, %v1185
        %1187 = vmatmul.f32.gmra.mxu0 %v1186
        %v1188 = vpop.f32.mrf.mxu0
        %v1189 = vadd.f32 %v1133, %v1188
        %v1190 = vand.u32 %v241, 4294901760
        %v1191 = vsub.f32 %v241, %v1190
        %1192 = vmatmul.f32.gmra.mxu0 %v1191
        %v1193 = vpop.f32.mrf.mxu0
        %v1194 = vadd.f32 %v1137, %v1193
        %v1195 = vand.u32 %v244, 4294901760
        %v1196 = vsub.f32 %v244, %v1195
        %1197 = vmatmul.f32.gmra.mxu0 %v1196
        %v1198 = vpop.f32.mrf.mxu0
        %v1199 = vadd.f32 %v1141, %v1198
        %v1200 = vand.u32 %v247, 4294901760
        %v1201 = vsub.f32 %v247, %v1200
        %1202 = vmatmul.f32.gmra.mxu0 %v1201
        %v1203 = vpop.f32.mrf.mxu0
        %v1204 = vadd.f32 %v1145, %v1203
        %v1205 = vand.u32 %v250, 4294901760
        %v1206 = vsub.f32 %v250, %v1205
        %1207 = vmatmul.f32.gmra.mxu0 %v1206
        %v1208 = vpop.f32.mrf.mxu0
        %v1209 = vadd.f32 %v1149, %v1208
        %v1210 = vand.u32 %v253, 4294901760
        %v1211 = vsub.f32 %v253, %v1210
        %1212 = vmatmul.f32.gmra.mxu0 %v1211
        %v1213 = vpop.f32.mrf.mxu0
        %v1214 = vadd.f32 %v1153, %v1213
        %1215 = vdwg.mxu0
        %1216 = vmatpush.msra.mxu0 0.0
        %1217 = vmatpush.msra.mxu0 0.0
        %1218 = vmatpush.msra.mxu0 0.0
        %1219 = vmatpush.msra.mxu0 0.0
        %1220 = vmatpush.msra.mxu0 0.0
        %1221 = vmatpush.msra.mxu0 0.0
        %1222 = vmatpush.msra.mxu0 0.0
        %1223 = vmatpush.msra.mxu0 0.0
        %1224 = vmatpush.msra.mxu0 0.0
        %1225 = vmatpush.msra.mxu0 0.0
        %1226 = vmatpush.msra.mxu0 0.0
        %1227 = vmatpush.msra.mxu0 0.0
        %1228 = vmatpush.msra.mxu0 0.0
        %1229 = vmatpush.msra.mxu0 0.0
        %v1230 = vand.u32 %v1012, 4294901760
        %1231 = vmatpush.msra.mxu0 %v1230
        %v1232 = vand.u32 %v1011, 4294901760
        %1233 = vmatpush.msra.mxu0 %v1232
        %v1234 = vand.u32 %v232, 4294901760
        %v1235 = vsub.f32 %v232, %v1234
        %v1236 = vand.u32 %v1235, 4294901760
        %1237 = vmatmul.f32.gmra.mxu0 %v1236
        %v1238 = vpop.f32.mrf.mxu0
        %v1239 = vadd.f32 %v1179, %v1238
        %v1240 = vand.u32 %v235, 4294901760
        %v1241 = vsub.f32 %v235, %v1240
        %v1242 = vand.u32 %v1241, 4294901760
        %1243 = vmatmul.f32.gmra.mxu0 %v1242
        %v1244 = vpop.f32.mrf.mxu0
        %v1245 = vadd.f32 %v1184, %v1244
        %v1246 = vand.u32 %v238, 4294901760
        %v1247 = vsub.f32 %v238, %v1246
        %v1248 = vand.u32 %v1247, 4294901760
        %1249 = vmatmul.f32.gmra.mxu0 %v1248
        %v1250 = vpop.f32.mrf.mxu0
        %v1251 = vadd.f32 %v1189, %v1250
        %v1252 = vand.u32 %v241, 4294901760
        %v1253 = vsub.f32 %v241, %v1252
        %v1254 = vand.u32 %v1253, 4294901760
        %1255 = vmatmul.f32.gmra.mxu0 %v1254
        %v1256 = vpop.f32.mrf.mxu0
        %v1257 = vadd.f32 %v1194, %v1256
        %v1258 = vand.u32 %v244, 4294901760
        %v1259 = vsub.f32 %v244, %v1258
        %v1260 = vand.u32 %v1259, 4294901760
        %1261 = vmatmul.f32.gmra.mxu0 %v1260
        %v1262 = vpop.f32.mrf.mxu0
        %v1263 = vadd.f32 %v1199, %v1262
        %v1264 = vand.u32 %v247, 4294901760
        %v1265 = vsub.f32 %v247, %v1264
        %v1266 = vand.u32 %v1265, 4294901760
        %1267 = vmatmul.f32.gmra.mxu0 %v1266
        %v1268 = vpop.f32.mrf.mxu0
        %v1269 = vadd.f32 %v1204, %v1268
        %v1270 = vand.u32 %v250, 4294901760
        %v1271 = vsub.f32 %v250, %v1270
        %v1272 = vand.u32 %v1271, 4294901760
        %1273 = vmatmul.f32.gmra.mxu0 %v1272
        %v1274 = vpop.f32.mrf.mxu0
        %v1275 = vadd.f32 %v1209, %v1274
        %v1276 = vand.u32 %v253, 4294901760
        %v1277 = vsub.f32 %v253, %v1276
        %v1278 = vand.u32 %v1277, 4294901760
        %1279 = vmatmul.f32.gmra.mxu0 %v1278
        %v1280 = vpop.f32.mrf.mxu0
        %v1281 = vadd.f32 %v1214, %v1280
        %1282 = vdwg.mxu0
        %1283 = vmatpush.msra.mxu0 0.0
        %1284 = vmatpush.msra.mxu0 0.0
        %1285 = vmatpush.msra.mxu0 0.0
        %1286 = vmatpush.msra.mxu0 0.0
        %1287 = vmatpush.msra.mxu0 0.0
        %1288 = vmatpush.msra.mxu0 0.0
        %1289 = vmatpush.msra.mxu0 0.0
        %1290 = vmatpush.msra.mxu0 0.0
        %1291 = vmatpush.msra.mxu0 0.0
        %1292 = vmatpush.msra.mxu0 0.0
        %1293 = vmatpush.msra.mxu0 0.0
        %1294 = vmatpush.msra.mxu0 0.0
        %1295 = vmatpush.msra.mxu0 0.0
        %1296 = vmatpush.msra.mxu0 0.0
        %v1297 = vand.u32 %v1012, 4294901760
        %v1298 = vsub.f32 %v1012, %v1297
        %v1299 = vand.u32 %v1298, 4294901760
        %1300 = vmatpush.msra.mxu0 %v1299
        %v1301 = vand.u32 %v1011, 4294901760
        %v1302 = vsub.f32 %v1011, %v1301
        %v1303 = vand.u32 %v1302, 4294901760
        %1304 = vmatpush.msra.mxu0 %v1303
        %v1305 = vand.u32 %v232, 4294901760
        %1306 = vmatmul.f32.gmra.mxu0 %v1305
        %v1307 = vpop.f32.mrf.mxu0
        %v1308 = vadd.f32 %v1239, %v1307
        %v1309 = vand.u32 %v235, 4294901760
        %1310 = vmatmul.f32.gmra.mxu0 %v1309
        %v1311 = vpop.f32.mrf.mxu0
        %v1312 = vadd.f32 %v1245, %v1311
        %v1313 = vand.u32 %v238, 4294901760
        %1314 = vmatmul.f32.gmra.mxu0 %v1313
        %v1315 = vpop.f32.mrf.mxu0
        %v1316 = vadd.f32 %v1251, %v1315
        %v1317 = vand.u32 %v241, 4294901760
        %1318 = vmatmul.f32.gmra.mxu0 %v1317
        %v1319 = vpop.f32.mrf.mxu0
        %v1320 = vadd.f32 %v1257, %v1319
        %v1321 = vand.u32 %v244, 4294901760
        %1322 = vmatmul.f32.gmra.mxu0 %v1321
        %v1323 = vpop.f32.mrf.mxu0
        %v1324 = vadd.f32 %v1263, %v1323
        %v1325 = vand.u32 %v247, 4294901760
        %1326 = vmatmul.f32.gmra.mxu0 %v1325
        %v1327 = vpop.f32.mrf.mxu0
        %v1328 = vadd.f32 %v1269, %v1327
        %v1329 = vand.u32 %v250, 4294901760
        %1330 = vmatmul.f32.gmra.mxu0 %v1329
        %v1331 = vpop.f32.mrf.mxu0
        %v1332 = vadd.f32 %v1275, %v1331
        %v1333 = vand.u32 %v253, 4294901760
        %1334 = vmatmul.f32.gmra.mxu0 %v1333
        %v1335 = vpop.f32.mrf.mxu0
        %v1336 = vadd.f32 %v1281, %v1335
        %1337 = vdwg.mxu0
        %1338 = vmatpush.msra.mxu0 0.0
        %1339 = vmatpush.msra.mxu0 0.0
        %1340 = vmatpush.msra.mxu0 0.0
        %1341 = vmatpush.msra.mxu0 0.0
        %1342 = vmatpush.msra.mxu0 0.0
        %1343 = vmatpush.msra.mxu0 0.0
        %1344 = vmatpush.msra.mxu0 0.0
        %1345 = vmatpush.msra.mxu0 0.0
        %1346 = vmatpush.msra.mxu0 0.0
        %1347 = vmatpush.msra.mxu0 0.0
        %1348 = vmatpush.msra.mxu0 0.0
        %1349 = vmatpush.msra.mxu0 0.0
        %1350 = vmatpush.msra.mxu0 0.0
        %1351 = vmatpush.msra.mxu0 0.0
        %v1352 = vand.u32 %v1012, 4294901760
        %1353 = vmatpush.msra.mxu0 %v1352
        %v1354 = vand.u32 %v1011, 4294901760
        %1355 = vmatpush.msra.mxu0 %v1354
        %v1356 = vand.u32 %v232, 4294901760
        %1357 = vmatmul.f32.gmra.mxu0 %v1356
        %v1358 = vpop.f32.mrf.mxu0
        %v1359 = vadd.f32 %v1308, %v1358
        %v1360 = vand.u32 %v235, 4294901760
        %1361 = vmatmul.f32.gmra.mxu0 %v1360
        %v1362 = vpop.f32.mrf.mxu0
        %v1363 = vadd.f32 %v1312, %v1362
        %v1364 = vand.u32 %v238, 4294901760
        %1365 = vmatmul.f32.gmra.mxu0 %v1364
        %v1366 = vpop.f32.mrf.mxu0
        %v1367 = vadd.f32 %v1316, %v1366
        %v1368 = vand.u32 %v241, 4294901760
        %1369 = vmatmul.f32.gmra.mxu0 %v1368
        %v1370 = vpop.f32.mrf.mxu0
        %v1371 = vadd.f32 %v1320, %v1370
        %v1372 = vand.u32 %v244, 4294901760
        %1373 = vmatmul.f32.gmra.mxu0 %v1372
        %v1374 = vpop.f32.mrf.mxu0
        %v1375 = vadd.f32 %v1324, %v1374
        %v1376 = vand.u32 %v247, 4294901760
        %1377 = vmatmul.f32.gmra.mxu0 %v1376
        %v1378 = vpop.f32.mrf.mxu0
        %v1379 = vadd.f32 %v1328, %v1378
        %v1380 = vand.u32 %v250, 4294901760
        %1381 = vmatmul.f32.gmra.mxu0 %v1380
        %v1382 = vpop.f32.mrf.mxu0
        %v1383 = vadd.f32 %v1332, %v1382
        %v1384 = vand.u32 %v253, 4294901760
        %1385 = vmatmul.f32.gmra.mxu0 %v1384
        %v1386 = vpop.f32.mrf.mxu0
        %v1387 = vadd.f32 %v1336, %v1386
        %1388 = vdwg.mxu0
        %v1389 = vld [vmem:[#allocation2] sm:$0xff]
        %v1390 = vld [vmem:[#allocation2 + $0x8] sm:$0xff]
        %v1391 = vld [vmem:[#allocation2 + $0x10] sm:$0xff]
        %v1392 = vld [vmem:[#allocation2 + $0x18] sm:$0xff]
        %v1393 = vld [vmem:[#allocation2 + $0x20] sm:$0xff]
        %v1394 = vld [vmem:[#allocation2 + $0x28] sm:$0xff]
        %v1395 = vld [vmem:[#allocation2 + $0x30] sm:$0xff]
        %v1396 = vld [vmem:[#allocation2 + $0x38] sm:$0xff]
        %s1397 = scalar_lea.vmem [#allocation2], 64
        %v1398 = vld [vmem:[%s1397] sm:$0xff]
        %v1399 = vld [vmem:[%s1397 + $0x8] sm:$0xff]
        %v1400 = vld [vmem:[%s1397 + $0x10] sm:$0xff]
        %v1401 = vld [vmem:[%s1397 + $0x18] sm:$0xff]
        %v1402 = vld [vmem:[%s1397 + $0x20] sm:$0xff]
        %v1403 = vld [vmem:[%s1397 + $0x28] sm:$0xff]
        %v1404 = vld [vmem:[%s1397 + $0x30] sm:$0xff]
        %v1405 = vld [vmem:[%s1397 + $0x38] sm:$0xff]
        %s1406 = scalar_lea.vmem [#allocation2], 128
        %v1407 = vld [vmem:[%s1406] sm:$0xff]
        %v1408 = vld [vmem:[%s1406 + $0x8] sm:$0xff]
        %v1409 = vld [vmem:[%s1406 + $0x10] sm:$0xff]
        %v1410 = vld [vmem:[%s1406 + $0x18] sm:$0xff]
        %v1411 = vld [vmem:[%s1406 + $0x20] sm:$0xff]
        %v1412 = vld [vmem:[%s1406 + $0x28] sm:$0xff]
        %v1413 = vld [vmem:[%s1406 + $0x30] sm:$0xff]
        %v1414 = vld [vmem:[%s1406 + $0x38] sm:$0xff]
        %vm1415 = vcmask 523264
        %v1417 = vsel %vm1415, %v1398, 0
        %v1420 = vsel %vm1415, %v1399, 0
        %v1423 = vsel %vm1415, %v1400, 0
        %v1426 = vsel %vm1415, %v1401, 0
        %v1429 = vsel %vm1415, %v1402, 0
        %v1432 = vsel %vm1415, %v1403, 0
        %v1435 = vsel %vm1415, %v1404, 0
        %v1438 = vsel %vm1415, %v1405, 0
        %1440 = vmatpush.msra.mxu0 0.0
        %1441 = vmatpush.msra.mxu0 0.0
        %1442 = vmatpush.msra.mxu0 0.0
        %1443 = vmatpush.msra.mxu0 0.0
        %1444 = vmatpush.msra.mxu0 0.0
        %1445 = vmatpush.msra.mxu0 0.0
        %1446 = vmatpush.msra.mxu0 0.0
        %1447 = vmatpush.msra.mxu0 0.0
        %v1448 = vand.u32 %v629, 4294901760
        %1449 = vmatpush.msra.mxu0 %v1448
        %v1450 = vand.u32 %v625, 4294901760
        %1451 = vmatpush.msra.mxu0 %v1450
        %v1452 = vand.u32 %v621, 4294901760
        %1453 = vmatpush.msra.mxu0 %v1452
        %v1454 = vand.u32 %v617, 4294901760
        %1455 = vmatpush.msra.mxu0 %v1454
        %v1456 = vand.u32 %v613, 4294901760
        %1457 = vmatpush.msra.mxu0 %v1456
        %v1458 = vand.u32 %v609, 4294901760
        %1459 = vmatpush.msra.mxu0 %v1458
        %v1460 = vand.u32 %v605, 4294901760
        %1461 = vmatpush.msra.mxu0 %v1460
        %v1462 = vand.u32 %v601, 4294901760
        %1463 = vmatpush.msra.mxu0 %v1462
        %v1464 = vand.u32 %v1417, 4294901760
        %v1465 = vsub.f32 %v1417, %v1464
        %v1466 = vand.u32 %v1465, 4294901760
        %v1467 = vsub.f32 %v1465, %v1466
        %v1468 = vand.u32 %v1467, 4294901760
        %1469 = vmatmul.f32.gmra.mxu0 %v1468
        %v1470 = vpop.f32.mrf.mxu0
        %v1471 = vadd.f32 0.0, %v1470
        %v1472 = vand.u32 %v1420, 4294901760
        %v1473 = vsub.f32 %v1420, %v1472
        %v1474 = vand.u32 %v1473, 4294901760
        %v1475 = vsub.f32 %v1473, %v1474
        %v1476 = vand.u32 %v1475, 4294901760
        %1477 = vmatmul.f32.gmra.mxu0 %v1476
        %v1478 = vpop.f32.mrf.mxu0
        %v1479 = vadd.f32 0.0, %v1478
        %v1480 = vand.u32 %v1423, 4294901760
        %v1481 = vsub.f32 %v1423, %v1480
        %v1482 = vand.u32 %v1481, 4294901760
        %v1483 = vsub.f32 %v1481, %v1482
        %v1484 = vand.u32 %v1483, 4294901760
        %1485 = vmatmul.f32.gmra.mxu0 %v1484
        %v1486 = vpop.f32.mrf.mxu0
        %v1487 = vadd.f32 0.0, %v1486
        %v1488 = vand.u32 %v1426, 4294901760
        %v1489 = vsub.f32 %v1426, %v1488
        %v1490 = vand.u32 %v1489, 4294901760
        %v1491 = vsub.f32 %v1489, %v1490
        %v1492 = vand.u32 %v1491, 4294901760
        %1493 = vmatmul.f32.gmra.mxu0 %v1492
        %v1494 = vpop.f32.mrf.mxu0
        %v1495 = vadd.f32 0.0, %v1494
        %v1496 = vand.u32 %v1429, 4294901760
        %v1497 = vsub.f32 %v1429, %v1496
        %v1498 = vand.u32 %v1497, 4294901760
        %v1499 = vsub.f32 %v1497, %v1498
        %v1500 = vand.u32 %v1499, 4294901760
        %1501 = vmatmul.f32.gmra.mxu0 %v1500
        %v1502 = vpop.f32.mrf.mxu0
        %v1503 = vadd.f32 0.0, %v1502
        %v1504 = vand.u32 %v1432, 4294901760
        %v1505 = vsub.f32 %v1432, %v1504
        %v1506 = vand.u32 %v1505, 4294901760
        %v1507 = vsub.f32 %v1505, %v1506
        %v1508 = vand.u32 %v1507, 4294901760
        %1509 = vmatmul.f32.gmra.mxu0 %v1508
        %v1510 = vpop.f32.mrf.mxu0
        %v1511 = vadd.f32 0.0, %v1510
        %v1512 = vand.u32 %v1435, 4294901760
        %v1513 = vsub.f32 %v1435, %v1512
        %v1514 = vand.u32 %v1513, 4294901760
        %v1515 = vsub.f32 %v1513, %v1514
        %v1516 = vand.u32 %v1515, 4294901760
        %1517 = vmatmul.f32.gmra.mxu0 %v1516
        %v1518 = vpop.f32.mrf.mxu0
        %v1519 = vadd.f32 0.0, %v1518
        %v1520 = vand.u32 %v1438, 4294901760
        %v1521 = vsub.f32 %v1438, %v1520
        %v1522 = vand.u32 %v1521, 4294901760
        %v1523 = vsub.f32 %v1521, %v1522
        %v1524 = vand.u32 %v1523, 4294901760
        %1525 = vmatmul.f32.gmra.mxu0 %v1524
        %v1526 = vpop.f32.mrf.mxu0
        %v1527 = vadd.f32 0.0, %v1526
        %1528 = vdwg.mxu0
        %1529 = vmatpush.msra.mxu0 0.0
        %1530 = vmatpush.msra.mxu0 0.0
        %1531 = vmatpush.msra.mxu0 0.0
        %1532 = vmatpush.msra.mxu0 0.0
        %1533 = vmatpush.msra.mxu0 0.0
        %1534 = vmatpush.msra.mxu0 0.0
        %1535 = vmatpush.msra.mxu0 0.0
        %1536 = vmatpush.msra.mxu0 0.0
        %v1537 = vand.u32 %v629, 4294901760
        %v1538 = vsub.f32 %v629, %v1537
        %v1539 = vand.u32 %v1538, 4294901760
        %v1540 = vsub.f32 %v1538, %v1539
        %v1541 = vand.u32 %v1540, 4294901760
        %1542 = vmatpush.msra.mxu0 %v1541
        %v1543 = vand.u32 %v625, 4294901760
        %v1544 = vsub.f32 %v625, %v1543
        %v1545 = vand.u32 %v1544, 4294901760
        %v1546 = vsub.f32 %v1544, %v1545
        %v1547 = vand.u32 %v1546, 4294901760
        %1548 = vmatpush.msra.mxu0 %v1547
        %v1549 = vand.u32 %v621, 4294901760
        %v1550 = vsub.f32 %v621, %v1549
        %v1551 = vand.u32 %v1550, 4294901760
        %v1552 = vsub.f32 %v1550, %v1551
        %v1553 = vand.u32 %v1552, 4294901760
        %1554 = vmatpush.msra.mxu0 %v1553
        %v1555 = vand.u32 %v617, 4294901760
        %v1556 = vsub.f32 %v617, %v1555
        %v1557 = vand.u32 %v1556, 4294901760
        %v1558 = vsub.f32 %v1556, %v1557
        %v1559 = vand.u32 %v1558, 4294901760
        %1560 = vmatpush.msra.mxu0 %v1559
        %v1561 = vand.u32 %v613, 4294901760
        %v1562 = vsub.f32 %v613, %v1561
        %v1563 = vand.u32 %v1562, 4294901760
        %v1564 = vsub.f32 %v1562, %v1563
        %v1565 = vand.u32 %v1564, 4294901760
        %1566 = vmatpush.msra.mxu0 %v1565
        %v1567 = vand.u32 %v609, 4294901760
        %v1568 = vsub.f32 %v609, %v1567
        %v1569 = vand.u32 %v1568, 4294901760
        %v1570 = vsub.f32 %v1568, %v1569
        %v1571 = vand.u32 %v1570, 4294901760
        %1572 = vmatpush.msra.mxu0 %v1571
        %v1573 = vand.u32 %v605, 4294901760
        %v1574 = vsub.f32 %v605, %v1573
        %v1575 = vand.u32 %v1574, 4294901760
        %v1576 = vsub.f32 %v1574, %v1575
        %v1577 = vand.u32 %v1576, 4294901760
        %1578 = vmatpush.msra.mxu0 %v1577
        %v1579 = vand.u32 %v601, 4294901760
        %v1580 = vsub.f32 %v601, %v1579
        %v1581 = vand.u32 %v1580, 4294901760
        %v1582 = vsub.f32 %v1580, %v1581
        %v1583 = vand.u32 %v1582, 4294901760
        %1584 = vmatpush.msra.mxu0 %v1583
        %v1585 = vand.u32 %v1417, 4294901760
        %1586 = vmatmul.f32.gmra.mxu0 %v1585
        %v1587 = vpop.f32.mrf.mxu0
        %v1588 = vadd.f32 %v1471, %v1587
        %v1589 = vand.u32 %v1420, 4294901760
        %1590 = vmatmul.f32.gmra.mxu0 %v1589
        %v1591 = vpop.f32.mrf.mxu0
        %v1592 = vadd.f32 %v1479, %v1591
        %v1593 = vand.u32 %v1423, 4294901760
        %1594 = vmatmul.f32.gmra.mxu0 %v1593
        %v1595 = vpop.f32.mrf.mxu0
        %v1596 = vadd.f32 %v1487, %v1595
        %v1597 = vand.u32 %v1426, 4294901760
        %1598 = vmatmul.f32.gmra.mxu0 %v1597
        %v1599 = vpop.f32.mrf.mxu0
        %v1600 = vadd.f32 %v1495, %v1599
        %v1601 = vand.u32 %v1429, 4294901760
        %1602 = vmatmul.f32.gmra.mxu0 %v1601
        %v1603 = vpop.f32.mrf.mxu0
        %v1604 = vadd.f32 %v1503, %v1603
        %v1605 = vand.u32 %v1432, 4294901760
        %1606 = vmatmul.f32.gmra.mxu0 %v1605
        %v1607 = vpop.f32.mrf.mxu0
        %v1608 = vadd.f32 %v1511, %v1607
        %v1609 = vand.u32 %v1435, 4294901760
        %1610 = vmatmul.f32.gmra.mxu0 %v1609
        %v1611 = vpop.f32.mrf.mxu0
        %v1612 = vadd.f32 %v1519, %v1611
        %v1613 = vand.u32 %v1438, 4294901760
        %1614 = vmatmul.f32.gmra.mxu0 %v1613
        %v1615 = vpop.f32.mrf.mxu0
        %v1616 = vadd.f32 %v1527, %v1615
        %1617 = vdwg.mxu0
        %1618 = vmatpush.msra.mxu0 0.0
        %1619 = vmatpush.msra.mxu0 0.0
        %1620 = vmatpush.msra.mxu0 0.0
        %1621 = vmatpush.msra.mxu0 0.0
        %1622 = vmatpush.msra.mxu0 0.0
        %1623 = vmatpush.msra.mxu0 0.0
        %1624 = vmatpush.msra.mxu0 0.0
        %1625 = vmatpush.msra.mxu0 0.0
        %v1626 = vand.u32 %v629, 4294901760
        %v1627 = vsub.f32 %v629, %v1626
        %1628 = vmatpush.msra.mxu0 %v1627
        %v1629 = vand.u32 %v625, 4294901760
        %v1630 = vsub.f32 %v625, %v1629
        %1631 = vmatpush.msra.mxu0 %v1630
        %v1632 = vand.u32 %v621, 4294901760
        %v1633 = vsub.f32 %v621, %v1632
        %1634 = vmatpush.msra.mxu0 %v1633
        %v1635 = vand.u32 %v617, 4294901760
        %v1636 = vsub.f32 %v617, %v1635
        %1637 = vmatpush.msra.mxu0 %v1636
        %v1638 = vand.u32 %v613, 4294901760
        %v1639 = vsub.f32 %v613, %v1638
        %1640 = vmatpush.msra.mxu0 %v1639
        %v1641 = vand.u32 %v609, 4294901760
        %v1642 = vsub.f32 %v609, %v1641
        %1643 = vmatpush.msra.mxu0 %v1642
        %v1644 = vand.u32 %v605, 4294901760
        %v1645 = vsub.f32 %v605, %v1644
        %1646 = vmatpush.msra.mxu0 %v1645
        %v1647 = vand.u32 %v601, 4294901760
        %v1648 = vsub.f32 %v601, %v1647
        %1649 = vmatpush.msra.mxu0 %v1648
        %v1650 = vand.u32 %v1417, 4294901760
        %v1651 = vsub.f32 %v1417, %v1650
        %1652 = vmatmul.f32.gmra.mxu0 %v1651
        %v1653 = vpop.f32.mrf.mxu0
        %v1654 = vadd.f32 %v1588, %v1653
        %v1655 = vand.u32 %v1420, 4294901760
        %v1656 = vsub.f32 %v1420, %v1655
        %1657 = vmatmul.f32.gmra.mxu0 %v1656
        %v1658 = vpop.f32.mrf.mxu0
        %v1659 = vadd.f32 %v1592, %v1658
        %v1660 = vand.u32 %v1423, 4294901760
        %v1661 = vsub.f32 %v1423, %v1660
        %1662 = vmatmul.f32.gmra.mxu0 %v1661
        %v1663 = vpop.f32.mrf.mxu0
        %v1664 = vadd.f32 %v1596, %v1663
        %v1665 = vand.u32 %v1426, 4294901760
        %v1666 = vsub.f32 %v1426, %v1665
        %1667 = vmatmul.f32.gmra.mxu0 %v1666
        %v1668 = vpop.f32.mrf.mxu0
        %v1669 = vadd.f32 %v1600, %v1668
        %v1670 = vand.u32 %v1429, 4294901760
        %v1671 = vsub.f32 %v1429, %v1670
        %1672 = vmatmul.f32.gmra.mxu0 %v1671
        %v1673 = vpop.f32.mrf.mxu0
        %v1674 = vadd.f32 %v1604, %v1673
        %v1675 = vand.u32 %v1432, 4294901760
        %v1676 = vsub.f32 %v1432, %v1675
        %1677 = vmatmul.f32.gmra.mxu0 %v1676
        %v1678 = vpop.f32.mrf.mxu0
        %v1679 = vadd.f32 %v1608, %v1678
        %v1680 = vand.u32 %v1435, 4294901760
        %v1681 = vsub.f32 %v1435, %v1680
        %1682 = vmatmul.f32.gmra.mxu0 %v1681
        %v1683 = vpop.f32.mrf.mxu0
        %v1684 = vadd.f32 %v1612, %v1683
        %v1685 = vand.u32 %v1438, 4294901760
        %v1686 = vsub.f32 %v1438, %v1685
        %1687 = vmatmul.f32.gmra.mxu0 %v1686
        %v1688 = vpop.f32.mrf.mxu0
        %v1689 = vadd.f32 %v1616, %v1688
        %1690 = vdwg.mxu0
        %1691 = vmatpush.msra.mxu0 0.0
        %1692 = vmatpush.msra.mxu0 0.0
        %1693 = vmatpush.msra.mxu0 0.0
        %1694 = vmatpush.msra.mxu0 0.0
        %1695 = vmatpush.msra.mxu0 0.0
        %1696 = vmatpush.msra.mxu0 0.0
        %1697 = vmatpush.msra.mxu0 0.0
        %1698 = vmatpush.msra.mxu0 0.0
        %v1699 = vand.u32 %v629, 4294901760
        %1700 = vmatpush.msra.mxu0 %v1699
        %v1701 = vand.u32 %v625, 4294901760
        %1702 = vmatpush.msra.mxu0 %v1701
        %v1703 = vand.u32 %v621, 4294901760
        %1704 = vmatpush.msra.mxu0 %v1703
        %v1705 = vand.u32 %v617, 4294901760
        %1706 = vmatpush.msra.mxu0 %v1705
        %v1707 = vand.u32 %v613, 4294901760
        %1708 = vmatpush.msra.mxu0 %v1707
        %v1709 = vand.u32 %v609, 4294901760
        %1710 = vmatpush.msra.mxu0 %v1709
        %v1711 = vand.u32 %v605, 4294901760
        %1712 = vmatpush.msra.mxu0 %v1711
        %v1713 = vand.u32 %v601, 4294901760
        %1714 = vmatpush.msra.mxu0 %v1713
        %v1715 = vand.u32 %v1417, 4294901760
        %v1716 = vsub.f32 %v1417, %v1715
        %v1717 = vand.u32 %v1716, 4294901760
        %1718 = vmatmul.f32.gmra.mxu0 %v1717
        %v1719 = vpop.f32.mrf.mxu0
        %v1720 = vadd.f32 %v1654, %v1719
        %v1721 = vand.u32 %v1420, 4294901760
        %v1722 = vsub.f32 %v1420, %v1721
        %v1723 = vand.u32 %v1722, 4294901760
        %1724 = vmatmul.f32.gmra.mxu0 %v1723
        %v1725 = vpop.f32.mrf.mxu0
        %v1726 = vadd.f32 %v1659, %v1725
        %v1727 = vand.u32 %v1423, 4294901760
        %v1728 = vsub.f32 %v1423, %v1727
        %v1729 = vand.u32 %v1728, 4294901760
        %1730 = vmatmul.f32.gmra.mxu0 %v1729
        %v1731 = vpop.f32.mrf.mxu0
        %v1732 = vadd.f32 %v1664, %v1731
        %v1733 = vand.u32 %v1426, 4294901760
        %v1734 = vsub.f32 %v1426, %v1733
        %v1735 = vand.u32 %v1734, 4294901760
        %1736 = vmatmul.f32.gmra.mxu0 %v1735
        %v1737 = vpop.f32.mrf.mxu0
        %v1738 = vadd.f32 %v1669, %v1737
        %v1739 = vand.u32 %v1429, 4294901760
        %v1740 = vsub.f32 %v1429, %v1739
        %v1741 = vand.u32 %v1740, 4294901760
        %1742 = vmatmul.f32.gmra.mxu0 %v1741
        %v1743 = vpop.f32.mrf.mxu0
        %v1744 = vadd.f32 %v1674, %v1743
        %v1745 = vand.u32 %v1432, 4294901760
        %v1746 = vsub.f32 %v1432, %v1745
        %v1747 = vand.u32 %v1746, 4294901760
        %1748 = vmatmul.f32.gmra.mxu0 %v1747
        %v1749 = vpop.f32.mrf.mxu0
        %v1750 = vadd.f32 %v1679, %v1749
        %v1751 = vand.u32 %v1435, 4294901760
        %v1752 = vsub.f32 %v1435, %v1751
        %v1753 = vand.u32 %v1752, 4294901760
        %1754 = vmatmul.f32.gmra.mxu0 %v1753
        %v1755 = vpop.f32.mrf.mxu0
        %v1756 = vadd.f32 %v1684, %v1755
        %v1757 = vand.u32 %v1438, 4294901760
        %v1758 = vsub.f32 %v1438, %v1757
        %v1759 = vand.u32 %v1758, 4294901760
        %1760 = vmatmul.f32.gmra.mxu0 %v1759
        %v1761 = vpop.f32.mrf.mxu0
        %v1762 = vadd.f32 %v1689, %v1761
        %1763 = vdwg.mxu0
        %1764 = vmatpush.msra.mxu0 0.0
        %1765 = vmatpush.msra.mxu0 0.0
        %1766 = vmatpush.msra.mxu0 0.0
        %1767 = vmatpush.msra.mxu0 0.0
        %1768 = vmatpush.msra.mxu0 0.0
        %1769 = vmatpush.msra.mxu0 0.0
        %1770 = vmatpush.msra.mxu0 0.0
        %1771 = vmatpush.msra.mxu0 0.0
        %v1772 = vand.u32 %v629, 4294901760
        %v1773 = vsub.f32 %v629, %v1772
        %v1774 = vand.u32 %v1773, 4294901760
        %1775 = vmatpush.msra.mxu0 %v1774
        %v1776 = vand.u32 %v625, 4294901760
        %v1777 = vsub.f32 %v625, %v1776
        %v1778 = vand.u32 %v1777, 4294901760
        %1779 = vmatpush.msra.mxu0 %v1778
        %v1780 = vand.u32 %v621, 4294901760
        %v1781 = vsub.f32 %v621, %v1780
        %v1782 = vand.u32 %v1781, 4294901760
        %1783 = vmatpush.msra.mxu0 %v1782
        %v1784 = vand.u32 %v617, 4294901760
        %v1785 = vsub.f32 %v617, %v1784
        %v1786 = vand.u32 %v1785, 4294901760
        %1787 = vmatpush.msra.mxu0 %v1786
        %v1788 = vand.u32 %v613, 4294901760
        %v1789 = vsub.f32 %v613, %v1788
        %v1790 = vand.u32 %v1789, 4294901760
        %1791 = vmatpush.msra.mxu0 %v1790
        %v1792 = vand.u32 %v609, 4294901760
        %v1793 = vsub.f32 %v609, %v1792
        %v1794 = vand.u32 %v1793, 4294901760
        %1795 = vmatpush.msra.mxu0 %v1794
        %v1796 = vand.u32 %v605, 4294901760
        %v1797 = vsub.f32 %v605, %v1796
        %v1798 = vand.u32 %v1797, 4294901760
        %1799 = vmatpush.msra.mxu0 %v1798
        %v1800 = vand.u32 %v601, 4294901760
        %v1801 = vsub.f32 %v601, %v1800
        %v1802 = vand.u32 %v1801, 4294901760
        %1803 = vmatpush.msra.mxu0 %v1802
        %v1804 = vand.u32 %v1417, 4294901760
        %1805 = vmatmul.f32.gmra.mxu0 %v1804
        %v1806 = vpop.f32.mrf.mxu0
        %v1807 = vadd.f32 %v1720, %v1806
        %v1808 = vand.u32 %v1420, 4294901760
        %1809 = vmatmul.f32.gmra.mxu0 %v1808
        %v1810 = vpop.f32.mrf.mxu0
        %v1811 = vadd.f32 %v1726, %v1810
        %v1812 = vand.u32 %v1423, 4294901760
        %1813 = vmatmul.f32.gmra.mxu0 %v1812
        %v1814 = vpop.f32.mrf.mxu0
        %v1815 = vadd.f32 %v1732, %v1814
        %v1816 = vand.u32 %v1426, 4294901760
        %1817 = vmatmul.f32.gmra.mxu0 %v1816
        %v1818 = vpop.f32.mrf.mxu0
        %v1819 = vadd.f32 %v1738, %v1818
        %v1820 = vand.u32 %v1429, 4294901760
        %1821 = vmatmul.f32.gmra.mxu0 %v1820
        %v1822 = vpop.f32.mrf.mxu0
        %v1823 = vadd.f32 %v1744, %v1822
        %v1824 = vand.u32 %v1432, 4294901760
        %1825 = vmatmul.f32.gmra.mxu0 %v1824
        %v1826 = vpop.f32.mrf.mxu0
        %v1827 = vadd.f32 %v1750, %v1826
        %v1828 = vand.u32 %v1435, 4294901760
        %1829 = vmatmul.f32.gmra.mxu0 %v1828
        %v1830 = vpop.f32.mrf.mxu0
        %v1831 = vadd.f32 %v1756, %v1830
        %v1832 = vand.u32 %v1438, 4294901760
        %1833 = vmatmul.f32.gmra.mxu0 %v1832
        %v1834 = vpop.f32.mrf.mxu0
        %v1835 = vadd.f32 %v1762, %v1834
        %1836 = vdwg.mxu0
        %1837 = vmatpush.msra.mxu0 0.0
        %1838 = vmatpush.msra.mxu0 0.0
        %1839 = vmatpush.msra.mxu0 0.0
        %1840 = vmatpush.msra.mxu0 0.0
        %1841 = vmatpush.msra.mxu0 0.0
        %1842 = vmatpush.msra.mxu0 0.0
        %1843 = vmatpush.msra.mxu0 0.0
        %1844 = vmatpush.msra.mxu0 0.0
        %v1845 = vand.u32 %v629, 4294901760
        %1846 = vmatpush.msra.mxu0 %v1845
        %v1847 = vand.u32 %v625, 4294901760
        %1848 = vmatpush.msra.mxu0 %v1847
        %v1849 = vand.u32 %v621, 4294901760
        %1850 = vmatpush.msra.mxu0 %v1849
        %v1851 = vand.u32 %v617, 4294901760
        %1852 = vmatpush.msra.mxu0 %v1851
        %v1853 = vand.u32 %v613, 4294901760
        %1854 = vmatpush.msra.mxu0 %v1853
        %v1855 = vand.u32 %v609, 4294901760
        %1856 = vmatpush.msra.mxu0 %v1855
        %v1857 = vand.u32 %v605, 4294901760
        %1858 = vmatpush.msra.mxu0 %v1857
        %v1859 = vand.u32 %v601, 4294901760
        %1860 = vmatpush.msra.mxu0 %v1859
        %v1861 = vand.u32 %v1417, 4294901760
        %1862 = vmatmul.f32.gmra.mxu0 %v1861
        %v1863 = vpop.f32.mrf.mxu0
        %v1864 = vadd.f32 %v1807, %v1863
        %v1865 = vand.u32 %v1420, 4294901760
        %1866 = vmatmul.f32.gmra.mxu0 %v1865
        %v1867 = vpop.f32.mrf.mxu0
        %v1868 = vadd.f32 %v1811, %v1867
        %v1869 = vand.u32 %v1423, 4294901760
        %1870 = vmatmul.f32.gmra.mxu0 %v1869
        %v1871 = vpop.f32.mrf.mxu0
        %v1872 = vadd.f32 %v1815, %v1871
        %v1873 = vand.u32 %v1426, 4294901760
        %1874 = vmatmul.f32.gmra.mxu0 %v1873
        %v1875 = vpop.f32.mrf.mxu0
        %v1876 = vadd.f32 %v1819, %v1875
        %v1877 = vand.u32 %v1429, 4294901760
        %1878 = vmatmul.f32.gmra.mxu0 %v1877
        %v1879 = vpop.f32.mrf.mxu0
        %v1880 = vadd.f32 %v1823, %v1879
        %v1881 = vand.u32 %v1432, 4294901760
        %1882 = vmatmul.f32.gmra.mxu0 %v1881
        %v1883 = vpop.f32.mrf.mxu0
        %v1884 = vadd.f32 %v1827, %v1883
        %v1885 = vand.u32 %v1435, 4294901760
        %1886 = vmatmul.f32.gmra.mxu0 %v1885
        %v1887 = vpop.f32.mrf.mxu0
        %v1888 = vadd.f32 %v1831, %v1887
        %v1889 = vand.u32 %v1438, 4294901760
        %1890 = vmatmul.f32.gmra.mxu0 %v1889
        %v1891 = vpop.f32.mrf.mxu0
        %v1892 = vadd.f32 %v1835, %v1891
        %1893 = vdwg.mxu0
        %v1895 = vsel %vm1415, %v1389, 0
        %v1898 = vsel %vm1415, %v1390, 0
        %v1901 = vsel %vm1415, %v1391, 0
        %v1904 = vsel %vm1415, %v1392, 0
        %v1907 = vsel %vm1415, %v1393, 0
        %v1910 = vsel %vm1415, %v1394, 0
        %v1913 = vsel %vm1415, %v1395, 0
        %v1916 = vsel %vm1415, %v1396, 0
        %1918 = vmatpush.msra.mxu0 0.0
        %1919 = vmatpush.msra.mxu0 0.0
        %1920 = vmatpush.msra.mxu0 0.0
        %1921 = vmatpush.msra.mxu0 0.0
        %1922 = vmatpush.msra.mxu0 0.0
        %1923 = vmatpush.msra.mxu0 0.0
        %1924 = vmatpush.msra.mxu0 0.0
        %1925 = vmatpush.msra.mxu0 0.0
        %v1926 = vand.u32 %v1008, 4294901760
        %1927 = vmatpush.msra.mxu0 %v1926
        %v1928 = vand.u32 %v1004, 4294901760
        %1929 = vmatpush.msra.mxu0 %v1928
        %v1930 = vand.u32 %v1000, 4294901760
        %1931 = vmatpush.msra.mxu0 %v1930
        %v1932 = vand.u32 %v996, 4294901760
        %1933 = vmatpush.msra.mxu0 %v1932
        %v1934 = vand.u32 %v992, 4294901760
        %1935 = vmatpush.msra.mxu0 %v1934
        %v1936 = vand.u32 %v988, 4294901760
        %1937 = vmatpush.msra.mxu0 %v1936
        %v1938 = vand.u32 %v984, 4294901760
        %1939 = vmatpush.msra.mxu0 %v1938
        %v1940 = vand.u32 %v980, 4294901760
        %1941 = vmatpush.msra.mxu0 %v1940
        %v1942 = vand.u32 %v1895, 4294901760
        %v1943 = vsub.f32 %v1895, %v1942
        %v1944 = vand.u32 %v1943, 4294901760
        %v1945 = vsub.f32 %v1943, %v1944
        %v1946 = vand.u32 %v1945, 4294901760
        %1947 = vmatmul.f32.gmra.mxu0 %v1946
        %v1948 = vpop.f32.mrf.mxu0
        %v1949 = vadd.f32 0.0, %v1948
        %v1950 = vand.u32 %v1898, 4294901760
        %v1951 = vsub.f32 %v1898, %v1950
        %v1952 = vand.u32 %v1951, 4294901760
        %v1953 = vsub.f32 %v1951, %v1952
        %v1954 = vand.u32 %v1953, 4294901760
        %1955 = vmatmul.f32.gmra.mxu0 %v1954
        %v1956 = vpop.f32.mrf.mxu0
        %v1957 = vadd.f32 0.0, %v1956
        %v1958 = vand.u32 %v1901, 4294901760
        %v1959 = vsub.f32 %v1901, %v1958
        %v1960 = vand.u32 %v1959, 4294901760
        %v1961 = vsub.f32 %v1959, %v1960
        %v1962 = vand.u32 %v1961, 4294901760
        %1963 = vmatmul.f32.gmra.mxu0 %v1962
        %v1964 = vpop.f32.mrf.mxu0
        %v1965 = vadd.f32 0.0, %v1964
        %v1966 = vand.u32 %v1904, 4294901760
        %v1967 = vsub.f32 %v1904, %v1966
        %v1968 = vand.u32 %v1967, 4294901760
        %v1969 = vsub.f32 %v1967, %v1968
        %v1970 = vand.u32 %v1969, 4294901760
        %1971 = vmatmul.f32.gmra.mxu0 %v1970
        %v1972 = vpop.f32.mrf.mxu0
        %v1973 = vadd.f32 0.0, %v1972
        %v1974 = vand.u32 %v1907, 4294901760
        %v1975 = vsub.f32 %v1907, %v1974
        %v1976 = vand.u32 %v1975, 4294901760
        %v1977 = vsub.f32 %v1975, %v1976
        %v1978 = vand.u32 %v1977, 4294901760
        %1979 = vmatmul.f32.gmra.mxu0 %v1978
        %v1980 = vpop.f32.mrf.mxu0
        %v1981 = vadd.f32 0.0, %v1980
        %v1982 = vand.u32 %v1910, 4294901760
        %v1983 = vsub.f32 %v1910, %v1982
        %v1984 = vand.u32 %v1983, 4294901760
        %v1985 = vsub.f32 %v1983, %v1984
        %v1986 = vand.u32 %v1985, 4294901760
        %1987 = vmatmul.f32.gmra.mxu0 %v1986
        %v1988 = vpop.f32.mrf.mxu0
        %v1989 = vadd.f32 0.0, %v1988
        %v1990 = vand.u32 %v1913, 4294901760
        %v1991 = vsub.f32 %v1913, %v1990
        %v1992 = vand.u32 %v1991, 4294901760
        %v1993 = vsub.f32 %v1991, %v1992
        %v1994 = vand.u32 %v1993, 4294901760
        %1995 = vmatmul.f32.gmra.mxu0 %v1994
        %v1996 = vpop.f32.mrf.mxu0
        %v1997 = vadd.f32 0.0, %v1996
        %v1998 = vand.u32 %v1916, 4294901760
        %v1999 = vsub.f32 %v1916, %v1998
        %v2000 = vand.u32 %v1999, 4294901760
        %v2001 = vsub.f32 %v1999, %v2000
        %v2002 = vand.u32 %v2001, 4294901760
        %2003 = vmatmul.f32.gmra.mxu0 %v2002
        %v2004 = vpop.f32.mrf.mxu0
        %v2005 = vadd.f32 0.0, %v2004
        %2006 = vdwg.mxu0
        %2007 = vmatpush.msra.mxu0 0.0
        %2008 = vmatpush.msra.mxu0 0.0
        %2009 = vmatpush.msra.mxu0 0.0
        %2010 = vmatpush.msra.mxu0 0.0
        %2011 = vmatpush.msra.mxu0 0.0
        %2012 = vmatpush.msra.mxu0 0.0
        %2013 = vmatpush.msra.mxu0 0.0
        %2014 = vmatpush.msra.mxu0 0.0
        %v2015 = vand.u32 %v1008, 4294901760
        %v2016 = vsub.f32 %v1008, %v2015
        %v2017 = vand.u32 %v2016, 4294901760
        %v2018 = vsub.f32 %v2016, %v2017
        %v2019 = vand.u32 %v2018, 4294901760
        %2020 = vmatpush.msra.mxu0 %v2019
        %v2021 = vand.u32 %v1004, 4294901760
        %v2022 = vsub.f32 %v1004, %v2021
        %v2023 = vand.u32 %v2022, 4294901760
        %v2024 = vsub.f32 %v2022, %v2023
        %v2025 = vand.u32 %v2024, 4294901760
        %2026 = vmatpush.msra.mxu0 %v2025
        %v2027 = vand.u32 %v1000, 4294901760
        %v2028 = vsub.f32 %v1000, %v2027
        %v2029 = vand.u32 %v2028, 4294901760
        %v2030 = vsub.f32 %v2028, %v2029
        %v2031 = vand.u32 %v2030, 4294901760
        %2032 = vmatpush.msra.mxu0 %v2031
        %v2033 = vand.u32 %v996, 4294901760
        %v2034 = vsub.f32 %v996, %v2033
        %v2035 = vand.u32 %v2034, 4294901760
        %v2036 = vsub.f32 %v2034, %v2035
        %v2037 = vand.u32 %v2036, 4294901760
        %2038 = vmatpush.msra.mxu0 %v2037
        %v2039 = vand.u32 %v992, 4294901760
        %v2040 = vsub.f32 %v992, %v2039
        %v2041 = vand.u32 %v2040, 4294901760
        %v2042 = vsub.f32 %v2040, %v2041
        %v2043 = vand.u32 %v2042, 4294901760
        %2044 = vmatpush.msra.mxu0 %v2043
        %v2045 = vand.u32 %v988, 4294901760
        %v2046 = vsub.f32 %v988, %v2045
        %v2047 = vand.u32 %v2046, 4294901760
        %v2048 = vsub.f32 %v2046, %v2047
        %v2049 = vand.u32 %v2048, 4294901760
        %2050 = vmatpush.msra.mxu0 %v2049
        %v2051 = vand.u32 %v984, 4294901760
        %v2052 = vsub.f32 %v984, %v2051
        %v2053 = vand.u32 %v2052, 4294901760
        %v2054 = vsub.f32 %v2052, %v2053
        %v2055 = vand.u32 %v2054, 4294901760
        %2056 = vmatpush.msra.mxu0 %v2055
        %v2057 = vand.u32 %v980, 4294901760
        %v2058 = vsub.f32 %v980, %v2057
        %v2059 = vand.u32 %v2058, 4294901760
        %v2060 = vsub.f32 %v2058, %v2059
        %v2061 = vand.u32 %v2060, 4294901760
        %2062 = vmatpush.msra.mxu0 %v2061
        %v2063 = vand.u32 %v1895, 4294901760
        %2064 = vmatmul.f32.gmra.mxu0 %v2063
        %v2065 = vpop.f32.mrf.mxu0
        %v2066 = vadd.f32 %v1949, %v2065
        %v2067 = vand.u32 %v1898, 4294901760
        %2068 = vmatmul.f32.gmra.mxu0 %v2067
        %v2069 = vpop.f32.mrf.mxu0
        %v2070 = vadd.f32 %v1957, %v2069
        %v2071 = vand.u32 %v1901, 4294901760
        %2072 = vmatmul.f32.gmra.mxu0 %v2071
        %v2073 = vpop.f32.mrf.mxu0
        %v2074 = vadd.f32 %v1965, %v2073
        %v2075 = vand.u32 %v1904, 4294901760
        %2076 = vmatmul.f32.gmra.mxu0 %v2075
        %v2077 = vpop.f32.mrf.mxu0
        %v2078 = vadd.f32 %v1973, %v2077
        %v2079 = vand.u32 %v1907, 4294901760
        %2080 = vmatmul.f32.gmra.mxu0 %v2079
        %v2081 = vpop.f32.mrf.mxu0
        %v2082 = vadd.f32 %v1981, %v2081
        %v2083 = vand.u32 %v1910, 4294901760
        %2084 = vmatmul.f32.gmra.mxu0 %v2083
        %v2085 = vpop.f32.mrf.mxu0
        %v2086 = vadd.f32 %v1989, %v2085
        %v2087 = vand.u32 %v1913, 4294901760
        %2088 = vmatmul.f32.gmra.mxu0 %v2087
        %v2089 = vpop.f32.mrf.mxu0
        %v2090 = vadd.f32 %v1997, %v2089
        %v2091 = vand.u32 %v1916, 4294901760
        %2092 = vmatmul.f32.gmra.mxu0 %v2091
        %v2093 = vpop.f32.mrf.mxu0
        %v2094 = vadd.f32 %v2005, %v2093
        %2095 = vdwg.mxu0
        %2096 = vmatpush.msra.mxu0 0.0
        %2097 = vmatpush.msra.mxu0 0.0
        %2098 = vmatpush.msra.mxu0 0.0
        %2099 = vmatpush.msra.mxu0 0.0
        %2100 = vmatpush.msra.mxu0 0.0
        %2101 = vmatpush.msra.mxu0 0.0
        %2102 = vmatpush.msra.mxu0 0.0
        %2103 = vmatpush.msra.mxu0 0.0
        %v2104 = vand.u32 %v1008, 4294901760
        %v2105 = vsub.f32 %v1008, %v2104
        %2106 = vmatpush.msra.mxu0 %v2105
        %v2107 = vand.u32 %v1004, 4294901760
        %v2108 = vsub.f32 %v1004, %v2107
        %2109 = vmatpush.msra.mxu0 %v2108
        %v2110 = vand.u32 %v1000, 4294901760
        %v2111 = vsub.f32 %v1000, %v2110
        %2112 = vmatpush.msra.mxu0 %v2111
        %v2113 = vand.u32 %v996, 4294901760
        %v2114 = vsub.f32 %v996, %v2113
        %2115 = vmatpush.msra.mxu0 %v2114
        %v2116 = vand.u32 %v992, 4294901760
        %v2117 = vsub.f32 %v992, %v2116
        %2118 = vmatpush.msra.mxu0 %v2117
        %v2119 = vand.u32 %v988, 4294901760
        %v2120 = vsub.f32 %v988, %v2119
        %2121 = vmatpush.msra.mxu0 %v2120
        %v2122 = vand.u32 %v984, 4294901760
        %v2123 = vsub.f32 %v984, %v2122
        %2124 = vmatpush.msra.mxu0 %v2123
        %v2125 = vand.u32 %v980, 4294901760
        %v2126 = vsub.f32 %v980, %v2125
        %2127 = vmatpush.msra.mxu0 %v2126
        %v2128 = vand.u32 %v1895, 4294901760
        %v2129 = vsub.f32 %v1895, %v2128
        %2130 = vmatmul.f32.gmra.mxu0 %v2129
        %v2131 = vpop.f32.mrf.mxu0
        %v2132 = vadd.f32 %v2066, %v2131
        %v2133 = vand.u32 %v1898, 4294901760
        %v2134 = vsub.f32 %v1898, %v2133
        %2135 = vmatmul.f32.gmra.mxu0 %v2134
        %v2136 = vpop.f32.mrf.mxu0
        %v2137 = vadd.f32 %v2070, %v2136
        %v2138 = vand.u32 %v1901, 4294901760
        %v2139 = vsub.f32 %v1901, %v2138
        %2140 = vmatmul.f32.gmra.mxu0 %v2139
        %v2141 = vpop.f32.mrf.mxu0
        %v2142 = vadd.f32 %v2074, %v2141
        %v2143 = vand.u32 %v1904, 4294901760
        %v2144 = vsub.f32 %v1904, %v2143
        %2145 = vmatmul.f32.gmra.mxu0 %v2144
        %v2146 = vpop.f32.mrf.mxu0
        %v2147 = vadd.f32 %v2078, %v2146
        %v2148 = vand.u32 %v1907, 4294901760
        %v2149 = vsub.f32 %v1907, %v2148
        %2150 = vmatmul.f32.gmra.mxu0 %v2149
        %v2151 = vpop.f32.mrf.mxu0
        %v2152 = vadd.f32 %v2082, %v2151
        %v2153 = vand.u32 %v1910, 4294901760
        %v2154 = vsub.f32 %v1910, %v2153
        %2155 = vmatmul.f32.gmra.mxu0 %v2154
        %v2156 = vpop.f32.mrf.mxu0
        %v2157 = vadd.f32 %v2086, %v2156
        %v2158 = vand.u32 %v1913, 4294901760
        %v2159 = vsub.f32 %v1913, %v2158
        %2160 = vmatmul.f32.gmra.mxu0 %v2159
        %v2161 = vpop.f32.mrf.mxu0
        %v2162 = vadd.f32 %v2090, %v2161
        %v2163 = vand.u32 %v1916, 4294901760
        %v2164 = vsub.f32 %v1916, %v2163
        %2165 = vmatmul.f32.gmra.mxu0 %v2164
        %v2166 = vpop.f32.mrf.mxu0
        %v2167 = vadd.f32 %v2094, %v2166
        %2168 = vdwg.mxu0
        %2169 = vmatpush.msra.mxu0 0.0
        %2170 = vmatpush.msra.mxu0 0.0
        %2171 = vmatpush.msra.mxu0 0.0
        %2172 = vmatpush.msra.mxu0 0.0
        %2173 = vmatpush.msra.mxu0 0.0
        %2174 = vmatpush.msra.mxu0 0.0
        %2175 = vmatpush.msra.mxu0 0.0
        %2176 = vmatpush.msra.mxu0 0.0
        %v2177 = vand.u32 %v1008, 4294901760
        %2178 = vmatpush.msra.mxu0 %v2177
        %v2179 = vand.u32 %v1004, 4294901760
        %2180 = vmatpush.msra.mxu0 %v2179
        %v2181 = vand.u32 %v1000, 4294901760
        %2182 = vmatpush.msra.mxu0 %v2181
        %v2183 = vand.u32 %v996, 4294901760
        %2184 = vmatpush.msra.mxu0 %v2183
        %v2185 = vand.u32 %v992, 4294901760
        %2186 = vmatpush.msra.mxu0 %v2185
        %v2187 = vand.u32 %v988, 4294901760
        %2188 = vmatpush.msra.mxu0 %v2187
        %v2189 = vand.u32 %v984, 4294901760
        %2190 = vmatpush.msra.mxu0 %v2189
        %v2191 = vand.u32 %v980, 4294901760
        %2192 = vmatpush.msra.mxu0 %v2191
        %v2193 = vand.u32 %v1895, 4294901760
        %v2194 = vsub.f32 %v1895, %v2193
        %v2195 = vand.u32 %v2194, 4294901760
        %2196 = vmatmul.f32.gmra.mxu0 %v2195
        %v2197 = vpop.f32.mrf.mxu0
        %v2198 = vadd.f32 %v2132, %v2197
        %v2199 = vand.u32 %v1898, 4294901760
        %v2200 = vsub.f32 %v1898, %v2199
        %v2201 = vand.u32 %v2200, 4294901760
        %2202 = vmatmul.f32.gmra.mxu0 %v2201
        %v2203 = vpop.f32.mrf.mxu0
        %v2204 = vadd.f32 %v2137, %v2203
        %v2205 = vand.u32 %v1901, 4294901760
        %v2206 = vsub.f32 %v1901, %v2205
        %v2207 = vand.u32 %v2206, 4294901760
        %2208 = vmatmul.f32.gmra.mxu0 %v2207
        %v2209 = vpop.f32.mrf.mxu0
        %v2210 = vadd.f32 %v2142, %v2209
        %v2211 = vand.u32 %v1904, 4294901760
        %v2212 = vsub.f32 %v1904, %v2211
        %v2213 = vand.u32 %v2212, 4294901760
        %2214 = vmatmul.f32.gmra.mxu0 %v2213
        %v2215 = vpop.f32.mrf.mxu0
        %v2216 = vadd.f32 %v2147, %v2215
        %v2217 = vand.u32 %v1907, 4294901760
        %v2218 = vsub.f32 %v1907, %v2217
        %v2219 = vand.u32 %v2218, 4294901760
        %2220 = vmatmul.f32.gmra.mxu0 %v2219
        %v2221 = vpop.f32.mrf.mxu0
        %v2222 = vadd.f32 %v2152, %v2221
        %v2223 = vand.u32 %v1910, 4294901760
        %v2224 = vsub.f32 %v1910, %v2223
        %v2225 = vand.u32 %v2224, 4294901760
        %2226 = vmatmul.f32.gmra.mxu0 %v2225
        %v2227 = vpop.f32.mrf.mxu0
        %v2228 = vadd.f32 %v2157, %v2227
        %v2229 = vand.u32 %v1913, 4294901760
        %v2230 = vsub.f32 %v1913, %v2229
        %v2231 = vand.u32 %v2230, 4294901760
        %2232 = vmatmul.f32.gmra.mxu0 %v2231
        %v2233 = vpop.f32.mrf.mxu0
        %v2234 = vadd.f32 %v2162, %v2233
        %v2235 = vand.u32 %v1916, 4294901760
        %v2236 = vsub.f32 %v1916, %v2235
        %v2237 = vand.u32 %v2236, 4294901760
        %2238 = vmatmul.f32.gmra.mxu0 %v2237
        %v2239 = vpop.f32.mrf.mxu0
        %v2240 = vadd.f32 %v2167, %v2239
        %2241 = vdwg.mxu0
        %2242 = vmatpush.msra.mxu0 0.0
        %2243 = vmatpush.msra.mxu0 0.0
        %2244 = vmatpush.msra.mxu0 0.0
        %2245 = vmatpush.msra.mxu0 0.0
        %2246 = vmatpush.msra.mxu0 0.0
        %2247 = vmatpush.msra.mxu0 0.0
        %2248 = vmatpush.msra.mxu0 0.0
        %2249 = vmatpush.msra.mxu0 0.0
        %v2250 = vand.u32 %v1008, 4294901760
        %v2251 = vsub.f32 %v1008, %v2250
        %v2252 = vand.u32 %v2251, 4294901760
        %2253 = vmatpush.msra.mxu0 %v2252
        %v2254 = vand.u32 %v1004, 4294901760
        %v2255 = vsub.f32 %v1004, %v2254
        %v2256 = vand.u32 %v2255, 4294901760
        %2257 = vmatpush.msra.mxu0 %v2256
        %v2258 = vand.u32 %v1000, 4294901760
        %v2259 = vsub.f32 %v1000, %v2258
        %v2260 = vand.u32 %v2259, 4294901760
        %2261 = vmatpush.msra.mxu0 %v2260
        %v2262 = vand.u32 %v996, 4294901760
        %v2263 = vsub.f32 %v996, %v2262
        %v2264 = vand.u32 %v2263, 4294901760
        %2265 = vmatpush.msra.mxu0 %v2264
        %v2266 = vand.u32 %v992, 4294901760
        %v2267 = vsub.f32 %v992, %v2266
        %v2268 = vand.u32 %v2267, 4294901760
        %2269 = vmatpush.msra.mxu0 %v2268
        %v2270 = vand.u32 %v988, 4294901760
        %v2271 = vsub.f32 %v988, %v2270
        %v2272 = vand.u32 %v2271, 4294901760
        %2273 = vmatpush.msra.mxu0 %v2272
        %v2274 = vand.u32 %v984, 4294901760
        %v2275 = vsub.f32 %v984, %v2274
        %v2276 = vand.u32 %v2275, 4294901760
        %2277 = vmatpush.msra.mxu0 %v2276
        %v2278 = vand.u32 %v980, 4294901760
        %v2279 = vsub.f32 %v980, %v2278
        %v2280 = vand.u32 %v2279, 4294901760
        %2281 = vmatpush.msra.mxu0 %v2280
        %v2282 = vand.u32 %v1895, 4294901760
        %2283 = vmatmul.f32.gmra.mxu0 %v2282
        %v2284 = vpop.f32.mrf.mxu0
        %v2285 = vadd.f32 %v2198, %v2284
        %v2286 = vand.u32 %v1898, 4294901760
        %2287 = vmatmul.f32.gmra.mxu0 %v2286
        %v2288 = vpop.f32.mrf.mxu0
        %v2289 = vadd.f32 %v2204, %v2288
        %v2290 = vand.u32 %v1901, 4294901760
        %2291 = vmatmul.f32.gmra.mxu0 %v2290
        %v2292 = vpop.f32.mrf.mxu0
        %v2293 = vadd.f32 %v2210, %v2292
        %v2294 = vand.u32 %v1904, 4294901760
        %2295 = vmatmul.f32.gmra.mxu0 %v2294
        %v2296 = vpop.f32.mrf.mxu0
        %v2297 = vadd.f32 %v2216, %v2296
        %v2298 = vand.u32 %v1907, 4294901760
        %2299 = vmatmul.f32.gmra.mxu0 %v2298
        %v2300 = vpop.f32.mrf.mxu0
        %v2301 = vadd.f32 %v2222, %v2300
        %v2302 = vand.u32 %v1910, 4294901760
        %2303 = vmatmul.f32.gmra.mxu0 %v2302
        %v2304 = vpop.f32.mrf.mxu0
        %v2305 = vadd.f32 %v2228, %v2304
        %v2306 = vand.u32 %v1913, 4294901760
        %2307 = vmatmul.f32.gmra.mxu0 %v2306
        %v2308 = vpop.f32.mrf.mxu0
        %v2309 = vadd.f32 %v2234, %v2308
        %v2310 = vand.u32 %v1916, 4294901760
        %2311 = vmatmul.f32.gmra.mxu0 %v2310
        %v2312 = vpop.f32.mrf.mxu0
        %v2313 = vadd.f32 %v2240, %v2312
        %2314 = vdwg.mxu0
        %2315 = vmatpush.msra.mxu0 0.0
        %2316 = vmatpush.msra.mxu0 0.0
        %2317 = vmatpush.msra.mxu0 0.0
        %2318 = vmatpush.msra.mxu0 0.0
        %2319 = vmatpush.msra.mxu0 0.0
        %2320 = vmatpush.msra.mxu0 0.0
        %2321 = vmatpush.msra.mxu0 0.0
        %2322 = vmatpush.msra.mxu0 0.0
        %v2323 = vand.u32 %v1008, 4294901760
        %2324 = vmatpush.msra.mxu0 %v2323
        %v2325 = vand.u32 %v1004, 4294901760
        %2326 = vmatpush.msra.mxu0 %v2325
        %v2327 = vand.u32 %v1000, 4294901760
        %2328 = vmatpush.msra.mxu0 %v2327
        %v2329 = vand.u32 %v996, 4294901760
        %2330 = vmatpush.msra.mxu0 %v2329
        %v2331 = vand.u32 %v992, 4294901760
        %2332 = vmatpush.msra.mxu0 %v2331
        %v2333 = vand.u32 %v988, 4294901760
        %2334 = vmatpush.msra.mxu0 %v2333
        %v2335 = vand.u32 %v984, 4294901760
        %2336 = vmatpush.msra.mxu0 %v2335
        %v2337 = vand.u32 %v980, 4294901760
        %2338 = vmatpush.msra.mxu0 %v2337
        %v2339 = vand.u32 %v1895, 4294901760
        %2340 = vmatmul.f32.gmra.mxu0 %v2339
        %v2341 = vpop.f32.mrf.mxu0
        %v2342 = vadd.f32 %v2285, %v2341
        %v2343 = vand.u32 %v1898, 4294901760
        %2344 = vmatmul.f32.gmra.mxu0 %v2343
        %v2345 = vpop.f32.mrf.mxu0
        %v2346 = vadd.f32 %v2289, %v2345
        %v2347 = vand.u32 %v1901, 4294901760
        %2348 = vmatmul.f32.gmra.mxu0 %v2347
        %v2349 = vpop.f32.mrf.mxu0
        %v2350 = vadd.f32 %v2293, %v2349
        %v2351 = vand.u32 %v1904, 4294901760
        %2352 = vmatmul.f32.gmra.mxu0 %v2351
        %v2353 = vpop.f32.mrf.mxu0
        %v2354 = vadd.f32 %v2297, %v2353
        %v2355 = vand.u32 %v1907, 4294901760
        %2356 = vmatmul.f32.gmra.mxu0 %v2355
        %v2357 = vpop.f32.mrf.mxu0
        %v2358 = vadd.f32 %v2301, %v2357
        %v2359 = vand.u32 %v1910, 4294901760
        %2360 = vmatmul.f32.gmra.mxu0 %v2359
        %v2361 = vpop.f32.mrf.mxu0
        %v2362 = vadd.f32 %v2305, %v2361
        %v2363 = vand.u32 %v1913, 4294901760
        %2364 = vmatmul.f32.gmra.mxu0 %v2363
        %v2365 = vpop.f32.mrf.mxu0
        %v2366 = vadd.f32 %v2309, %v2365
        %v2367 = vand.u32 %v1916, 4294901760
        %2368 = vmatmul.f32.gmra.mxu0 %v2367
        %v2369 = vpop.f32.mrf.mxu0
        %v2370 = vadd.f32 %v2313, %v2369
        %2371 = vdwg.mxu0
        %2372 = vst.msk [vmem:[%s217] sm:$0xff] %vm230, %v2342
        %2373 = vst.msk [vmem:[%s217 + $0x8] sm:$0xff] %vm230, %v2346
        %2374 = vst.msk [vmem:[%s217 + $0x10] sm:$0xff] %vm230, %v2350
        %2375 = vst.msk [vmem:[%s217 + $0x18] sm:$0xff] %vm230, %v2354
        %2376 = vst.msk [vmem:[%s217 + $0x20] sm:$0xff] %vm230, %v2358
        %2377 = vst.msk [vmem:[%s217 + $0x28] sm:$0xff] %vm230, %v2362
        %2378 = vst.msk [vmem:[%s217 + $0x30] sm:$0xff] %vm230, %v2366
        %2379 = vst.msk [vmem:[%s217 + $0x38] sm:$0xff] %vm230, %v2370
        %s2380 = scalar_lea.vmem %s217, 64 [#allocation7]
        %2381 = vst.msk [vmem:[%s2380] sm:$0xff] %vm230, %v1864
        %2382 = vst.msk [vmem:[%s2380 + $0x8] sm:$0xff] %vm230, %v1868
        %2383 = vst.msk [vmem:[%s2380 + $0x10] sm:$0xff] %vm230, %v1872
        %2384 = vst.msk [vmem:[%s2380 + $0x18] sm:$0xff] %vm230, %v1876
        %2385 = vst.msk [vmem:[%s2380 + $0x20] sm:$0xff] %vm230, %v1880
        %2386 = vst.msk [vmem:[%s2380 + $0x28] sm:$0xff] %vm230, %v1884
        %2387 = vst.msk [vmem:[%s2380 + $0x30] sm:$0xff] %vm230, %v1888
        %2388 = vst.msk [vmem:[%s2380 + $0x38] sm:$0xff] %vm230, %v1892
        %2389 = vmatpush.msra.mxu0 0.0
        %2390 = vmatpush.msra.mxu0 0.0
        %2391 = vmatpush.msra.mxu0 0.0
        %2392 = vmatpush.msra.mxu0 0.0
        %2393 = vmatpush.msra.mxu0 0.0
        %2394 = vmatpush.msra.mxu0 0.0
        %2395 = vmatpush.msra.mxu0 0.0
        %2396 = vmatpush.msra.mxu0 0.0
        %v2397 = vand.u32 %v1387, 4294901760
        %2398 = vmatpush.msra.mxu0 %v2397
        %v2399 = vand.u32 %v1383, 4294901760
        %2400 = vmatpush.msra.mxu0 %v2399
        %v2401 = vand.u32 %v1379, 4294901760
        %2402 = vmatpush.msra.mxu0 %v2401
        %v2403 = vand.u32 %v1375, 4294901760
        %2404 = vmatpush.msra.mxu0 %v2403
        %v2405 = vand.u32 %v1371, 4294901760
        %2406 = vmatpush.msra.mxu0 %v2405
        %v2407 = vand.u32 %v1367, 4294901760
        %2408 = vmatpush.msra.mxu0 %v2407
        %v2409 = vand.u32 %v1363, 4294901760
        %2410 = vmatpush.msra.mxu0 %v2409
        %v2411 = vand.u32 %v1359, 4294901760
        %2412 = vmatpush.msra.mxu0 %v2411
        %v2413 = vand.u32 %v1895, 4294901760
        %v2414 = vsub.f32 %v1895, %v2413
        %v2415 = vand.u32 %v2414, 4294901760
        %v2416 = vsub.f32 %v2414, %v2415
        %v2417 = vand.u32 %v2416, 4294901760
        %2418 = vmatmul.f32.gmra.mxu0 %v2417
        %v2419 = vpop.f32.mrf.mxu0
        %v2420 = vadd.f32 0.0, %v2419
        %v2421 = vand.u32 %v1898, 4294901760
        %v2422 = vsub.f32 %v1898, %v2421
        %v2423 = vand.u32 %v2422, 4294901760
        %v2424 = vsub.f32 %v2422, %v2423
        %v2425 = vand.u32 %v2424, 4294901760
        %2426 = vmatmul.f32.gmra.mxu0 %v2425
        %v2427 = vpop.f32.mrf.mxu0
        %v2428 = vadd.f32 0.0, %v2427
        %v2429 = vand.u32 %v1901, 4294901760
        %v2430 = vsub.f32 %v1901, %v2429
        %v2431 = vand.u32 %v2430, 4294901760
        %v2432 = vsub.f32 %v2430, %v2431
        %v2433 = vand.u32 %v2432, 4294901760
        %2434 = vmatmul.f32.gmra.mxu0 %v2433
        %v2435 = vpop.f32.mrf.mxu0
        %v2436 = vadd.f32 0.0, %v2435
        %v2437 = vand.u32 %v1904, 4294901760
        %v2438 = vsub.f32 %v1904, %v2437
        %v2439 = vand.u32 %v2438, 4294901760
        %v2440 = vsub.f32 %v2438, %v2439
        %v2441 = vand.u32 %v2440, 4294901760
        %2442 = vmatmul.f32.gmra.mxu0 %v2441
        %v2443 = vpop.f32.mrf.mxu0
        %v2444 = vadd.f32 0.0, %v2443
        %v2445 = vand.u32 %v1907, 4294901760
        %v2446 = vsub.f32 %v1907, %v2445
        %v2447 = vand.u32 %v2446, 4294901760
        %v2448 = vsub.f32 %v2446, %v2447
        %v2449 = vand.u32 %v2448, 4294901760
        %2450 = vmatmul.f32.gmra.mxu0 %v2449
        %v2451 = vpop.f32.mrf.mxu0
        %v2452 = vadd.f32 0.0, %v2451
        %v2453 = vand.u32 %v1910, 4294901760
        %v2454 = vsub.f32 %v1910, %v2453
        %v2455 = vand.u32 %v2454, 4294901760
        %v2456 = vsub.f32 %v2454, %v2455
        %v2457 = vand.u32 %v2456, 4294901760
        %2458 = vmatmul.f32.gmra.mxu0 %v2457
        %v2459 = vpop.f32.mrf.mxu0
        %v2460 = vadd.f32 0.0, %v2459
        %v2461 = vand.u32 %v1913, 4294901760
        %v2462 = vsub.f32 %v1913, %v2461
        %v2463 = vand.u32 %v2462, 4294901760
        %v2464 = vsub.f32 %v2462, %v2463
        %v2465 = vand.u32 %v2464, 4294901760
        %2466 = vmatmul.f32.gmra.mxu0 %v2465
        %v2467 = vpop.f32.mrf.mxu0
        %v2468 = vadd.f32 0.0, %v2467
        %v2469 = vand.u32 %v1916, 4294901760
        %v2470 = vsub.f32 %v1916, %v2469
        %v2471 = vand.u32 %v2470, 4294901760
        %v2472 = vsub.f32 %v2470, %v2471
        %v2473 = vand.u32 %v2472, 4294901760
        %2474 = vmatmul.f32.gmra.mxu0 %v2473
        %v2475 = vpop.f32.mrf.mxu0
        %v2476 = vadd.f32 0.0, %v2475
        %2477 = vdwg.mxu0
        %2478 = vmatpush.msra.mxu0 0.0
        %2479 = vmatpush.msra.mxu0 0.0
        %2480 = vmatpush.msra.mxu0 0.0
        %2481 = vmatpush.msra.mxu0 0.0
        %2482 = vmatpush.msra.mxu0 0.0
        %2483 = vmatpush.msra.mxu0 0.0
        %2484 = vmatpush.msra.mxu0 0.0
        %2485 = vmatpush.msra.mxu0 0.0
        %v2486 = vand.u32 %v1387, 4294901760
        %v2487 = vsub.f32 %v1387, %v2486
        %v2488 = vand.u32 %v2487, 4294901760
        %v2489 = vsub.f32 %v2487, %v2488
        %v2490 = vand.u32 %v2489, 4294901760
        %2491 = vmatpush.msra.mxu0 %v2490
        %v2492 = vand.u32 %v1383, 4294901760
        %v2493 = vsub.f32 %v1383, %v2492
        %v2494 = vand.u32 %v2493, 4294901760
        %v2495 = vsub.f32 %v2493, %v2494
        %v2496 = vand.u32 %v2495, 4294901760
        %2497 = vmatpush.msra.mxu0 %v2496
        %v2498 = vand.u32 %v1379, 4294901760
        %v2499 = vsub.f32 %v1379, %v2498
        %v2500 = vand.u32 %v2499, 4294901760
        %v2501 = vsub.f32 %v2499, %v2500
        %v2502 = vand.u32 %v2501, 4294901760
        %2503 = vmatpush.msra.mxu0 %v2502
        %v2504 = vand.u32 %v1375, 4294901760
        %v2505 = vsub.f32 %v1375, %v2504
        %v2506 = vand.u32 %v2505, 4294901760
        %v2507 = vsub.f32 %v2505, %v2506
        %v2508 = vand.u32 %v2507, 4294901760
        %2509 = vmatpush.msra.mxu0 %v2508
        %v2510 = vand.u32 %v1371, 4294901760
        %v2511 = vsub.f32 %v1371, %v2510
        %v2512 = vand.u32 %v2511, 4294901760
        %v2513 = vsub.f32 %v2511, %v2512
        %v2514 = vand.u32 %v2513, 4294901760
        %2515 = vmatpush.msra.mxu0 %v2514
        %v2516 = vand.u32 %v1367, 4294901760
        %v2517 = vsub.f32 %v1367, %v2516
        %v2518 = vand.u32 %v2517, 4294901760
        %v2519 = vsub.f32 %v2517, %v2518
        %v2520 = vand.u32 %v2519, 4294901760
        %2521 = vmatpush.msra.mxu0 %v2520
        %v2522 = vand.u32 %v1363, 4294901760
        %v2523 = vsub.f32 %v1363, %v2522
        %v2524 = vand.u32 %v2523, 4294901760
        %v2525 = vsub.f32 %v2523, %v2524
        %v2526 = vand.u32 %v2525, 4294901760
        %2527 = vmatpush.msra.mxu0 %v2526
        %v2528 = vand.u32 %v1359, 4294901760
        %v2529 = vsub.f32 %v1359, %v2528
        %v2530 = vand.u32 %v2529, 4294901760
        %v2531 = vsub.f32 %v2529, %v2530
        %v2532 = vand.u32 %v2531, 4294901760
        %2533 = vmatpush.msra.mxu0 %v2532
        %v2534 = vand.u32 %v1895, 4294901760
        %2535 = vmatmul.f32.gmra.mxu0 %v2534
        %v2536 = vpop.f32.mrf.mxu0
        %v2537 = vadd.f32 %v2420, %v2536
        %v2538 = vand.u32 %v1898, 4294901760
        %2539 = vmatmul.f32.gmra.mxu0 %v2538
        %v2540 = vpop.f32.mrf.mxu0
        %v2541 = vadd.f32 %v2428, %v2540
        %v2542 = vand.u32 %v1901, 4294901760
        %2543 = vmatmul.f32.gmra.mxu0 %v2542
        %v2544 = vpop.f32.mrf.mxu0
        %v2545 = vadd.f32 %v2436, %v2544
        %v2546 = vand.u32 %v1904, 4294901760
        %2547 = vmatmul.f32.gmra.mxu0 %v2546
        %v2548 = vpop.f32.mrf.mxu0
        %v2549 = vadd.f32 %v2444, %v2548
        %v2550 = vand.u32 %v1907, 4294901760
        %2551 = vmatmul.f32.gmra.mxu0 %v2550
        %v2552 = vpop.f32.mrf.mxu0
        %v2553 = vadd.f32 %v2452, %v2552
        %v2554 = vand.u32 %v1910, 4294901760
        %2555 = vmatmul.f32.gmra.mxu0 %v2554
        %v2556 = vpop.f32.mrf.mxu0
        %v2557 = vadd.f32 %v2460, %v2556
        %v2558 = vand.u32 %v1913, 4294901760
        %2559 = vmatmul.f32.gmra.mxu0 %v2558
        %v2560 = vpop.f32.mrf.mxu0
        %v2561 = vadd.f32 %v2468, %v2560
        %v2562 = vand.u32 %v1916, 4294901760
        %2563 = vmatmul.f32.gmra.mxu0 %v2562
        %v2564 = vpop.f32.mrf.mxu0
        %v2565 = vadd.f32 %v2476, %v2564
        %2566 = vdwg.mxu0
        %2567 = vmatpush.msra.mxu0 0.0
        %2568 = vmatpush.msra.mxu0 0.0
        %2569 = vmatpush.msra.mxu0 0.0
        %2570 = vmatpush.msra.mxu0 0.0
        %2571 = vmatpush.msra.mxu0 0.0
        %2572 = vmatpush.msra.mxu0 0.0
        %2573 = vmatpush.msra.mxu0 0.0
        %2574 = vmatpush.msra.mxu0 0.0
        %v2575 = vand.u32 %v1387, 4294901760
        %v2576 = vsub.f32 %v1387, %v2575
        %2577 = vmatpush.msra.mxu0 %v2576
        %v2578 = vand.u32 %v1383, 4294901760
        %v2579 = vsub.f32 %v1383, %v2578
        %2580 = vmatpush.msra.mxu0 %v2579
        %v2581 = vand.u32 %v1379, 4294901760
        %v2582 = vsub.f32 %v1379, %v2581
        %2583 = vmatpush.msra.mxu0 %v2582
        %v2584 = vand.u32 %v1375, 4294901760
        %v2585 = vsub.f32 %v1375, %v2584
        %2586 = vmatpush.msra.mxu0 %v2585
        %v2587 = vand.u32 %v1371, 4294901760
        %v2588 = vsub.f32 %v1371, %v2587
        %2589 = vmatpush.msra.mxu0 %v2588
        %v2590 = vand.u32 %v1367, 4294901760
        %v2591 = vsub.f32 %v1367, %v2590
        %2592 = vmatpush.msra.mxu0 %v2591
        %v2593 = vand.u32 %v1363, 4294901760
        %v2594 = vsub.f32 %v1363, %v2593
        %2595 = vmatpush.msra.mxu0 %v2594
        %v2596 = vand.u32 %v1359, 4294901760
        %v2597 = vsub.f32 %v1359, %v2596
        %2598 = vmatpush.msra.mxu0 %v2597
        %v2599 = vand.u32 %v1895, 4294901760
        %v2600 = vsub.f32 %v1895, %v2599
        %2601 = vmatmul.f32.gmra.mxu0 %v2600
        %v2602 = vpop.f32.mrf.mxu0
        %v2603 = vadd.f32 %v2537, %v2602
        %v2604 = vand.u32 %v1898, 4294901760
        %v2605 = vsub.f32 %v1898, %v2604
        %2606 = vmatmul.f32.gmra.mxu0 %v2605
        %v2607 = vpop.f32.mrf.mxu0
        %v2608 = vadd.f32 %v2541, %v2607
        %v2609 = vand.u32 %v1901, 4294901760
        %v2610 = vsub.f32 %v1901, %v2609
        %2611 = vmatmul.f32.gmra.mxu0 %v2610
        %v2612 = vpop.f32.mrf.mxu0
        %v2613 = vadd.f32 %v2545, %v2612
        %v2614 = vand.u32 %v1904, 4294901760
        %v2615 = vsub.f32 %v1904, %v2614
        %2616 = vmatmul.f32.gmra.mxu0 %v2615
        %v2617 = vpop.f32.mrf.mxu0
        %v2618 = vadd.f32 %v2549, %v2617
        %v2619 = vand.u32 %v1907, 4294901760
        %v2620 = vsub.f32 %v1907, %v2619
        %2621 = vmatmul.f32.gmra.mxu0 %v2620
        %v2622 = vpop.f32.mrf.mxu0
        %v2623 = vadd.f32 %v2553, %v2622
        %v2624 = vand.u32 %v1910, 4294901760
        %v2625 = vsub.f32 %v1910, %v2624
        %2626 = vmatmul.f32.gmra.mxu0 %v2625
        %v2627 = vpop.f32.mrf.mxu0
        %v2628 = vadd.f32 %v2557, %v2627
        %v2629 = vand.u32 %v1913, 4294901760
        %v2630 = vsub.f32 %v1913, %v2629
        %2631 = vmatmul.f32.gmra.mxu0 %v2630
        %v2632 = vpop.f32.mrf.mxu0
        %v2633 = vadd.f32 %v2561, %v2632
        %v2634 = vand.u32 %v1916, 4294901760
        %v2635 = vsub.f32 %v1916, %v2634
        %2636 = vmatmul.f32.gmra.mxu0 %v2635
        %v2637 = vpop.f32.mrf.mxu0
        %v2638 = vadd.f32 %v2565, %v2637
        %2639 = vdwg.mxu0
        %2640 = vmatpush.msra.mxu0 0.0
        %2641 = vmatpush.msra.mxu0 0.0
        %2642 = vmatpush.msra.mxu0 0.0
        %2643 = vmatpush.msra.mxu0 0.0
        %2644 = vmatpush.msra.mxu0 0.0
        %2645 = vmatpush.msra.mxu0 0.0
        %2646 = vmatpush.msra.mxu0 0.0
        %2647 = vmatpush.msra.mxu0 0.0
        %v2648 = vand.u32 %v1387, 4294901760
        %2649 = vmatpush.msra.mxu0 %v2648
        %v2650 = vand.u32 %v1383, 4294901760
        %2651 = vmatpush.msra.mxu0 %v2650
        %v2652 = vand.u32 %v1379, 4294901760
        %2653 = vmatpush.msra.mxu0 %v2652
        %v2654 = vand.u32 %v1375, 4294901760
        %2655 = vmatpush.msra.mxu0 %v2654
        %v2656 = vand.u32 %v1371, 4294901760
        %2657 = vmatpush.msra.mxu0 %v2656
        %v2658 = vand.u32 %v1367, 4294901760
        %2659 = vmatpush.msra.mxu0 %v2658
        %v2660 = vand.u32 %v1363, 4294901760
        %2661 = vmatpush.msra.mxu0 %v2660
        %v2662 = vand.u32 %v1359, 4294901760
        %2663 = vmatpush.msra.mxu0 %v2662
        %v2664 = vand.u32 %v1895, 4294901760
        %v2665 = vsub.f32 %v1895, %v2664
        %v2666 = vand.u32 %v2665, 4294901760
        %2667 = vmatmul.f32.gmra.mxu0 %v2666
        %v2668 = vpop.f32.mrf.mxu0
        %v2669 = vadd.f32 %v2603, %v2668
        %v2670 = vand.u32 %v1898, 4294901760
        %v2671 = vsub.f32 %v1898, %v2670
        %v2672 = vand.u32 %v2671, 4294901760
        %2673 = vmatmul.f32.gmra.mxu0 %v2672
        %v2674 = vpop.f32.mrf.mxu0
        %v2675 = vadd.f32 %v2608, %v2674
        %v2676 = vand.u32 %v1901, 4294901760
        %v2677 = vsub.f32 %v1901, %v2676
        %v2678 = vand.u32 %v2677, 4294901760
        %2679 = vmatmul.f32.gmra.mxu0 %v2678
        %v2680 = vpop.f32.mrf.mxu0
        %v2681 = vadd.f32 %v2613, %v2680
        %v2682 = vand.u32 %v1904, 4294901760
        %v2683 = vsub.f32 %v1904, %v2682
        %v2684 = vand.u32 %v2683, 4294901760
        %2685 = vmatmul.f32.gmra.mxu0 %v2684
        %v2686 = vpop.f32.mrf.mxu0
        %v2687 = vadd.f32 %v2618, %v2686
        %v2688 = vand.u32 %v1907, 4294901760
        %v2689 = vsub.f32 %v1907, %v2688
        %v2690 = vand.u32 %v2689, 4294901760
        %2691 = vmatmul.f32.gmra.mxu0 %v2690
        %v2692 = vpop.f32.mrf.mxu0
        %v2693 = vadd.f32 %v2623, %v2692
        %v2694 = vand.u32 %v1910, 4294901760
        %v2695 = vsub.f32 %v1910, %v2694
        %v2696 = vand.u32 %v2695, 4294901760
        %2697 = vmatmul.f32.gmra.mxu0 %v2696
        %v2698 = vpop.f32.mrf.mxu0
        %v2699 = vadd.f32 %v2628, %v2698
        %v2700 = vand.u32 %v1913, 4294901760
        %v2701 = vsub.f32 %v1913, %v2700
        %v2702 = vand.u32 %v2701, 4294901760
        %2703 = vmatmul.f32.gmra.mxu0 %v2702
        %v2704 = vpop.f32.mrf.mxu0
        %v2705 = vadd.f32 %v2633, %v2704
        %v2706 = vand.u32 %v1916, 4294901760
        %v2707 = vsub.f32 %v1916, %v2706
        %v2708 = vand.u32 %v2707, 4294901760
        %2709 = vmatmul.f32.gmra.mxu0 %v2708
        %v2710 = vpop.f32.mrf.mxu0
        %v2711 = vadd.f32 %v2638, %v2710
        %2712 = vdwg.mxu0
        %2713 = vmatpush.msra.mxu0 0.0
        %2714 = vmatpush.msra.mxu0 0.0
        %2715 = vmatpush.msra.mxu0 0.0
        %2716 = vmatpush.msra.mxu0 0.0
        %2717 = vmatpush.msra.mxu0 0.0
        %2718 = vmatpush.msra.mxu0 0.0
        %2719 = vmatpush.msra.mxu0 0.0
        %2720 = vmatpush.msra.mxu0 0.0
        %v2721 = vand.u32 %v1387, 4294901760
        %v2722 = vsub.f32 %v1387, %v2721
        %v2723 = vand.u32 %v2722, 4294901760
        %2724 = vmatpush.msra.mxu0 %v2723
        %v2725 = vand.u32 %v1383, 4294901760
        %v2726 = vsub.f32 %v1383, %v2725
        %v2727 = vand.u32 %v2726, 4294901760
        %2728 = vmatpush.msra.mxu0 %v2727
        %v2729 = vand.u32 %v1379, 4294901760
        %v2730 = vsub.f32 %v1379, %v2729
        %v2731 = vand.u32 %v2730, 4294901760
        %2732 = vmatpush.msra.mxu0 %v2731
        %v2733 = vand.u32 %v1375, 4294901760
        %v2734 = vsub.f32 %v1375, %v2733
        %v2735 = vand.u32 %v2734, 4294901760
        %2736 = vmatpush.msra.mxu0 %v2735
        %v2737 = vand.u32 %v1371, 4294901760
        %v2738 = vsub.f32 %v1371, %v2737
        %v2739 = vand.u32 %v2738, 4294901760
        %2740 = vmatpush.msra.mxu0 %v2739
        %v2741 = vand.u32 %v1367, 4294901760
        %v2742 = vsub.f32 %v1367, %v2741
        %v2743 = vand.u32 %v2742, 4294901760
        %2744 = vmatpush.msra.mxu0 %v2743
        %v2745 = vand.u32 %v1363, 4294901760
        %v2746 = vsub.f32 %v1363, %v2745
        %v2747 = vand.u32 %v2746, 4294901760
        %2748 = vmatpush.msra.mxu0 %v2747
        %v2749 = vand.u32 %v1359, 4294901760
        %v2750 = vsub.f32 %v1359, %v2749
        %v2751 = vand.u32 %v2750, 4294901760
        %2752 = vmatpush.msra.mxu0 %v2751
        %v2753 = vand.u32 %v1895, 4294901760
        %2754 = vmatmul.f32.gmra.mxu0 %v2753
        %v2755 = vpop.f32.mrf.mxu0
        %v2756 = vadd.f32 %v2669, %v2755
        %v2757 = vand.u32 %v1898, 4294901760
        %2758 = vmatmul.f32.gmra.mxu0 %v2757
        %v2759 = vpop.f32.mrf.mxu0
        %v2760 = vadd.f32 %v2675, %v2759
        %v2761 = vand.u32 %v1901, 4294901760
        %2762 = vmatmul.f32.gmra.mxu0 %v2761
        %v2763 = vpop.f32.mrf.mxu0
        %v2764 = vadd.f32 %v2681, %v2763
        %v2765 = vand.u32 %v1904, 4294901760
        %2766 = vmatmul.f32.gmra.mxu0 %v2765
        %v2767 = vpop.f32.mrf.mxu0
        %v2768 = vadd.f32 %v2687, %v2767
        %v2769 = vand.u32 %v1907, 4294901760
        %2770 = vmatmul.f32.gmra.mxu0 %v2769
        %v2771 = vpop.f32.mrf.mxu0
        %v2772 = vadd.f32 %v2693, %v2771
        %v2773 = vand.u32 %v1910, 4294901760
        %2774 = vmatmul.f32.gmra.mxu0 %v2773
        %v2775 = vpop.f32.mrf.mxu0
        %v2776 = vadd.f32 %v2699, %v2775
        %v2777 = vand.u32 %v1913, 4294901760
        %2778 = vmatmul.f32.gmra.mxu0 %v2777
        %v2779 = vpop.f32.mrf.mxu0
        %v2780 = vadd.f32 %v2705, %v2779
        %v2781 = vand.u32 %v1916, 4294901760
        %2782 = vmatmul.f32.gmra.mxu0 %v2781
        %v2783 = vpop.f32.mrf.mxu0
        %v2784 = vadd.f32 %v2711, %v2783
        %2785 = vdwg.mxu0
        %2786 = vmatpush.msra.mxu0 0.0
        %2787 = vmatpush.msra.mxu0 0.0
        %2788 = vmatpush.msra.mxu0 0.0
        %2789 = vmatpush.msra.mxu0 0.0
        %2790 = vmatpush.msra.mxu0 0.0
        %2791 = vmatpush.msra.mxu0 0.0
        %2792 = vmatpush.msra.mxu0 0.0
        %2793 = vmatpush.msra.mxu0 0.0
        %v2794 = vand.u32 %v1387, 4294901760
        %2795 = vmatpush.msra.mxu0 %v2794
        %v2796 = vand.u32 %v1383, 4294901760
        %2797 = vmatpush.msra.mxu0 %v2796
        %v2798 = vand.u32 %v1379, 4294901760
        %2799 = vmatpush.msra.mxu0 %v2798
        %v2800 = vand.u32 %v1375, 4294901760
        %2801 = vmatpush.msra.mxu0 %v2800
        %v2802 = vand.u32 %v1371, 4294901760
        %2803 = vmatpush.msra.mxu0 %v2802
        %v2804 = vand.u32 %v1367, 4294901760
        %2805 = vmatpush.msra.mxu0 %v2804
        %v2806 = vand.u32 %v1363, 4294901760
        %2807 = vmatpush.msra.mxu0 %v2806
        %v2808 = vand.u32 %v1359, 4294901760
        %2809 = vmatpush.msra.mxu0 %v2808
        %v2810 = vand.u32 %v1895, 4294901760
        %2811 = vmatmul.f32.gmra.mxu0 %v2810
        %v2812 = vpop.f32.mrf.mxu0
        %v2813 = vadd.f32 %v2756, %v2812
        %v2814 = vand.u32 %v1898, 4294901760
        %2815 = vmatmul.f32.gmra.mxu0 %v2814
        %v2816 = vpop.f32.mrf.mxu0
        %v2817 = vadd.f32 %v2760, %v2816
        %v2818 = vand.u32 %v1901, 4294901760
        %2819 = vmatmul.f32.gmra.mxu0 %v2818
        %v2820 = vpop.f32.mrf.mxu0
        %v2821 = vadd.f32 %v2764, %v2820
        %v2822 = vand.u32 %v1904, 4294901760
        %2823 = vmatmul.f32.gmra.mxu0 %v2822
        %v2824 = vpop.f32.mrf.mxu0
        %v2825 = vadd.f32 %v2768, %v2824
        %v2826 = vand.u32 %v1907, 4294901760
        %2827 = vmatmul.f32.gmra.mxu0 %v2826
        %v2828 = vpop.f32.mrf.mxu0
        %v2829 = vadd.f32 %v2772, %v2828
        %v2830 = vand.u32 %v1910, 4294901760
        %2831 = vmatmul.f32.gmra.mxu0 %v2830
        %v2832 = vpop.f32.mrf.mxu0
        %v2833 = vadd.f32 %v2776, %v2832
        %v2834 = vand.u32 %v1913, 4294901760
        %2835 = vmatmul.f32.gmra.mxu0 %v2834
        %v2836 = vpop.f32.mrf.mxu0
        %v2837 = vadd.f32 %v2780, %v2836
        %v2838 = vand.u32 %v1916, 4294901760
        %2839 = vmatmul.f32.gmra.mxu0 %v2838
        %v2840 = vpop.f32.mrf.mxu0
        %v2841 = vadd.f32 %v2784, %v2840
        %2842 = vdwg.mxu0
        %s2843 = scalar_lea.vmem %s217, 128 [#allocation7]
        %2844 = vst.msk [vmem:[%s2843] sm:$0xff] %vm230, %v2813
        %2845 = vst.msk [vmem:[%s2843 + $0x8] sm:$0xff] %vm230, %v2817
        %2846 = vst.msk [vmem:[%s2843 + $0x10] sm:$0xff] %vm230, %v2821
        %2847 = vst.msk [vmem:[%s2843 + $0x18] sm:$0xff] %vm230, %v2825
        %2848 = vst.msk [vmem:[%s2843 + $0x20] sm:$0xff] %vm230, %v2829
        %2849 = vst.msk [vmem:[%s2843 + $0x28] sm:$0xff] %vm230, %v2833
        %2850 = vst.msk [vmem:[%s2843 + $0x30] sm:$0xff] %vm230, %v2837
        %2851 = vst.msk [vmem:[%s2843 + $0x38] sm:$0xff] %vm230, %v2841
        %v2853 = vsel %vm1415, %v1407, 0
        %v2856 = vsel %vm1415, %v1408, 0
        %v2859 = vsel %vm1415, %v1409, 0
        %v2862 = vsel %vm1415, %v1410, 0
        %v2865 = vsel %vm1415, %v1411, 0
        %v2868 = vsel %vm1415, %v1412, 0
        %v2871 = vsel %vm1415, %v1413, 0
        %v2874 = vsel %vm1415, %v1414, 0
        %2876 = vmatpush.msra.mxu0 0.0
        %2877 = vmatpush.msra.mxu0 0.0
        %2878 = vmatpush.msra.mxu0 0.0
        %2879 = vmatpush.msra.mxu0 0.0
        %2880 = vmatpush.msra.mxu0 0.0
        %2881 = vmatpush.msra.mxu0 0.0
        %2882 = vmatpush.msra.mxu0 0.0
        %2883 = vmatpush.msra.mxu0 0.0
        %v2884 = vand.u32 %v629, 4294901760
        %2885 = vmatpush.msra.mxu0 %v2884
        %v2886 = vand.u32 %v625, 4294901760
        %2887 = vmatpush.msra.mxu0 %v2886
        %v2888 = vand.u32 %v621, 4294901760
        %2889 = vmatpush.msra.mxu0 %v2888
        %v2890 = vand.u32 %v617, 4294901760
        %2891 = vmatpush.msra.mxu0 %v2890
        %v2892 = vand.u32 %v613, 4294901760
        %2893 = vmatpush.msra.mxu0 %v2892
        %v2894 = vand.u32 %v609, 4294901760
        %2895 = vmatpush.msra.mxu0 %v2894
        %v2896 = vand.u32 %v605, 4294901760
        %2897 = vmatpush.msra.mxu0 %v2896
        %v2898 = vand.u32 %v601, 4294901760
        %2899 = vmatpush.msra.mxu0 %v2898
        %v2900 = vand.u32 %v2853, 4294901760
        %v2901 = vsub.f32 %v2853, %v2900
        %v2902 = vand.u32 %v2901, 4294901760
        %v2903 = vsub.f32 %v2901, %v2902
        %v2904 = vand.u32 %v2903, 4294901760
        %2905 = vmatmul.f32.gmra.mxu0 %v2904
        %v2906 = vpop.f32.mrf.mxu0
        %v2907 = vadd.f32 0.0, %v2906
        %v2908 = vand.u32 %v2856, 4294901760
        %v2909 = vsub.f32 %v2856, %v2908
        %v2910 = vand.u32 %v2909, 4294901760
        %v2911 = vsub.f32 %v2909, %v2910
        %v2912 = vand.u32 %v2911, 4294901760
        %2913 = vmatmul.f32.gmra.mxu0 %v2912
        %v2914 = vpop.f32.mrf.mxu0
        %v2915 = vadd.f32 0.0, %v2914
        %v2916 = vand.u32 %v2859, 4294901760
        %v2917 = vsub.f32 %v2859, %v2916
        %v2918 = vand.u32 %v2917, 4294901760
        %v2919 = vsub.f32 %v2917, %v2918
        %v2920 = vand.u32 %v2919, 4294901760
        %2921 = vmatmul.f32.gmra.mxu0 %v2920
        %v2922 = vpop.f32.mrf.mxu0
        %v2923 = vadd.f32 0.0, %v2922
        %v2924 = vand.u32 %v2862, 4294901760
        %v2925 = vsub.f32 %v2862, %v2924
        %v2926 = vand.u32 %v2925, 4294901760
        %v2927 = vsub.f32 %v2925, %v2926
        %v2928 = vand.u32 %v2927, 4294901760
        %2929 = vmatmul.f32.gmra.mxu0 %v2928
        %v2930 = vpop.f32.mrf.mxu0
        %v2931 = vadd.f32 0.0, %v2930
        %v2932 = vand.u32 %v2865, 4294901760
        %v2933 = vsub.f32 %v2865, %v2932
        %v2934 = vand.u32 %v2933, 4294901760
        %v2935 = vsub.f32 %v2933, %v2934
        %v2936 = vand.u32 %v2935, 4294901760
        %2937 = vmatmul.f32.gmra.mxu0 %v2936
        %v2938 = vpop.f32.mrf.mxu0
        %v2939 = vadd.f32 0.0, %v2938
        %v2940 = vand.u32 %v2868, 4294901760
        %v2941 = vsub.f32 %v2868, %v2940
        %v2942 = vand.u32 %v2941, 4294901760
        %v2943 = vsub.f32 %v2941, %v2942
        %v2944 = vand.u32 %v2943, 4294901760
        %2945 = vmatmul.f32.gmra.mxu0 %v2944
        %v2946 = vpop.f32.mrf.mxu0
        %v2947 = vadd.f32 0.0, %v2946
        %v2948 = vand.u32 %v2871, 4294901760
        %v2949 = vsub.f32 %v2871, %v2948
        %v2950 = vand.u32 %v2949, 4294901760
        %v2951 = vsub.f32 %v2949, %v2950
        %v2952 = vand.u32 %v2951, 4294901760
        %2953 = vmatmul.f32.gmra.mxu0 %v2952
        %v2954 = vpop.f32.mrf.mxu0
        %v2955 = vadd.f32 0.0, %v2954
        %v2956 = vand.u32 %v2874, 4294901760
        %v2957 = vsub.f32 %v2874, %v2956
        %v2958 = vand.u32 %v2957, 4294901760
        %v2959 = vsub.f32 %v2957, %v2958
        %v2960 = vand.u32 %v2959, 4294901760
        %2961 = vmatmul.f32.gmra.mxu0 %v2960
        %v2962 = vpop.f32.mrf.mxu0
        %v2963 = vadd.f32 0.0, %v2962
        %2964 = vdwg.mxu0
        %2965 = vmatpush.msra.mxu0 0.0
        %2966 = vmatpush.msra.mxu0 0.0
        %2967 = vmatpush.msra.mxu0 0.0
        %2968 = vmatpush.msra.mxu0 0.0
        %2969 = vmatpush.msra.mxu0 0.0
        %2970 = vmatpush.msra.mxu0 0.0
        %2971 = vmatpush.msra.mxu0 0.0
        %2972 = vmatpush.msra.mxu0 0.0
        %v2973 = vand.u32 %v629, 4294901760
        %v2974 = vsub.f32 %v629, %v2973
        %v2975 = vand.u32 %v2974, 4294901760
        %v2976 = vsub.f32 %v2974, %v2975
        %v2977 = vand.u32 %v2976, 4294901760
        %2978 = vmatpush.msra.mxu0 %v2977
        %v2979 = vand.u32 %v625, 4294901760
        %v2980 = vsub.f32 %v625, %v2979
        %v2981 = vand.u32 %v2980, 4294901760
        %v2982 = vsub.f32 %v2980, %v2981
        %v2983 = vand.u32 %v2982, 4294901760
        %2984 = vmatpush.msra.mxu0 %v2983
        %v2985 = vand.u32 %v621, 4294901760
        %v2986 = vsub.f32 %v621, %v2985
        %v2987 = vand.u32 %v2986, 4294901760
        %v2988 = vsub.f32 %v2986, %v2987
        %v2989 = vand.u32 %v2988, 4294901760
        %2990 = vmatpush.msra.mxu0 %v2989
        %v2991 = vand.u32 %v617, 4294901760
        %v2992 = vsub.f32 %v617, %v2991
        %v2993 = vand.u32 %v2992, 4294901760
        %v2994 = vsub.f32 %v2992, %v2993
        %v2995 = vand.u32 %v2994, 4294901760
        %2996 = vmatpush.msra.mxu0 %v2995
        %v2997 = vand.u32 %v613, 4294901760
        %v2998 = vsub.f32 %v613, %v2997
        %v2999 = vand.u32 %v2998, 4294901760
        %v3000 = vsub.f32 %v2998, %v2999
        %v3001 = vand.u32 %v3000, 4294901760
        %3002 = vmatpush.msra.mxu0 %v3001
        %v3003 = vand.u32 %v609, 4294901760
        %v3004 = vsub.f32 %v609, %v3003
        %v3005 = vand.u32 %v3004, 4294901760
        %v3006 = vsub.f32 %v3004, %v3005
        %v3007 = vand.u32 %v3006, 4294901760
        %3008 = vmatpush.msra.mxu0 %v3007
        %v3009 = vand.u32 %v605, 4294901760
        %v3010 = vsub.f32 %v605, %v3009
        %v3011 = vand.u32 %v3010, 4294901760
        %v3012 = vsub.f32 %v3010, %v3011
        %v3013 = vand.u32 %v3012, 4294901760
        %3014 = vmatpush.msra.mxu0 %v3013
        %v3015 = vand.u32 %v601, 4294901760
        %v3016 = vsub.f32 %v601, %v3015
        %v3017 = vand.u32 %v3016, 4294901760
        %v3018 = vsub.f32 %v3016, %v3017
        %v3019 = vand.u32 %v3018, 4294901760
        %3020 = vmatpush.msra.mxu0 %v3019
        %v3021 = vand.u32 %v2853, 4294901760
        %3022 = vmatmul.f32.gmra.mxu0 %v3021
        %v3023 = vpop.f32.mrf.mxu0
        %v3024 = vadd.f32 %v2907, %v3023
        %v3025 = vand.u32 %v2856, 4294901760
        %3026 = vmatmul.f32.gmra.mxu0 %v3025
        %v3027 = vpop.f32.mrf.mxu0
        %v3028 = vadd.f32 %v2915, %v3027
        %v3029 = vand.u32 %v2859, 4294901760
        %3030 = vmatmul.f32.gmra.mxu0 %v3029
        %v3031 = vpop.f32.mrf.mxu0
        %v3032 = vadd.f32 %v2923, %v3031
        %v3033 = vand.u32 %v2862, 4294901760
        %3034 = vmatmul.f32.gmra.mxu0 %v3033
        %v3035 = vpop.f32.mrf.mxu0
        %v3036 = vadd.f32 %v2931, %v3035
        %v3037 = vand.u32 %v2865, 4294901760
        %3038 = vmatmul.f32.gmra.mxu0 %v3037
        %v3039 = vpop.f32.mrf.mxu0
        %v3040 = vadd.f32 %v2939, %v3039
        %v3041 = vand.u32 %v2868, 4294901760
        %3042 = vmatmul.f32.gmra.mxu0 %v3041
        %v3043 = vpop.f32.mrf.mxu0
        %v3044 = vadd.f32 %v2947, %v3043
        %v3045 = vand.u32 %v2871, 4294901760
        %3046 = vmatmul.f32.gmra.mxu0 %v3045
        %v3047 = vpop.f32.mrf.mxu0
        %v3048 = vadd.f32 %v2955, %v3047
        %v3049 = vand.u32 %v2874, 4294901760
        %3050 = vmatmul.f32.gmra.mxu0 %v3049
        %v3051 = vpop.f32.mrf.mxu0
        %v3052 = vadd.f32 %v2963, %v3051
        %3053 = vdwg.mxu0
        %3054 = vmatpush.msra.mxu0 0.0
        %3055 = vmatpush.msra.mxu0 0.0
        %3056 = vmatpush.msra.mxu0 0.0
        %3057 = vmatpush.msra.mxu0 0.0
        %3058 = vmatpush.msra.mxu0 0.0
        %3059 = vmatpush.msra.mxu0 0.0
        %3060 = vmatpush.msra.mxu0 0.0
        %3061 = vmatpush.msra.mxu0 0.0
        %v3062 = vand.u32 %v629, 4294901760
        %v3063 = vsub.f32 %v629, %v3062
        %3064 = vmatpush.msra.mxu0 %v3063
        %v3065 = vand.u32 %v625, 4294901760
        %v3066 = vsub.f32 %v625, %v3065
        %3067 = vmatpush.msra.mxu0 %v3066
        %v3068 = vand.u32 %v621, 4294901760
        %v3069 = vsub.f32 %v621, %v3068
        %3070 = vmatpush.msra.mxu0 %v3069
        %v3071 = vand.u32 %v617, 4294901760
        %v3072 = vsub.f32 %v617, %v3071
        %3073 = vmatpush.msra.mxu0 %v3072
        %v3074 = vand.u32 %v613, 4294901760
        %v3075 = vsub.f32 %v613, %v3074
        %3076 = vmatpush.msra.mxu0 %v3075
        %v3077 = vand.u32 %v609, 4294901760
        %v3078 = vsub.f32 %v609, %v3077
        %3079 = vmatpush.msra.mxu0 %v3078
        %v3080 = vand.u32 %v605, 4294901760
        %v3081 = vsub.f32 %v605, %v3080
        %3082 = vmatpush.msra.mxu0 %v3081
        %v3083 = vand.u32 %v601, 4294901760
        %v3084 = vsub.f32 %v601, %v3083
        %3085 = vmatpush.msra.mxu0 %v3084
        %v3086 = vand.u32 %v2853, 4294901760
        %v3087 = vsub.f32 %v2853, %v3086
        %3088 = vmatmul.f32.gmra.mxu0 %v3087
        %v3089 = vpop.f32.mrf.mxu0
        %v3090 = vadd.f32 %v3024, %v3089
        %v3091 = vand.u32 %v2856, 4294901760
        %v3092 = vsub.f32 %v2856, %v3091
        %3093 = vmatmul.f32.gmra.mxu0 %v3092
        %v3094 = vpop.f32.mrf.mxu0
        %v3095 = vadd.f32 %v3028, %v3094
        %v3096 = vand.u32 %v2859, 4294901760
        %v3097 = vsub.f32 %v2859, %v3096
        %3098 = vmatmul.f32.gmra.mxu0 %v3097
        %v3099 = vpop.f32.mrf.mxu0
        %v3100 = vadd.f32 %v3032, %v3099
        %v3101 = vand.u32 %v2862, 4294901760
        %v3102 = vsub.f32 %v2862, %v3101
        %3103 = vmatmul.f32.gmra.mxu0 %v3102
        %v3104 = vpop.f32.mrf.mxu0
        %v3105 = vadd.f32 %v3036, %v3104
        %v3106 = vand.u32 %v2865, 4294901760
        %v3107 = vsub.f32 %v2865, %v3106
        %3108 = vmatmul.f32.gmra.mxu0 %v3107
        %v3109 = vpop.f32.mrf.mxu0
        %v3110 = vadd.f32 %v3040, %v3109
        %v3111 = vand.u32 %v2868, 4294901760
        %v3112 = vsub.f32 %v2868, %v3111
        %3113 = vmatmul.f32.gmra.mxu0 %v3112
        %v3114 = vpop.f32.mrf.mxu0
        %v3115 = vadd.f32 %v3044, %v3114
        %v3116 = vand.u32 %v2871, 4294901760
        %v3117 = vsub.f32 %v2871, %v3116
        %3118 = vmatmul.f32.gmra.mxu0 %v3117
        %v3119 = vpop.f32.mrf.mxu0
        %v3120 = vadd.f32 %v3048, %v3119
        %v3121 = vand.u32 %v2874, 4294901760
        %v3122 = vsub.f32 %v2874, %v3121
        %3123 = vmatmul.f32.gmra.mxu0 %v3122
        %v3124 = vpop.f32.mrf.mxu0
        %v3125 = vadd.f32 %v3052, %v3124
        %3126 = vdwg.mxu0
        %3127 = vmatpush.msra.mxu0 0.0
        %3128 = vmatpush.msra.mxu0 0.0
        %3129 = vmatpush.msra.mxu0 0.0
        %3130 = vmatpush.msra.mxu0 0.0
        %3131 = vmatpush.msra.mxu0 0.0
        %3132 = vmatpush.msra.mxu0 0.0
        %3133 = vmatpush.msra.mxu0 0.0
        %3134 = vmatpush.msra.mxu0 0.0
        %v3135 = vand.u32 %v629, 4294901760
        %3136 = vmatpush.msra.mxu0 %v3135
        %v3137 = vand.u32 %v625, 4294901760
        %3138 = vmatpush.msra.mxu0 %v3137
        %v3139 = vand.u32 %v621, 4294901760
        %3140 = vmatpush.msra.mxu0 %v3139
        %v3141 = vand.u32 %v617, 4294901760
        %3142 = vmatpush.msra.mxu0 %v3141
        %v3143 = vand.u32 %v613, 4294901760
        %3144 = vmatpush.msra.mxu0 %v3143
        %v3145 = vand.u32 %v609, 4294901760
        %3146 = vmatpush.msra.mxu0 %v3145
        %v3147 = vand.u32 %v605, 4294901760
        %3148 = vmatpush.msra.mxu0 %v3147
        %v3149 = vand.u32 %v601, 4294901760
        %3150 = vmatpush.msra.mxu0 %v3149
        %v3151 = vand.u32 %v2853, 4294901760
        %v3152 = vsub.f32 %v2853, %v3151
        %v3153 = vand.u32 %v3152, 4294901760
        %3154 = vmatmul.f32.gmra.mxu0 %v3153
        %v3155 = vpop.f32.mrf.mxu0
        %v3156 = vadd.f32 %v3090, %v3155
        %v3157 = vand.u32 %v2856, 4294901760
        %v3158 = vsub.f32 %v2856, %v3157
        %v3159 = vand.u32 %v3158, 4294901760
        %3160 = vmatmul.f32.gmra.mxu0 %v3159
        %v3161 = vpop.f32.mrf.mxu0
        %v3162 = vadd.f32 %v3095, %v3161
        %v3163 = vand.u32 %v2859, 4294901760
        %v3164 = vsub.f32 %v2859, %v3163
        %v3165 = vand.u32 %v3164, 4294901760
        %3166 = vmatmul.f32.gmra.mxu0 %v3165
        %v3167 = vpop.f32.mrf.mxu0
        %v3168 = vadd.f32 %v3100, %v3167
        %v3169 = vand.u32 %v2862, 4294901760
        %v3170 = vsub.f32 %v2862, %v3169
        %v3171 = vand.u32 %v3170, 4294901760
        %3172 = vmatmul.f32.gmra.mxu0 %v3171
        %v3173 = vpop.f32.mrf.mxu0
        %v3174 = vadd.f32 %v3105, %v3173
        %v3175 = vand.u32 %v2865, 4294901760
        %v3176 = vsub.f32 %v2865, %v3175
        %v3177 = vand.u32 %v3176, 4294901760
        %3178 = vmatmul.f32.gmra.mxu0 %v3177
        %v3179 = vpop.f32.mrf.mxu0
        %v3180 = vadd.f32 %v3110, %v3179
        %v3181 = vand.u32 %v2868, 4294901760
        %v3182 = vsub.f32 %v2868, %v3181
        %v3183 = vand.u32 %v3182, 4294901760
        %3184 = vmatmul.f32.gmra.mxu0 %v3183
        %v3185 = vpop.f32.mrf.mxu0
        %v3186 = vadd.f32 %v3115, %v3185
        %v3187 = vand.u32 %v2871, 4294901760
        %v3188 = vsub.f32 %v2871, %v3187
        %v3189 = vand.u32 %v3188, 4294901760
        %3190 = vmatmul.f32.gmra.mxu0 %v3189
        %v3191 = vpop.f32.mrf.mxu0
        %v3192 = vadd.f32 %v3120, %v3191
        %v3193 = vand.u32 %v2874, 4294901760
        %v3194 = vsub.f32 %v2874, %v3193
        %v3195 = vand.u32 %v3194, 4294901760
        %3196 = vmatmul.f32.gmra.mxu0 %v3195
        %v3197 = vpop.f32.mrf.mxu0
        %v3198 = vadd.f32 %v3125, %v3197
        %3199 = vdwg.mxu0
        %3200 = vmatpush.msra.mxu0 0.0
        %3201 = vmatpush.msra.mxu0 0.0
        %3202 = vmatpush.msra.mxu0 0.0
        %3203 = vmatpush.msra.mxu0 0.0
        %3204 = vmatpush.msra.mxu0 0.0
        %3205 = vmatpush.msra.mxu0 0.0
        %3206 = vmatpush.msra.mxu0 0.0
        %3207 = vmatpush.msra.mxu0 0.0
        %v3208 = vand.u32 %v629, 4294901760
        %v3209 = vsub.f32 %v629, %v3208
        %v3210 = vand.u32 %v3209, 4294901760
        %3211 = vmatpush.msra.mxu0 %v3210
        %v3212 = vand.u32 %v625, 4294901760
        %v3213 = vsub.f32 %v625, %v3212
        %v3214 = vand.u32 %v3213, 4294901760
        %3215 = vmatpush.msra.mxu0 %v3214
        %v3216 = vand.u32 %v621, 4294901760
        %v3217 = vsub.f32 %v621, %v3216
        %v3218 = vand.u32 %v3217, 4294901760
        %3219 = vmatpush.msra.mxu0 %v3218
        %v3220 = vand.u32 %v617, 4294901760
        %v3221 = vsub.f32 %v617, %v3220
        %v3222 = vand.u32 %v3221, 4294901760
        %3223 = vmatpush.msra.mxu0 %v3222
        %v3224 = vand.u32 %v613, 4294901760
        %v3225 = vsub.f32 %v613, %v3224
        %v3226 = vand.u32 %v3225, 4294901760
        %3227 = vmatpush.msra.mxu0 %v3226
        %v3228 = vand.u32 %v609, 4294901760
        %v3229 = vsub.f32 %v609, %v3228
        %v3230 = vand.u32 %v3229, 4294901760
        %3231 = vmatpush.msra.mxu0 %v3230
        %v3232 = vand.u32 %v605, 4294901760
        %v3233 = vsub.f32 %v605, %v3232
        %v3234 = vand.u32 %v3233, 4294901760
        %3235 = vmatpush.msra.mxu0 %v3234
        %v3236 = vand.u32 %v601, 4294901760
        %v3237 = vsub.f32 %v601, %v3236
        %v3238 = vand.u32 %v3237, 4294901760
        %3239 = vmatpush.msra.mxu0 %v3238
        %v3240 = vand.u32 %v2853, 4294901760
        %3241 = vmatmul.f32.gmra.mxu0 %v3240
        %v3242 = vpop.f32.mrf.mxu0
        %v3243 = vadd.f32 %v3156, %v3242
        %v3244 = vand.u32 %v2856, 4294901760
        %3245 = vmatmul.f32.gmra.mxu0 %v3244
        %v3246 = vpop.f32.mrf.mxu0
        %v3247 = vadd.f32 %v3162, %v3246
        %v3248 = vand.u32 %v2859, 4294901760
        %3249 = vmatmul.f32.gmra.mxu0 %v3248
        %v3250 = vpop.f32.mrf.mxu0
        %v3251 = vadd.f32 %v3168, %v3250
        %v3252 = vand.u32 %v2862, 4294901760
        %3253 = vmatmul.f32.gmra.mxu0 %v3252
        %v3254 = vpop.f32.mrf.mxu0
        %v3255 = vadd.f32 %v3174, %v3254
        %v3256 = vand.u32 %v2865, 4294901760
        %3257 = vmatmul.f32.gmra.mxu0 %v3256
        %v3258 = vpop.f32.mrf.mxu0
        %v3259 = vadd.f32 %v3180, %v3258
        %v3260 = vand.u32 %v2868, 4294901760
        %3261 = vmatmul.f32.gmra.mxu0 %v3260
        %v3262 = vpop.f32.mrf.mxu0
        %v3263 = vadd.f32 %v3186, %v3262
        %v3264 = vand.u32 %v2871, 4294901760
        %3265 = vmatmul.f32.gmra.mxu0 %v3264
        %v3266 = vpop.f32.mrf.mxu0
        %v3267 = vadd.f32 %v3192, %v3266
        %v3268 = vand.u32 %v2874, 4294901760
        %3269 = vmatmul.f32.gmra.mxu0 %v3268
        %v3270 = vpop.f32.mrf.mxu0
        %v3271 = vadd.f32 %v3198, %v3270
        %3272 = vdwg.mxu0
        %3273 = vmatpush.msra.mxu0 0.0
        %3274 = vmatpush.msra.mxu0 0.0
        %3275 = vmatpush.msra.mxu0 0.0
        %3276 = vmatpush.msra.mxu0 0.0
        %3277 = vmatpush.msra.mxu0 0.0
        %3278 = vmatpush.msra.mxu0 0.0
        %3279 = vmatpush.msra.mxu0 0.0
        %3280 = vmatpush.msra.mxu0 0.0
        %v3281 = vand.u32 %v629, 4294901760
        %3282 = vmatpush.msra.mxu0 %v3281
        %v3283 = vand.u32 %v625, 4294901760
        %3284 = vmatpush.msra.mxu0 %v3283
        %v3285 = vand.u32 %v621, 4294901760
        %3286 = vmatpush.msra.mxu0 %v3285
        %v3287 = vand.u32 %v617, 4294901760
        %3288 = vmatpush.msra.mxu0 %v3287
        %v3289 = vand.u32 %v613, 4294901760
        %3290 = vmatpush.msra.mxu0 %v3289
        %v3291 = vand.u32 %v609, 4294901760
        %3292 = vmatpush.msra.mxu0 %v3291
        %v3293 = vand.u32 %v605, 4294901760
        %3294 = vmatpush.msra.mxu0 %v3293
        %v3295 = vand.u32 %v601, 4294901760
        %3296 = vmatpush.msra.mxu0 %v3295
        %v3297 = vand.u32 %v2853, 4294901760
        %3298 = vmatmul.f32.gmra.mxu0 %v3297
        %v3299 = vpop.f32.mrf.mxu0
        %v3300 = vadd.f32 %v3243, %v3299
        %v3301 = vand.u32 %v2856, 4294901760
        %3302 = vmatmul.f32.gmra.mxu0 %v3301
        %v3303 = vpop.f32.mrf.mxu0
        %v3304 = vadd.f32 %v3247, %v3303
        %v3305 = vand.u32 %v2859, 4294901760
        %3306 = vmatmul.f32.gmra.mxu0 %v3305
        %v3307 = vpop.f32.mrf.mxu0
        %v3308 = vadd.f32 %v3251, %v3307
        %v3309 = vand.u32 %v2862, 4294901760
        %3310 = vmatmul.f32.gmra.mxu0 %v3309
        %v3311 = vpop.f32.mrf.mxu0
        %v3312 = vadd.f32 %v3255, %v3311
        %v3313 = vand.u32 %v2865, 4294901760
        %3314 = vmatmul.f32.gmra.mxu0 %v3313
        %v3315 = vpop.f32.mrf.mxu0
        %v3316 = vadd.f32 %v3259, %v3315
        %v3317 = vand.u32 %v2868, 4294901760
        %3318 = vmatmul.f32.gmra.mxu0 %v3317
        %v3319 = vpop.f32.mrf.mxu0
        %v3320 = vadd.f32 %v3263, %v3319
        %v3321 = vand.u32 %v2871, 4294901760
        %3322 = vmatmul.f32.gmra.mxu0 %v3321
        %v3323 = vpop.f32.mrf.mxu0
        %v3324 = vadd.f32 %v3267, %v3323
        %v3325 = vand.u32 %v2874, 4294901760
        %3326 = vmatmul.f32.gmra.mxu0 %v3325
        %v3327 = vpop.f32.mrf.mxu0
        %v3328 = vadd.f32 %v3271, %v3327
        %3329 = vdwg.mxu0
        %s3330 = scalar_lea.vmem %s217, 192 [#allocation7]
        %3331 = vst.msk [vmem:[%s3330] sm:$0xff] %vm230, %v3300
        %3332 = vst.msk [vmem:[%s3330 + $0x8] sm:$0xff] %vm230, %v3304
        %3333 = vst.msk [vmem:[%s3330 + $0x10] sm:$0xff] %vm230, %v3308
        %3334 = vst.msk [vmem:[%s3330 + $0x18] sm:$0xff] %vm230, %v3312
        %3335 = vst.msk [vmem:[%s3330 + $0x20] sm:$0xff] %vm230, %v3316
        %3336 = vst.msk [vmem:[%s3330 + $0x28] sm:$0xff] %vm230, %v3320
        %3337 = vst.msk [vmem:[%s3330 + $0x30] sm:$0xff] %vm230, %v3324
        %3338 = vst.msk [vmem:[%s3330 + $0x38] sm:$0xff] %vm230, %v3328
        %v3339 = vld [vmem:[%s631] sm:$0xff]
        %v3340 = vld [vmem:[%s631 + $0x8] sm:$0xff]
        %v3342 = vsel %vm230, %v1864, 0
        %v3345 = vsel %vm230, %v1868, 0
        %v3348 = vsel %vm230, %v1872, 0
        %v3351 = vsel %vm230, %v1876, 0
        %v3354 = vsel %vm230, %v1880, 0
        %v3357 = vsel %vm230, %v1884, 0
        %v3360 = vsel %vm230, %v1888, 0
        %v3363 = vsel %vm230, %v1892, 0
        %3365 = vmatpush.msra.mxu0 0.0
        %3366 = vmatpush.msra.mxu0 0.0
        %3367 = vmatpush.msra.mxu0 0.0
        %3368 = vmatpush.msra.mxu0 0.0
        %3369 = vmatpush.msra.mxu0 0.0
        %3370 = vmatpush.msra.mxu0 0.0
        %3371 = vmatpush.msra.mxu0 0.0
        %3372 = vmatpush.msra.mxu0 0.0
        %3373 = vmatpush.msra.mxu0 0.0
        %3374 = vmatpush.msra.mxu0 0.0
        %3375 = vmatpush.msra.mxu0 0.0
        %3376 = vmatpush.msra.mxu0 0.0
        %3377 = vmatpush.msra.mxu0 0.0
        %3378 = vmatpush.msra.mxu0 0.0
        %v3379 = vand.u32 %v3340, 4294901760
        %3380 = vmatpush.msra.mxu0 %v3379
        %v3381 = vand.u32 %v3339, 4294901760
        %3382 = vmatpush.msra.mxu0 %v3381
        %v3383 = vand.u32 %v3342, 4294901760
        %v3384 = vsub.f32 %v3342, %v3383
        %v3385 = vand.u32 %v3384, 4294901760
        %v3386 = vsub.f32 %v3384, %v3385
        %v3387 = vand.u32 %v3386, 4294901760
        %3388 = vmatmul.f32.gmra.mxu0 %v3387
        %v3389 = vpop.f32.mrf.mxu0
        %v3390 = vadd.f32 0.0, %v3389
        %v3391 = vand.u32 %v3345, 4294901760
        %v3392 = vsub.f32 %v3345, %v3391
        %v3393 = vand.u32 %v3392, 4294901760
        %v3394 = vsub.f32 %v3392, %v3393
        %v3395 = vand.u32 %v3394, 4294901760
        %3396 = vmatmul.f32.gmra.mxu0 %v3395
        %v3397 = vpop.f32.mrf.mxu0
        %v3398 = vadd.f32 0.0, %v3397
        %v3399 = vand.u32 %v3348, 4294901760
        %v3400 = vsub.f32 %v3348, %v3399
        %v3401 = vand.u32 %v3400, 4294901760
        %v3402 = vsub.f32 %v3400, %v3401
        %v3403 = vand.u32 %v3402, 4294901760
        %3404 = vmatmul.f32.gmra.mxu0 %v3403
        %v3405 = vpop.f32.mrf.mxu0
        %v3406 = vadd.f32 0.0, %v3405
        %v3407 = vand.u32 %v3351, 4294901760
        %v3408 = vsub.f32 %v3351, %v3407
        %v3409 = vand.u32 %v3408, 4294901760
        %v3410 = vsub.f32 %v3408, %v3409
        %v3411 = vand.u32 %v3410, 4294901760
        %3412 = vmatmul.f32.gmra.mxu0 %v3411
        %v3413 = vpop.f32.mrf.mxu0
        %v3414 = vadd.f32 0.0, %v3413
        %v3415 = vand.u32 %v3354, 4294901760
        %v3416 = vsub.f32 %v3354, %v3415
        %v3417 = vand.u32 %v3416, 4294901760
        %v3418 = vsub.f32 %v3416, %v3417
        %v3419 = vand.u32 %v3418, 4294901760
        %3420 = vmatmul.f32.gmra.mxu0 %v3419
        %v3421 = vpop.f32.mrf.mxu0
        %v3422 = vadd.f32 0.0, %v3421
        %v3423 = vand.u32 %v3357, 4294901760
        %v3424 = vsub.f32 %v3357, %v3423
        %v3425 = vand.u32 %v3424, 4294901760
        %v3426 = vsub.f32 %v3424, %v3425
        %v3427 = vand.u32 %v3426, 4294901760
        %3428 = vmatmul.f32.gmra.mxu0 %v3427
        %v3429 = vpop.f32.mrf.mxu0
        %v3430 = vadd.f32 0.0, %v3429
        %v3431 = vand.u32 %v3360, 4294901760
        %v3432 = vsub.f32 %v3360, %v3431
        %v3433 = vand.u32 %v3432, 4294901760
        %v3434 = vsub.f32 %v3432, %v3433
        %v3435 = vand.u32 %v3434, 4294901760
        %3436 = vmatmul.f32.gmra.mxu0 %v3435
        %v3437 = vpop.f32.mrf.mxu0
        %v3438 = vadd.f32 0.0, %v3437
        %v3439 = vand.u32 %v3363, 4294901760
        %v3440 = vsub.f32 %v3363, %v3439
        %v3441 = vand.u32 %v3440, 4294901760
        %v3442 = vsub.f32 %v3440, %v3441
        %v3443 = vand.u32 %v3442, 4294901760
        %3444 = vmatmul.f32.gmra.mxu0 %v3443
        %v3445 = vpop.f32.mrf.mxu0
        %v3446 = vadd.f32 0.0, %v3445
        %3447 = vdwg.mxu0
        %3448 = vmatpush.msra.mxu0 0.0
        %3449 = vmatpush.msra.mxu0 0.0
        %3450 = vmatpush.msra.mxu0 0.0
        %3451 = vmatpush.msra.mxu0 0.0
        %3452 = vmatpush.msra.mxu0 0.0
        %3453 = vmatpush.msra.mxu0 0.0
        %3454 = vmatpush.msra.mxu0 0.0
        %3455 = vmatpush.msra.mxu0 0.0
        %3456 = vmatpush.msra.mxu0 0.0
        %3457 = vmatpush.msra.mxu0 0.0
        %3458 = vmatpush.msra.mxu0 0.0
        %3459 = vmatpush.msra.mxu0 0.0
        %3460 = vmatpush.msra.mxu0 0.0
        %3461 = vmatpush.msra.mxu0 0.0
        %v3462 = vand.u32 %v3340, 4294901760
        %v3463 = vsub.f32 %v3340, %v3462
        %v3464 = vand.u32 %v3463, 4294901760
        %v3465 = vsub.f32 %v3463, %v3464
        %v3466 = vand.u32 %v3465, 4294901760
        %3467 = vmatpush.msra.mxu0 %v3466
        %v3468 = vand.u32 %v3339, 4294901760
        %v3469 = vsub.f32 %v3339, %v3468
        %v3470 = vand.u32 %v3469, 4294901760
        %v3471 = vsub.f32 %v3469, %v3470
        %v3472 = vand.u32 %v3471, 4294901760
        %3473 = vmatpush.msra.mxu0 %v3472
        %v3474 = vand.u32 %v3342, 4294901760
        %3475 = vmatmul.f32.gmra.mxu0 %v3474
        %v3476 = vpop.f32.mrf.mxu0
        %v3477 = vadd.f32 %v3390, %v3476
        %v3478 = vand.u32 %v3345, 4294901760
        %3479 = vmatmul.f32.gmra.mxu0 %v3478
        %v3480 = vpop.f32.mrf.mxu0
        %v3481 = vadd.f32 %v3398, %v3480
        %v3482 = vand.u32 %v3348, 4294901760
        %3483 = vmatmul.f32.gmra.mxu0 %v3482
        %v3484 = vpop.f32.mrf.mxu0
        %v3485 = vadd.f32 %v3406, %v3484
        %v3486 = vand.u32 %v3351, 4294901760
        %3487 = vmatmul.f32.gmra.mxu0 %v3486
        %v3488 = vpop.f32.mrf.mxu0
        %v3489 = vadd.f32 %v3414, %v3488
        %v3490 = vand.u32 %v3354, 4294901760
        %3491 = vmatmul.f32.gmra.mxu0 %v3490
        %v3492 = vpop.f32.mrf.mxu0
        %v3493 = vadd.f32 %v3422, %v3492
        %v3494 = vand.u32 %v3357, 4294901760
        %3495 = vmatmul.f32.gmra.mxu0 %v3494
        %v3496 = vpop.f32.mrf.mxu0
        %v3497 = vadd.f32 %v3430, %v3496
        %v3498 = vand.u32 %v3360, 4294901760
        %3499 = vmatmul.f32.gmra.mxu0 %v3498
        %v3500 = vpop.f32.mrf.mxu0
        %v3501 = vadd.f32 %v3438, %v3500
        %v3502 = vand.u32 %v3363, 4294901760
        %3503 = vmatmul.f32.gmra.mxu0 %v3502
        %v3504 = vpop.f32.mrf.mxu0
        %v3505 = vadd.f32 %v3446, %v3504
        %3506 = vdwg.mxu0
        %3507 = vmatpush.msra.mxu0 0.0
        %3508 = vmatpush.msra.mxu0 0.0
        %3509 = vmatpush.msra.mxu0 0.0
        %3510 = vmatpush.msra.mxu0 0.0
        %3511 = vmatpush.msra.mxu0 0.0
        %3512 = vmatpush.msra.mxu0 0.0
        %3513 = vmatpush.msra.mxu0 0.0
        %3514 = vmatpush.msra.mxu0 0.0
        %3515 = vmatpush.msra.mxu0 0.0
        %3516 = vmatpush.msra.mxu0 0.0
        %3517 = vmatpush.msra.mxu0 0.0
        %3518 = vmatpush.msra.mxu0 0.0
        %3519 = vmatpush.msra.mxu0 0.0
        %3520 = vmatpush.msra.mxu0 0.0
        %v3521 = vand.u32 %v3340, 4294901760
        %v3522 = vsub.f32 %v3340, %v3521
        %3523 = vmatpush.msra.mxu0 %v3522
        %v3524 = vand.u32 %v3339, 4294901760
        %v3525 = vsub.f32 %v3339, %v3524
        %3526 = vmatpush.msra.mxu0 %v3525
        %v3527 = vand.u32 %v3342, 4294901760
        %v3528 = vsub.f32 %v3342, %v3527
        %3529 = vmatmul.f32.gmra.mxu0 %v3528
        %v3530 = vpop.f32.mrf.mxu0
        %v3531 = vadd.f32 %v3477, %v3530
        %v3532 = vand.u32 %v3345, 4294901760
        %v3533 = vsub.f32 %v3345, %v3532
        %3534 = vmatmul.f32.gmra.mxu0 %v3533
        %v3535 = vpop.f32.mrf.mxu0
        %v3536 = vadd.f32 %v3481, %v3535
        %v3537 = vand.u32 %v3348, 4294901760
        %v3538 = vsub.f32 %v3348, %v3537
        %3539 = vmatmul.f32.gmra.mxu0 %v3538
        %v3540 = vpop.f32.mrf.mxu0
        %v3541 = vadd.f32 %v3485, %v3540
        %v3542 = vand.u32 %v3351, 4294901760
        %v3543 = vsub.f32 %v3351, %v3542
        %3544 = vmatmul.f32.gmra.mxu0 %v3543
        %v3545 = vpop.f32.mrf.mxu0
        %v3546 = vadd.f32 %v3489, %v3545
        %v3547 = vand.u32 %v3354, 4294901760
        %v3548 = vsub.f32 %v3354, %v3547
        %3549 = vmatmul.f32.gmra.mxu0 %v3548
        %v3550 = vpop.f32.mrf.mxu0
        %v3551 = vadd.f32 %v3493, %v3550
        %v3552 = vand.u32 %v3357, 4294901760
        %v3553 = vsub.f32 %v3357, %v3552
        %3554 = vmatmul.f32.gmra.mxu0 %v3553
        %v3555 = vpop.f32.mrf.mxu0
        %v3556 = vadd.f32 %v3497, %v3555
        %v3557 = vand.u32 %v3360, 4294901760
        %v3558 = vsub.f32 %v3360, %v3557
        %3559 = vmatmul.f32.gmra.mxu0 %v3558
        %v3560 = vpop.f32.mrf.mxu0
        %v3561 = vadd.f32 %v3501, %v3560
        %v3562 = vand.u32 %v3363, 4294901760
        %v3563 = vsub.f32 %v3363, %v3562
        %3564 = vmatmul.f32.gmra.mxu0 %v3563
        %v3565 = vpop.f32.mrf.mxu0
        %v3566 = vadd.f32 %v3505, %v3565
        %3567 = vdwg.mxu0
        %3568 = vmatpush.msra.mxu0 0.0
        %3569 = vmatpush.msra.mxu0 0.0
        %3570 = vmatpush.msra.mxu0 0.0
        %3571 = vmatpush.msra.mxu0 0.0
        %3572 = vmatpush.msra.mxu0 0.0
        %3573 = vmatpush.msra.mxu0 0.0
        %3574 = vmatpush.msra.mxu0 0.0
        %3575 = vmatpush.msra.mxu0 0.0
        %3576 = vmatpush.msra.mxu0 0.0
        %3577 = vmatpush.msra.mxu0 0.0
        %3578 = vmatpush.msra.mxu0 0.0
        %3579 = vmatpush.msra.mxu0 0.0
        %3580 = vmatpush.msra.mxu0 0.0
        %3581 = vmatpush.msra.mxu0 0.0
        %v3582 = vand.u32 %v3340, 4294901760
        %3583 = vmatpush.msra.mxu0 %v3582
        %v3584 = vand.u32 %v3339, 4294901760
        %3585 = vmatpush.msra.mxu0 %v3584
        %v3586 = vand.u32 %v3342, 4294901760
        %v3587 = vsub.f32 %v3342, %v3586
        %v3588 = vand.u32 %v3587, 4294901760
        %3589 = vmatmul.f32.gmra.mxu0 %v3588
        %v3590 = vpop.f32.mrf.mxu0
        %v3591 = vadd.f32 %v3531, %v3590
        %v3592 = vand.u32 %v3345, 4294901760
        %v3593 = vsub.f32 %v3345, %v3592
        %v3594 = vand.u32 %v3593, 4294901760
        %3595 = vmatmul.f32.gmra.mxu0 %v3594
        %v3596 = vpop.f32.mrf.mxu0
        %v3597 = vadd.f32 %v3536, %v3596
        %v3598 = vand.u32 %v3348, 4294901760
        %v3599 = vsub.f32 %v3348, %v3598
        %v3600 = vand.u32 %v3599, 4294901760
        %3601 = vmatmul.f32.gmra.mxu0 %v3600
        %v3602 = vpop.f32.mrf.mxu0
        %v3603 = vadd.f32 %v3541, %v3602
        %v3604 = vand.u32 %v3351, 4294901760
        %v3605 = vsub.f32 %v3351, %v3604
        %v3606 = vand.u32 %v3605, 4294901760
        %3607 = vmatmul.f32.gmra.mxu0 %v3606
        %v3608 = vpop.f32.mrf.mxu0
        %v3609 = vadd.f32 %v3546, %v3608
        %v3610 = vand.u32 %v3354, 4294901760
        %v3611 = vsub.f32 %v3354, %v3610
        %v3612 = vand.u32 %v3611, 4294901760
        %3613 = vmatmul.f32.gmra.mxu0 %v3612
        %v3614 = vpop.f32.mrf.mxu0
        %v3615 = vadd.f32 %v3551, %v3614
        %v3616 = vand.u32 %v3357, 4294901760
        %v3617 = vsub.f32 %v3357, %v3616
        %v3618 = vand.u32 %v3617, 4294901760
        %3619 = vmatmul.f32.gmra.mxu0 %v3618
        %v3620 = vpop.f32.mrf.mxu0
        %v3621 = vadd.f32 %v3556, %v3620
        %v3622 = vand.u32 %v3360, 4294901760
        %v3623 = vsub.f32 %v3360, %v3622
        %v3624 = vand.u32 %v3623, 4294901760
        %3625 = vmatmul.f32.gmra.mxu0 %v3624
        %v3626 = vpop.f32.mrf.mxu0
        %v3627 = vadd.f32 %v3561, %v3626
        %v3628 = vand.u32 %v3363, 4294901760
        %v3629 = vsub.f32 %v3363, %v3628
        %v3630 = vand.u32 %v3629, 4294901760
        %3631 = vmatmul.f32.gmra.mxu0 %v3630
        %v3632 = vpop.f32.mrf.mxu0
        %v3633 = vadd.f32 %v3566, %v3632
        %3634 = vdwg.mxu0
        %3635 = vmatpush.msra.mxu0 0.0
        %3636 = vmatpush.msra.mxu0 0.0
        %3637 = vmatpush.msra.mxu0 0.0
        %3638 = vmatpush.msra.mxu0 0.0
        %3639 = vmatpush.msra.mxu0 0.0
        %3640 = vmatpush.msra.mxu0 0.0
        %3641 = vmatpush.msra.mxu0 0.0
        %3642 = vmatpush.msra.mxu0 0.0
        %3643 = vmatpush.msra.mxu0 0.0
        %3644 = vmatpush.msra.mxu0 0.0
        %3645 = vmatpush.msra.mxu0 0.0
        %3646 = vmatpush.msra.mxu0 0.0
        %3647 = vmatpush.msra.mxu0 0.0
        %3648 = vmatpush.msra.mxu0 0.0
        %v3649 = vand.u32 %v3340, 4294901760
        %v3650 = vsub.f32 %v3340, %v3649
        %v3651 = vand.u32 %v3650, 4294901760
        %3652 = vmatpush.msra.mxu0 %v3651
        %v3653 = vand.u32 %v3339, 4294901760
        %v3654 = vsub.f32 %v3339, %v3653
        %v3655 = vand.u32 %v3654, 4294901760
        %3656 = vmatpush.msra.mxu0 %v3655
        %v3657 = vand.u32 %v3342, 4294901760
        %3658 = vmatmul.f32.gmra.mxu0 %v3657
        %v3659 = vpop.f32.mrf.mxu0
        %v3660 = vadd.f32 %v3591, %v3659
        %v3661 = vand.u32 %v3345, 4294901760
        %3662 = vmatmul.f32.gmra.mxu0 %v3661
        %v3663 = vpop.f32.mrf.mxu0
        %v3664 = vadd.f32 %v3597, %v3663
        %v3665 = vand.u32 %v3348, 4294901760
        %3666 = vmatmul.f32.gmra.mxu0 %v3665
        %v3667 = vpop.f32.mrf.mxu0
        %v3668 = vadd.f32 %v3603, %v3667
        %v3669 = vand.u32 %v3351, 4294901760
        %3670 = vmatmul.f32.gmra.mxu0 %v3669
        %v3671 = vpop.f32.mrf.mxu0
        %v3672 = vadd.f32 %v3609, %v3671
        %v3673 = vand.u32 %v3354, 4294901760
        %3674 = vmatmul.f32.gmra.mxu0 %v3673
        %v3675 = vpop.f32.mrf.mxu0
        %v3676 = vadd.f32 %v3615, %v3675
        %v3677 = vand.u32 %v3357, 4294901760
        %3678 = vmatmul.f32.gmra.mxu0 %v3677
        %v3679 = vpop.f32.mrf.mxu0
        %v3680 = vadd.f32 %v3621, %v3679
        %v3681 = vand.u32 %v3360, 4294901760
        %3682 = vmatmul.f32.gmra.mxu0 %v3681
        %v3683 = vpop.f32.mrf.mxu0
        %v3684 = vadd.f32 %v3627, %v3683
        %v3685 = vand.u32 %v3363, 4294901760
        %3686 = vmatmul.f32.gmra.mxu0 %v3685
        %v3687 = vpop.f32.mrf.mxu0
        %v3688 = vadd.f32 %v3633, %v3687
        %3689 = vdwg.mxu0
        %3690 = vmatpush.msra.mxu0 0.0
        %3691 = vmatpush.msra.mxu0 0.0
        %3692 = vmatpush.msra.mxu0 0.0
        %3693 = vmatpush.msra.mxu0 0.0
        %3694 = vmatpush.msra.mxu0 0.0
        %3695 = vmatpush.msra.mxu0 0.0
        %3696 = vmatpush.msra.mxu0 0.0
        %3697 = vmatpush.msra.mxu0 0.0
        %3698 = vmatpush.msra.mxu0 0.0
        %3699 = vmatpush.msra.mxu0 0.0
        %3700 = vmatpush.msra.mxu0 0.0
        %3701 = vmatpush.msra.mxu0 0.0
        %3702 = vmatpush.msra.mxu0 0.0
        %3703 = vmatpush.msra.mxu0 0.0
        %v3704 = vand.u32 %v3340, 4294901760
        %3705 = vmatpush.msra.mxu0 %v3704
        %v3706 = vand.u32 %v3339, 4294901760
        %3707 = vmatpush.msra.mxu0 %v3706
        %v3708 = vand.u32 %v3342, 4294901760
        %3709 = vmatmul.f32.gmra.mxu0 %v3708
        %v3710 = vpop.f32.mrf.mxu0
        %v3711 = vadd.f32 %v3660, %v3710
        %v3712 = vand.u32 %v3345, 4294901760
        %3713 = vmatmul.f32.gmra.mxu0 %v3712
        %v3714 = vpop.f32.mrf.mxu0
        %v3715 = vadd.f32 %v3664, %v3714
        %v3716 = vand.u32 %v3348, 4294901760
        %3717 = vmatmul.f32.gmra.mxu0 %v3716
        %v3718 = vpop.f32.mrf.mxu0
        %v3719 = vadd.f32 %v3668, %v3718
        %v3720 = vand.u32 %v3351, 4294901760
        %3721 = vmatmul.f32.gmra.mxu0 %v3720
        %v3722 = vpop.f32.mrf.mxu0
        %v3723 = vadd.f32 %v3672, %v3722
        %v3724 = vand.u32 %v3354, 4294901760
        %3725 = vmatmul.f32.gmra.mxu0 %v3724
        %v3726 = vpop.f32.mrf.mxu0
        %v3727 = vadd.f32 %v3676, %v3726
        %v3728 = vand.u32 %v3357, 4294901760
        %3729 = vmatmul.f32.gmra.mxu0 %v3728
        %v3730 = vpop.f32.mrf.mxu0
        %v3731 = vadd.f32 %v3680, %v3730
        %v3732 = vand.u32 %v3360, 4294901760
        %3733 = vmatmul.f32.gmra.mxu0 %v3732
        %v3734 = vpop.f32.mrf.mxu0
        %v3735 = vadd.f32 %v3684, %v3734
        %v3736 = vand.u32 %v3363, 4294901760
        %3737 = vmatmul.f32.gmra.mxu0 %v3736
        %v3738 = vpop.f32.mrf.mxu0
        %v3739 = vadd.f32 %v3688, %v3738
        %3740 = vdwg.mxu0
        %3741 = vmatpush.msra.mxu0 0.0
        %3742 = vmatpush.msra.mxu0 0.0
        %3743 = vmatpush.msra.mxu0 0.0
        %3744 = vmatpush.msra.mxu0 0.0
        %3745 = vmatpush.msra.mxu0 0.0
        %3746 = vmatpush.msra.mxu0 0.0
        %3747 = vmatpush.msra.mxu0 0.0
        %3748 = vmatpush.msra.mxu0 0.0
        %v3749 = vand.u32 %v3739, 4294901760
        %3750 = vmatpush.msra.mxu0 %v3749
        %v3751 = vand.u32 %v3735, 4294901760
        %3752 = vmatpush.msra.mxu0 %v3751
        %v3753 = vand.u32 %v3731, 4294901760
        %3754 = vmatpush.msra.mxu0 %v3753
        %v3755 = vand.u32 %v3727, 4294901760
        %3756 = vmatpush.msra.mxu0 %v3755
        %v3757 = vand.u32 %v3723, 4294901760
        %3758 = vmatpush.msra.mxu0 %v3757
        %v3759 = vand.u32 %v3719, 4294901760
        %3760 = vmatpush.msra.mxu0 %v3759
        %v3761 = vand.u32 %v3715, 4294901760
        %3762 = vmatpush.msra.mxu0 %v3761
        %v3763 = vand.u32 %v3711, 4294901760
        %3764 = vmatpush.msra.mxu0 %v3763
        %v3765 = vand.u32 %v1895, 4294901760
        %v3766 = vsub.f32 %v1895, %v3765
        %v3767 = vand.u32 %v3766, 4294901760
        %v3768 = vsub.f32 %v3766, %v3767
        %v3769 = vand.u32 %v3768, 4294901760
        %3770 = vmatmul.f32.gmra.mxu0 %v3769
        %v3771 = vpop.f32.mrf.mxu0
        %v3772 = vadd.f32 0.0, %v3771
        %v3773 = vand.u32 %v1898, 4294901760
        %v3774 = vsub.f32 %v1898, %v3773
        %v3775 = vand.u32 %v3774, 4294901760
        %v3776 = vsub.f32 %v3774, %v3775
        %v3777 = vand.u32 %v3776, 4294901760
        %3778 = vmatmul.f32.gmra.mxu0 %v3777
        %v3779 = vpop.f32.mrf.mxu0
        %v3780 = vadd.f32 0.0, %v3779
        %v3781 = vand.u32 %v1901, 4294901760
        %v3782 = vsub.f32 %v1901, %v3781
        %v3783 = vand.u32 %v3782, 4294901760
        %v3784 = vsub.f32 %v3782, %v3783
        %v3785 = vand.u32 %v3784, 4294901760
        %3786 = vmatmul.f32.gmra.mxu0 %v3785
        %v3787 = vpop.f32.mrf.mxu0
        %v3788 = vadd.f32 0.0, %v3787
        %v3789 = vand.u32 %v1904, 4294901760
        %v3790 = vsub.f32 %v1904, %v3789
        %v3791 = vand.u32 %v3790, 4294901760
        %v3792 = vsub.f32 %v3790, %v3791
        %v3793 = vand.u32 %v3792, 4294901760
        %3794 = vmatmul.f32.gmra.mxu0 %v3793
        %v3795 = vpop.f32.mrf.mxu0
        %v3796 = vadd.f32 0.0, %v3795
        %v3797 = vand.u32 %v1907, 4294901760
        %v3798 = vsub.f32 %v1907, %v3797
        %v3799 = vand.u32 %v3798, 4294901760
        %v3800 = vsub.f32 %v3798, %v3799
        %v3801 = vand.u32 %v3800, 4294901760
        %3802 = vmatmul.f32.gmra.mxu0 %v3801
        %v3803 = vpop.f32.mrf.mxu0
        %v3804 = vadd.f32 0.0, %v3803
        %v3805 = vand.u32 %v1910, 4294901760
        %v3806 = vsub.f32 %v1910, %v3805
        %v3807 = vand.u32 %v3806, 4294901760
        %v3808 = vsub.f32 %v3806, %v3807
        %v3809 = vand.u32 %v3808, 4294901760
        %3810 = vmatmul.f32.gmra.mxu0 %v3809
        %v3811 = vpop.f32.mrf.mxu0
        %v3812 = vadd.f32 0.0, %v3811
        %v3813 = vand.u32 %v1913, 4294901760
        %v3814 = vsub.f32 %v1913, %v3813
        %v3815 = vand.u32 %v3814, 4294901760
        %v3816 = vsub.f32 %v3814, %v3815
        %v3817 = vand.u32 %v3816, 4294901760
        %3818 = vmatmul.f32.gmra.mxu0 %v3817
        %v3819 = vpop.f32.mrf.mxu0
        %v3820 = vadd.f32 0.0, %v3819
        %v3821 = vand.u32 %v1916, 4294901760
        %v3822 = vsub.f32 %v1916, %v3821
        %v3823 = vand.u32 %v3822, 4294901760
        %v3824 = vsub.f32 %v3822, %v3823
        %v3825 = vand.u32 %v3824, 4294901760
        %3826 = vmatmul.f32.gmra.mxu0 %v3825
        %v3827 = vpop.f32.mrf.mxu0
        %v3828 = vadd.f32 0.0, %v3827
        %3829 = vdwg.mxu0
        %3830 = vmatpush.msra.mxu0 0.0
        %3831 = vmatpush.msra.mxu0 0.0
        %3832 = vmatpush.msra.mxu0 0.0
        %3833 = vmatpush.msra.mxu0 0.0
        %3834 = vmatpush.msra.mxu0 0.0
        %3835 = vmatpush.msra.mxu0 0.0
        %3836 = vmatpush.msra.mxu0 0.0
        %3837 = vmatpush.msra.mxu0 0.0
        %v3838 = vand.u32 %v3739, 4294901760
        %v3839 = vsub.f32 %v3739, %v3838
        %v3840 = vand.u32 %v3839, 4294901760
        %v3841 = vsub.f32 %v3839, %v3840
        %v3842 = vand.u32 %v3841, 4294901760
        %3843 = vmatpush.msra.mxu0 %v3842
        %v3844 = vand.u32 %v3735, 4294901760
        %v3845 = vsub.f32 %v3735, %v3844
        %v3846 = vand.u32 %v3845, 4294901760
        %v3847 = vsub.f32 %v3845, %v3846
        %v3848 = vand.u32 %v3847, 4294901760
        %3849 = vmatpush.msra.mxu0 %v3848
        %v3850 = vand.u32 %v3731, 4294901760
        %v3851 = vsub.f32 %v3731, %v3850
        %v3852 = vand.u32 %v3851, 4294901760
        %v3853 = vsub.f32 %v3851, %v3852
        %v3854 = vand.u32 %v3853, 4294901760
        %3855 = vmatpush.msra.mxu0 %v3854
        %v3856 = vand.u32 %v3727, 4294901760
        %v3857 = vsub.f32 %v3727, %v3856
        %v3858 = vand.u32 %v3857, 4294901760
        %v3859 = vsub.f32 %v3857, %v3858
        %v3860 = vand.u32 %v3859, 4294901760
        %3861 = vmatpush.msra.mxu0 %v3860
        %v3862 = vand.u32 %v3723, 4294901760
        %v3863 = vsub.f32 %v3723, %v3862
        %v3864 = vand.u32 %v3863, 4294901760
        %v3865 = vsub.f32 %v3863, %v3864
        %v3866 = vand.u32 %v3865, 4294901760
        %3867 = vmatpush.msra.mxu0 %v3866
        %v3868 = vand.u32 %v3719, 4294901760
        %v3869 = vsub.f32 %v3719, %v3868
        %v3870 = vand.u32 %v3869, 4294901760
        %v3871 = vsub.f32 %v3869, %v3870
        %v3872 = vand.u32 %v3871, 4294901760
        %3873 = vmatpush.msra.mxu0 %v3872
        %v3874 = vand.u32 %v3715, 4294901760
        %v3875 = vsub.f32 %v3715, %v3874
        %v3876 = vand.u32 %v3875, 4294901760
        %v3877 = vsub.f32 %v3875, %v3876
        %v3878 = vand.u32 %v3877, 4294901760
        %3879 = vmatpush.msra.mxu0 %v3878
        %v3880 = vand.u32 %v3711, 4294901760
        %v3881 = vsub.f32 %v3711, %v3880
        %v3882 = vand.u32 %v3881, 4294901760
        %v3883 = vsub.f32 %v3881, %v3882
        %v3884 = vand.u32 %v3883, 4294901760
        %3885 = vmatpush.msra.mxu0 %v3884
        %v3886 = vand.u32 %v1895, 4294901760
        %3887 = vmatmul.f32.gmra.mxu0 %v3886
        %v3888 = vpop.f32.mrf.mxu0
        %v3889 = vadd.f32 %v3772, %v3888
        %v3890 = vand.u32 %v1898, 4294901760
        %3891 = vmatmul.f32.gmra.mxu0 %v3890
        %v3892 = vpop.f32.mrf.mxu0
        %v3893 = vadd.f32 %v3780, %v3892
        %v3894 = vand.u32 %v1901, 4294901760
        %3895 = vmatmul.f32.gmra.mxu0 %v3894
        %v3896 = vpop.f32.mrf.mxu0
        %v3897 = vadd.f32 %v3788, %v3896
        %v3898 = vand.u32 %v1904, 4294901760
        %3899 = vmatmul.f32.gmra.mxu0 %v3898
        %v3900 = vpop.f32.mrf.mxu0
        %v3901 = vadd.f32 %v3796, %v3900
        %v3902 = vand.u32 %v1907, 4294901760
        %3903 = vmatmul.f32.gmra.mxu0 %v3902
        %v3904 = vpop.f32.mrf.mxu0
        %v3905 = vadd.f32 %v3804, %v3904
        %v3906 = vand.u32 %v1910, 4294901760
        %3907 = vmatmul.f32.gmra.mxu0 %v3906
        %v3908 = vpop.f32.mrf.mxu0
        %v3909 = vadd.f32 %v3812, %v3908
        %v3910 = vand.u32 %v1913, 4294901760
        %3911 = vmatmul.f32.gmra.mxu0 %v3910
        %v3912 = vpop.f32.mrf.mxu0
        %v3913 = vadd.f32 %v3820, %v3912
        %v3914 = vand.u32 %v1916, 4294901760
        %3915 = vmatmul.f32.gmra.mxu0 %v3914
        %v3916 = vpop.f32.mrf.mxu0
        %v3917 = vadd.f32 %v3828, %v3916
        %3918 = vdwg.mxu0
        %3919 = vmatpush.msra.mxu0 0.0
        %3920 = vmatpush.msra.mxu0 0.0
        %3921 = vmatpush.msra.mxu0 0.0
        %3922 = vmatpush.msra.mxu0 0.0
        %3923 = vmatpush.msra.mxu0 0.0
        %3924 = vmatpush.msra.mxu0 0.0
        %3925 = vmatpush.msra.mxu0 0.0
        %3926 = vmatpush.msra.mxu0 0.0
        %v3927 = vand.u32 %v3739, 4294901760
        %v3928 = vsub.f32 %v3739, %v3927
        %3929 = vmatpush.msra.mxu0 %v3928
        %v3930 = vand.u32 %v3735, 4294901760
        %v3931 = vsub.f32 %v3735, %v3930
        %3932 = vmatpush.msra.mxu0 %v3931
        %v3933 = vand.u32 %v3731, 4294901760
        %v3934 = vsub.f32 %v3731, %v3933
        %3935 = vmatpush.msra.mxu0 %v3934
        %v3936 = vand.u32 %v3727, 4294901760
        %v3937 = vsub.f32 %v3727, %v3936
        %3938 = vmatpush.msra.mxu0 %v3937
        %v3939 = vand.u32 %v3723, 4294901760
        %v3940 = vsub.f32 %v3723, %v3939
        %3941 = vmatpush.msra.mxu0 %v3940
        %v3942 = vand.u32 %v3719, 4294901760
        %v3943 = vsub.f32 %v3719, %v3942
        %3944 = vmatpush.msra.mxu0 %v3943
        %v3945 = vand.u32 %v3715, 4294901760
        %v3946 = vsub.f32 %v3715, %v3945
        %3947 = vmatpush.msra.mxu0 %v3946
        %v3948 = vand.u32 %v3711, 4294901760
        %v3949 = vsub.f32 %v3711, %v3948
        %3950 = vmatpush.msra.mxu0 %v3949
        %v3951 = vand.u32 %v1895, 4294901760
        %v3952 = vsub.f32 %v1895, %v3951
        %3953 = vmatmul.f32.gmra.mxu0 %v3952
        %v3954 = vpop.f32.mrf.mxu0
        %v3955 = vadd.f32 %v3889, %v3954
        %v3956 = vand.u32 %v1898, 4294901760
        %v3957 = vsub.f32 %v1898, %v3956
        %3958 = vmatmul.f32.gmra.mxu0 %v3957
        %v3959 = vpop.f32.mrf.mxu0
        %v3960 = vadd.f32 %v3893, %v3959
        %v3961 = vand.u32 %v1901, 4294901760
        %v3962 = vsub.f32 %v1901, %v3961
        %3963 = vmatmul.f32.gmra.mxu0 %v3962
        %v3964 = vpop.f32.mrf.mxu0
        %v3965 = vadd.f32 %v3897, %v3964
        %v3966 = vand.u32 %v1904, 4294901760
        %v3967 = vsub.f32 %v1904, %v3966
        %3968 = vmatmul.f32.gmra.mxu0 %v3967
        %v3969 = vpop.f32.mrf.mxu0
        %v3970 = vadd.f32 %v3901, %v3969
        %v3971 = vand.u32 %v1907, 4294901760
        %v3972 = vsub.f32 %v1907, %v3971
        %3973 = vmatmul.f32.gmra.mxu0 %v3972
        %v3974 = vpop.f32.mrf.mxu0
        %v3975 = vadd.f32 %v3905, %v3974
        %v3976 = vand.u32 %v1910, 4294901760
        %v3977 = vsub.f32 %v1910, %v3976
        %3978 = vmatmul.f32.gmra.mxu0 %v3977
        %v3979 = vpop.f32.mrf.mxu0
        %v3980 = vadd.f32 %v3909, %v3979
        %v3981 = vand.u32 %v1913, 4294901760
        %v3982 = vsub.f32 %v1913, %v3981
        %3983 = vmatmul.f32.gmra.mxu0 %v3982
        %v3984 = vpop.f32.mrf.mxu0
        %v3985 = vadd.f32 %v3913, %v3984
        %v3986 = vand.u32 %v1916, 4294901760
        %v3987 = vsub.f32 %v1916, %v3986
        %3988 = vmatmul.f32.gmra.mxu0 %v3987
        %v3989 = vpop.f32.mrf.mxu0
        %v3990 = vadd.f32 %v3917, %v3989
        %3991 = vdwg.mxu0
        %3992 = vmatpush.msra.mxu0 0.0
        %3993 = vmatpush.msra.mxu0 0.0
        %3994 = vmatpush.msra.mxu0 0.0
        %3995 = vmatpush.msra.mxu0 0.0
        %3996 = vmatpush.msra.mxu0 0.0
        %3997 = vmatpush.msra.mxu0 0.0
        %3998 = vmatpush.msra.mxu0 0.0
        %3999 = vmatpush.msra.mxu0 0.0
        %v4000 = vand.u32 %v3739, 4294901760
        %4001 = vmatpush.msra.mxu0 %v4000
        %v4002 = vand.u32 %v3735, 4294901760
        %4003 = vmatpush.msra.mxu0 %v4002
        %v4004 = vand.u32 %v3731, 4294901760
        %4005 = vmatpush.msra.mxu0 %v4004
        %v4006 = vand.u32 %v3727, 4294901760
        %4007 = vmatpush.msra.mxu0 %v4006
        %v4008 = vand.u32 %v3723, 4294901760
        %4009 = vmatpush.msra.mxu0 %v4008
        %v4010 = vand.u32 %v3719, 4294901760
        %4011 = vmatpush.msra.mxu0 %v4010
        %v4012 = vand.u32 %v3715, 4294901760
        %4013 = vmatpush.msra.mxu0 %v4012
        %v4014 = vand.u32 %v3711, 4294901760
        %4015 = vmatpush.msra.mxu0 %v4014
        %v4016 = vand.u32 %v1895, 4294901760
        %v4017 = vsub.f32 %v1895, %v4016
        %v4018 = vand.u32 %v4017, 4294901760
        %4019 = vmatmul.f32.gmra.mxu0 %v4018
        %v4020 = vpop.f32.mrf.mxu0
        %v4021 = vadd.f32 %v3955, %v4020
        %v4022 = vand.u32 %v1898, 4294901760
        %v4023 = vsub.f32 %v1898, %v4022
        %v4024 = vand.u32 %v4023, 4294901760
        %4025 = vmatmul.f32.gmra.mxu0 %v4024
        %v4026 = vpop.f32.mrf.mxu0
        %v4027 = vadd.f32 %v3960, %v4026
        %v4028 = vand.u32 %v1901, 4294901760
        %v4029 = vsub.f32 %v1901, %v4028
        %v4030 = vand.u32 %v4029, 4294901760
        %4031 = vmatmul.f32.gmra.mxu0 %v4030
        %v4032 = vpop.f32.mrf.mxu0
        %v4033 = vadd.f32 %v3965, %v4032
        %v4034 = vand.u32 %v1904, 4294901760
        %v4035 = vsub.f32 %v1904, %v4034
        %v4036 = vand.u32 %v4035, 4294901760
        %4037 = vmatmul.f32.gmra.mxu0 %v4036
        %v4038 = vpop.f32.mrf.mxu0
        %v4039 = vadd.f32 %v3970, %v4038
        %v4040 = vand.u32 %v1907, 4294901760
        %v4041 = vsub.f32 %v1907, %v4040
        %v4042 = vand.u32 %v4041, 4294901760
        %4043 = vmatmul.f32.gmra.mxu0 %v4042
        %v4044 = vpop.f32.mrf.mxu0
        %v4045 = vadd.f32 %v3975, %v4044
        %v4046 = vand.u32 %v1910, 4294901760
        %v4047 = vsub.f32 %v1910, %v4046
        %v4048 = vand.u32 %v4047, 4294901760
        %4049 = vmatmul.f32.gmra.mxu0 %v4048
        %v4050 = vpop.f32.mrf.mxu0
        %v4051 = vadd.f32 %v3980, %v4050
        %v4052 = vand.u32 %v1913, 4294901760
        %v4053 = vsub.f32 %v1913, %v4052
        %v4054 = vand.u32 %v4053, 4294901760
        %4055 = vmatmul.f32.gmra.mxu0 %v4054
        %v4056 = vpop.f32.mrf.mxu0
        %v4057 = vadd.f32 %v3985, %v4056
        %v4058 = vand.u32 %v1916, 4294901760
        %v4059 = vsub.f32 %v1916, %v4058
        %v4060 = vand.u32 %v4059, 4294901760
        %4061 = vmatmul.f32.gmra.mxu0 %v4060
        %v4062 = vpop.f32.mrf.mxu0
        %v4063 = vadd.f32 %v3990, %v4062
        %4064 = vdwg.mxu0
        %4065 = vmatpush.msra.mxu0 0.0
        %4066 = vmatpush.msra.mxu0 0.0
        %4067 = vmatpush.msra.mxu0 0.0
        %4068 = vmatpush.msra.mxu0 0.0
        %4069 = vmatpush.msra.mxu0 0.0
        %4070 = vmatpush.msra.mxu0 0.0
        %4071 = vmatpush.msra.mxu0 0.0
        %4072 = vmatpush.msra.mxu0 0.0
        %v4073 = vand.u32 %v3739, 4294901760
        %v4074 = vsub.f32 %v3739, %v4073
        %v4075 = vand.u32 %v4074, 4294901760
        %4076 = vmatpush.msra.mxu0 %v4075
        %v4077 = vand.u32 %v3735, 4294901760
        %v4078 = vsub.f32 %v3735, %v4077
        %v4079 = vand.u32 %v4078, 4294901760
        %4080 = vmatpush.msra.mxu0 %v4079
        %v4081 = vand.u32 %v3731, 4294901760
        %v4082 = vsub.f32 %v3731, %v4081
        %v4083 = vand.u32 %v4082, 4294901760
        %4084 = vmatpush.msra.mxu0 %v4083
        %v4085 = vand.u32 %v3727, 4294901760
        %v4086 = vsub.f32 %v3727, %v4085
        %v4087 = vand.u32 %v4086, 4294901760
        %4088 = vmatpush.msra.mxu0 %v4087
        %v4089 = vand.u32 %v3723, 4294901760
        %v4090 = vsub.f32 %v3723, %v4089
        %v4091 = vand.u32 %v4090, 4294901760
        %4092 = vmatpush.msra.mxu0 %v4091
        %v4093 = vand.u32 %v3719, 4294901760
        %v4094 = vsub.f32 %v3719, %v4093
        %v4095 = vand.u32 %v4094, 4294901760
        %4096 = vmatpush.msra.mxu0 %v4095
        %v4097 = vand.u32 %v3715, 4294901760
        %v4098 = vsub.f32 %v3715, %v4097
        %v4099 = vand.u32 %v4098, 4294901760
        %4100 = vmatpush.msra.mxu0 %v4099
        %v4101 = vand.u32 %v3711, 4294901760
        %v4102 = vsub.f32 %v3711, %v4101
        %v4103 = vand.u32 %v4102, 4294901760
        %4104 = vmatpush.msra.mxu0 %v4103
        %v4105 = vand.u32 %v1895, 4294901760
        %4106 = vmatmul.f32.gmra.mxu0 %v4105
        %v4107 = vpop.f32.mrf.mxu0
        %v4108 = vadd.f32 %v4021, %v4107
        %v4109 = vand.u32 %v1898, 4294901760
        %4110 = vmatmul.f32.gmra.mxu0 %v4109
        %v4111 = vpop.f32.mrf.mxu0
        %v4112 = vadd.f32 %v4027, %v4111
        %v4113 = vand.u32 %v1901, 4294901760
        %4114 = vmatmul.f32.gmra.mxu0 %v4113
        %v4115 = vpop.f32.mrf.mxu0
        %v4116 = vadd.f32 %v4033, %v4115
        %v4117 = vand.u32 %v1904, 4294901760
        %4118 = vmatmul.f32.gmra.mxu0 %v4117
        %v4119 = vpop.f32.mrf.mxu0
        %v4120 = vadd.f32 %v4039, %v4119
        %v4121 = vand.u32 %v1907, 4294901760
        %4122 = vmatmul.f32.gmra.mxu0 %v4121
        %v4123 = vpop.f32.mrf.mxu0
        %v4124 = vadd.f32 %v4045, %v4123
        %v4125 = vand.u32 %v1910, 4294901760
        %4126 = vmatmul.f32.gmra.mxu0 %v4125
        %v4127 = vpop.f32.mrf.mxu0
        %v4128 = vadd.f32 %v4051, %v4127
        %v4129 = vand.u32 %v1913, 4294901760
        %4130 = vmatmul.f32.gmra.mxu0 %v4129
        %v4131 = vpop.f32.mrf.mxu0
        %v4132 = vadd.f32 %v4057, %v4131
        %v4133 = vand.u32 %v1916, 4294901760
        %4134 = vmatmul.f32.gmra.mxu0 %v4133
        %v4135 = vpop.f32.mrf.mxu0
        %v4136 = vadd.f32 %v4063, %v4135
        %4137 = vdwg.mxu0
        %4138 = vmatpush.msra.mxu0 0.0
        %4139 = vmatpush.msra.mxu0 0.0
        %4140 = vmatpush.msra.mxu0 0.0
        %4141 = vmatpush.msra.mxu0 0.0
        %4142 = vmatpush.msra.mxu0 0.0
        %4143 = vmatpush.msra.mxu0 0.0
        %4144 = vmatpush.msra.mxu0 0.0
        %4145 = vmatpush.msra.mxu0 0.0
        %v4146 = vand.u32 %v3739, 4294901760
        %4147 = vmatpush.msra.mxu0 %v4146
        %v4148 = vand.u32 %v3735, 4294901760
        %4149 = vmatpush.msra.mxu0 %v4148
        %v4150 = vand.u32 %v3731, 4294901760
        %4151 = vmatpush.msra.mxu0 %v4150
        %v4152 = vand.u32 %v3727, 4294901760
        %4153 = vmatpush.msra.mxu0 %v4152
        %v4154 = vand.u32 %v3723, 4294901760
        %4155 = vmatpush.msra.mxu0 %v4154
        %v4156 = vand.u32 %v3719, 4294901760
        %4157 = vmatpush.msra.mxu0 %v4156
        %v4158 = vand.u32 %v3715, 4294901760
        %4159 = vmatpush.msra.mxu0 %v4158
        %v4160 = vand.u32 %v3711, 4294901760
        %4161 = vmatpush.msra.mxu0 %v4160
        %v4162 = vand.u32 %v1895, 4294901760
        %4163 = vmatmul.f32.gmra.mxu0 %v4162
        %v4164 = vpop.f32.mrf.mxu0
        %v4165 = vadd.f32 %v4108, %v4164
        %v4166 = vand.u32 %v1898, 4294901760
        %4167 = vmatmul.f32.gmra.mxu0 %v4166
        %v4168 = vpop.f32.mrf.mxu0
        %v4169 = vadd.f32 %v4112, %v4168
        %v4170 = vand.u32 %v1901, 4294901760
        %4171 = vmatmul.f32.gmra.mxu0 %v4170
        %v4172 = vpop.f32.mrf.mxu0
        %v4173 = vadd.f32 %v4116, %v4172
        %v4174 = vand.u32 %v1904, 4294901760
        %4175 = vmatmul.f32.gmra.mxu0 %v4174
        %v4176 = vpop.f32.mrf.mxu0
        %v4177 = vadd.f32 %v4120, %v4176
        %v4178 = vand.u32 %v1907, 4294901760
        %4179 = vmatmul.f32.gmra.mxu0 %v4178
        %v4180 = vpop.f32.mrf.mxu0
        %v4181 = vadd.f32 %v4124, %v4180
        %v4182 = vand.u32 %v1910, 4294901760
        %4183 = vmatmul.f32.gmra.mxu0 %v4182
        %v4184 = vpop.f32.mrf.mxu0
        %v4185 = vadd.f32 %v4128, %v4184
        %v4186 = vand.u32 %v1913, 4294901760
        %4187 = vmatmul.f32.gmra.mxu0 %v4186
        %v4188 = vpop.f32.mrf.mxu0
        %v4189 = vadd.f32 %v4132, %v4188
        %v4190 = vand.u32 %v1916, 4294901760
        %4191 = vmatmul.f32.gmra.mxu0 %v4190
        %v4192 = vpop.f32.mrf.mxu0
        %v4193 = vadd.f32 %v4136, %v4192
        %4194 = vdwg.mxu0
        %s4195 = scalar_lea.vmem %s217, 256 [#allocation7]
        %4196 = vst.msk [vmem:[%s4195] sm:$0xff] %vm230, %v4165
        %4197 = vst.msk [vmem:[%s4195 + $0x8] sm:$0xff] %vm230, %v4169
        %4198 = vst.msk [vmem:[%s4195 + $0x10] sm:$0xff] %vm230, %v4173
        %4199 = vst.msk [vmem:[%s4195 + $0x18] sm:$0xff] %vm230, %v4177
        %4200 = vst.msk [vmem:[%s4195 + $0x20] sm:$0xff] %vm230, %v4181
        %4201 = vst.msk [vmem:[%s4195 + $0x28] sm:$0xff] %vm230, %v4185
        %4202 = vst.msk [vmem:[%s4195 + $0x30] sm:$0xff] %vm230, %v4189
        %4203 = vst.msk [vmem:[%s4195 + $0x38] sm:$0xff] %vm230, %v4193
        %s4204 = sand.u32 %s92, 1
        %s4205 = sand.u32 %s92, 1
        %s4206 = smul.addr %s4205, 320
        %s4207 = scalar_lea.vmem [#allocation7], %s4206
        // Predicated region
        $region45: #{diff_forward.1} parent=31 // pred_check
          %p4208 = pneg %p102
        $region46: #{diff_forward.1} parent=31 // pred_check_branch
          %4210 = sbr.rel (%p4208) target = $region48
        $region47: #{diff_forward.1} parent=31 // pred_region
          %s4211 = smul.u32 8, %s16
          %s4212 = smul.addr %s4211, 8
          %s4213 = scalar_lea.vmem %s3, %s4212
          // Predicated region
          $region49: #{diff_forward.1} parent=47 // pred_check
            _
          $region50: #{diff_forward.1} parent=47 // pred_check_branch
            %4215 = sbr.rel (0) target = $region52
          $region51: #{diff_forward.1} parent=47 // pred_region
            // Predicated region
            $region53: #{diff_forward.1} parent=51 // pred_check
              _
            $region54: #{diff_forward.1} parent=51 // pred_check_branch
              %4217 = sbr.rel (0) target = $region56
            $region55: #{diff_forward.1} parent=51 // pred_region
              // Predicated region
              $region68: #{diff_forward.1} parent=55 // pred_check
                _
              $region69: #{diff_forward.1} parent=55 // pred_check_branch
                %4311 = sbr.rel (0) target = $region71
              $region70: #{diff_forward.1} parent=55 // pred_region
                loop: start=0, step=1, limit=1
                $region72: #{diff_forward.1} parent=70 // loop_pre_header
                  _
                $region73: #{diff_forward.1} parent=70 // loop_header
                  %s4313 = sphi 0, %s4317
                  %p4314 = scmp.ge.s32.totalorder %s4313, 1
                  %s4318 = sphi %s4207, %s4207
                  %s4319 = sphi %s4213, %s4213
                $region74: #{diff_forward.1} parent=70 // loop_header_branch
                  %4316 = sbr.rel (%p4314) target = $region78
                $region75: #{diff_forward.1} parent=70 // loop_body
                  %v4320 = vld [vmem:[%s4318] sm:$0xff]
                  %4321 = vst [vmem:[%s4319] sm:$0xff] %v4320
                  %v4322 = vld [vmem:[%s4318 + $0x8] sm:$0xff]
                  %4323 = vst [vmem:[%s4319 + $0x8] sm:$0xff] %v4322
                  %v4324 = vld [vmem:[%s4318 + $0x10] sm:$0xff]
                  %4325 = vst [vmem:[%s4319 + $0x10] sm:$0xff] %v4324
                  %v4326 = vld [vmem:[%s4318 + $0x18] sm:$0xff]
                  %4327 = vst [vmem:[%s4319 + $0x18] sm:$0xff] %v4326
                  %v4328 = vld [vmem:[%s4318 + $0x20] sm:$0xff]
                  %4329 = vst [vmem:[%s4319 + $0x20] sm:$0xff] %v4328
                  %v4330 = vld [vmem:[%s4318 + $0x28] sm:$0xff]
                  %4331 = vst [vmem:[%s4319 + $0x28] sm:$0xff] %v4330
                  %v4332 = vld [vmem:[%s4318 + $0x30] sm:$0xff]
                  %4333 = vst [vmem:[%s4319 + $0x30] sm:$0xff] %v4332
                  %v4334 = vld [vmem:[%s4318 + $0x38] sm:$0xff]
                  %4335 = vst [vmem:[%s4319 + $0x38] sm:$0xff] %v4334
                  %v4336 = vld [vmem:[%s4318 + $0x40] sm:$0xff]
                  %4337 = vst [vmem:[%s4319 + $0x80] sm:$0xff] %v4336
                  %v4338 = vld [vmem:[%s4318 + $0x48] sm:$0xff]
                  %4339 = vst [vmem:[%s4319 + $0x88] sm:$0xff] %v4338
                  %v4340 = vld [vmem:[%s4318 + $0x50] sm:$0xff]
                  %4341 = vst [vmem:[%s4319 + $0x90] sm:$0xff] %v4340
                  %v4342 = vld [vmem:[%s4318 + $0x58] sm:$0xff]
                  %4343 = vst [vmem:[%s4319 + $0x98] sm:$0xff] %v4342
                  %v4344 = vld [vmem:[%s4318 + $0x60] sm:$0xff]
                  %4345 = vst [vmem:[%s4319 + $0xa0] sm:$0xff] %v4344
                  %v4346 = vld [vmem:[%s4318 + $0x68] sm:$0xff]
                  %4347 = vst [vmem:[%s4319 + $0xa8] sm:$0xff] %v4346
                  %v4348 = vld [vmem:[%s4318 + $0x70] sm:$0xff]
                  %4349 = vst [vmem:[%s4319 + $0xb0] sm:$0xff] %v4348
                  %v4350 = vld [vmem:[%s4318 + $0x78] sm:$0xff]
                  %4351 = vst [vmem:[%s4319 + $0xb8] sm:$0xff] %v4350
                  %v4352 = vld [vmem:[%s4318 + $0x80] sm:$0xff]
                  %4353 = vst [vmem:[%s4319 + $0x100] sm:$0xff] %v4352
                  %v4354 = vld [vmem:[%s4318 + $0x88] sm:$0xff]
                  %4355 = vst [vmem:[%s4319 + $0x108] sm:$0xff] %v4354
                  %v4356 = vld [vmem:[%s4318 + $0x90] sm:$0xff]
                  %4357 = vst [vmem:[%s4319 + $0x110] sm:$0xff] %v4356
                  %v4358 = vld [vmem:[%s4318 + $0x98] sm:$0xff]
                  %4359 = vst [vmem:[%s4319 + $0x118] sm:$0xff] %v4358
                  %v4360 = vld [vmem:[%s4318 + $0xa0] sm:$0xff]
                  %4361 = vst [vmem:[%s4319 + $0x120] sm:$0xff] %v4360
                  %v4362 = vld [vmem:[%s4318 + $0xa8] sm:$0xff]
                  %4363 = vst [vmem:[%s4319 + $0x128] sm:$0xff] %v4362
                  %v4364 = vld [vmem:[%s4318 + $0xb0] sm:$0xff]
                  %4365 = vst [vmem:[%s4319 + $0x130] sm:$0xff] %v4364
                  %v4366 = vld [vmem:[%s4318 + $0xb8] sm:$0xff]
                  %4367 = vst [vmem:[%s4319 + $0x138] sm:$0xff] %v4366
                  %v4368 = vld [vmem:[%s4318 + $0xc0] sm:$0xff]
                  %4369 = vst [vmem:[%s4319 + $0x180] sm:$0xff] %v4368
                  %v4370 = vld [vmem:[%s4318 + $0xc8] sm:$0xff]
                  %4371 = vst [vmem:[%s4319 + $0x188] sm:$0xff] %v4370
                  %v4372 = vld [vmem:[%s4318 + $0xd0] sm:$0xff]
                  %4373 = vst [vmem:[%s4319 + $0x190] sm:$0xff] %v4372
                  %v4374 = vld [vmem:[%s4318 + $0xd8] sm:$0xff]
                  %4375 = vst [vmem:[%s4319 + $0x198] sm:$0xff] %v4374
                  %v4376 = vld [vmem:[%s4318 + $0xe0] sm:$0xff]
                  %4377 = vst [vmem:[%s4319 + $0x1a0] sm:$0xff] %v4376
                  %v4378 = vld [vmem:[%s4318 + $0xe8] sm:$0xff]
                  %4379 = vst [vmem:[%s4319 + $0x1a8] sm:$0xff] %v4378
                  %v4380 = vld [vmem:[%s4318 + $0xf0] sm:$0xff]
                  %4381 = vst [vmem:[%s4319 + $0x1b0] sm:$0xff] %v4380
                  %v4382 = vld [vmem:[%s4318 + $0xf8] sm:$0xff]
                  %4383 = vst [vmem:[%s4319 + $0x1b8] sm:$0xff] %v4382
                  %v4384 = vld [vmem:[%s4318 + $0x100] sm:$0xff]
                  %4385 = vst [vmem:[%s4319 + $0x200] sm:$0xff] %v4384
                  %v4386 = vld [vmem:[%s4318 + $0x108] sm:$0xff]
                  %4387 = vst [vmem:[%s4319 + $0x208] sm:$0xff] %v4386
                  %v4388 = vld [vmem:[%s4318 + $0x110] sm:$0xff]
                  %4389 = vst [vmem:[%s4319 + $0x210] sm:$0xff] %v4388
                  %v4390 = vld [vmem:[%s4318 + $0x118] sm:$0xff]
                  %4391 = vst [vmem:[%s4319 + $0x218] sm:$0xff] %v4390
                  %v4392 = vld [vmem:[%s4318 + $0x120] sm:$0xff]
                  %4393 = vst [vmem:[%s4319 + $0x220] sm:$0xff] %v4392
                  %v4394 = vld [vmem:[%s4318 + $0x128] sm:$0xff]
                  %4395 = vst [vmem:[%s4319 + $0x228] sm:$0xff] %v4394
                  %v4396 = vld [vmem:[%s4318 + $0x130] sm:$0xff]
                  %4397 = vst [vmem:[%s4319 + $0x230] sm:$0xff] %v4396
                  %v4398 = vld [vmem:[%s4318 + $0x138] sm:$0xff]
                  %4399 = vst [vmem:[%s4319 + $0x238] sm:$0xff] %v4398
                $region76: #{diff_forward.1} parent=70 // loop_footer
                  %s4317 = sadd.s32 1, %s4313
                $region77: #{diff_forward.1} parent=70 // loop_footer_branch
                  %4312 = sbr.rel target = $region73
                $region78: #{diff_forward.1} parent=70 // loop_exit
                  _
              $region71: #{diff_forward.1} parent=55 // pred_fallthru
                _
              // Predicated region
              $region79: #{diff_forward.1} parent=55 // pred_check
                _
              $region80: #{diff_forward.1} parent=55 // pred_check_branch
                %4401 = sbr.rel target = $region82
              $region81: #{diff_forward.1} parent=55 // pred_region
                _
              $region82: #{diff_forward.1} parent=55 // pred_fallthru
                _
            $region56: #{diff_forward.1} parent=51 // pred_fallthru
              _
            // Predicated region
            $region57: #{diff_forward.1} parent=51 // pred_check
              _
            $region58: #{diff_forward.1} parent=51 // pred_check_branch
              %4219 = sbr.rel target = $region60
            $region59: #{diff_forward.1} parent=51 // pred_region
              %s4221 = ssub.s32 256, 1
              loop: start=0, step=1, limit=1
              $region61: #{diff_forward.1} parent=59 // loop_pre_header
                _
              $region62: #{diff_forward.1} parent=59 // loop_header
                %s4223 = sphi 0, %s4227
                %p4224 = scmp.ge.s32.totalorder %s4223, 1
                %s4228 = sphi %s4207, %s4207
                %s4229 = sphi %s4213, %s4213
              $region63: #{diff_forward.1} parent=59 // loop_header_branch
                %4226 = sbr.rel (%p4224) target = $region67
              $region64: #{diff_forward.1} parent=59 // loop_body
                %v4230 = vld [vmem:[%s4228] sm:%s4221]
                %4231 = vst [vmem:[%s4229] sm:%s4221] %v4230
                %v4232 = vld [vmem:[%s4228 + $0x8] sm:%s4221]
                %4233 = vst [vmem:[%s4229 + $0x8] sm:%s4221] %v4232
                %v4234 = vld [vmem:[%s4228 + $0x10] sm:%s4221]
                %4235 = vst [vmem:[%s4229 + $0x10] sm:%s4221] %v4234
                %v4236 = vld [vmem:[%s4228 + $0x18] sm:%s4221]
                %4237 = vst [vmem:[%s4229 + $0x18] sm:%s4221] %v4236
                %v4238 = vld [vmem:[%s4228 + $0x20] sm:%s4221]
                %4239 = vst [vmem:[%s4229 + $0x20] sm:%s4221] %v4238
                %v4240 = vld [vmem:[%s4228 + $0x28] sm:%s4221]
                %4241 = vst [vmem:[%s4229 + $0x28] sm:%s4221] %v4240
                %v4242 = vld [vmem:[%s4228 + $0x30] sm:%s4221]
                %4243 = vst [vmem:[%s4229 + $0x30] sm:%s4221] %v4242
                %v4244 = vld [vmem:[%s4228 + $0x38] sm:%s4221]
                %4245 = vst [vmem:[%s4229 + $0x38] sm:%s4221] %v4244
                %v4246 = vld [vmem:[%s4228 + $0x40] sm:%s4221]
                %4247 = vst [vmem:[%s4229 + $0x80] sm:%s4221] %v4246
                %v4248 = vld [vmem:[%s4228 + $0x48] sm:%s4221]
                %4249 = vst [vmem:[%s4229 + $0x88] sm:%s4221] %v4248
                %v4250 = vld [vmem:[%s4228 + $0x50] sm:%s4221]
                %4251 = vst [vmem:[%s4229 + $0x90] sm:%s4221] %v4250
                %v4252 = vld [vmem:[%s4228 + $0x58] sm:%s4221]
                %4253 = vst [vmem:[%s4229 + $0x98] sm:%s4221] %v4252
                %v4254 = vld [vmem:[%s4228 + $0x60] sm:%s4221]
                %4255 = vst [vmem:[%s4229 + $0xa0] sm:%s4221] %v4254
                %v4256 = vld [vmem:[%s4228 + $0x68] sm:%s4221]
                %4257 = vst [vmem:[%s4229 + $0xa8] sm:%s4221] %v4256
                %v4258 = vld [vmem:[%s4228 + $0x70] sm:%s4221]
                %4259 = vst [vmem:[%s4229 + $0xb0] sm:%s4221] %v4258
                %v4260 = vld [vmem:[%s4228 + $0x78] sm:%s4221]
                %4261 = vst [vmem:[%s4229 + $0xb8] sm:%s4221] %v4260
                %v4262 = vld [vmem:[%s4228 + $0x80] sm:%s4221]
                %4263 = vst [vmem:[%s4229 + $0x100] sm:%s4221] %v4262
                %v4264 = vld [vmem:[%s4228 + $0x88] sm:%s4221]
                %4265 = vst [vmem:[%s4229 + $0x108] sm:%s4221] %v4264
                %v4266 = vld [vmem:[%s4228 + $0x90] sm:%s4221]
                %4267 = vst [vmem:[%s4229 + $0x110] sm:%s4221] %v4266
                %v4268 = vld [vmem:[%s4228 + $0x98] sm:%s4221]
                %4269 = vst [vmem:[%s4229 + $0x118] sm:%s4221] %v4268
                %v4270 = vld [vmem:[%s4228 + $0xa0] sm:%s4221]
                %4271 = vst [vmem:[%s4229 + $0x120] sm:%s4221] %v4270
                %v4272 = vld [vmem:[%s4228 + $0xa8] sm:%s4221]
                %4273 = vst [vmem:[%s4229 + $0x128] sm:%s4221] %v4272
                %v4274 = vld [vmem:[%s4228 + $0xb0] sm:%s4221]
                %4275 = vst [vmem:[%s4229 + $0x130] sm:%s4221] %v4274
                %v4276 = vld [vmem:[%s4228 + $0xb8] sm:%s4221]
                %4277 = vst [vmem:[%s4229 + $0x138] sm:%s4221] %v4276
                %v4278 = vld [vmem:[%s4228 + $0xc0] sm:%s4221]
                %4279 = vst [vmem:[%s4229 + $0x180] sm:%s4221] %v4278
                %v4280 = vld [vmem:[%s4228 + $0xc8] sm:%s4221]
                %4281 = vst [vmem:[%s4229 + $0x188] sm:%s4221] %v4280
                %v4282 = vld [vmem:[%s4228 + $0xd0] sm:%s4221]
                %4283 = vst [vmem:[%s4229 + $0x190] sm:%s4221] %v4282
                %v4284 = vld [vmem:[%s4228 + $0xd8] sm:%s4221]
                %4285 = vst [vmem:[%s4229 + $0x198] sm:%s4221] %v4284
                %v4286 = vld [vmem:[%s4228 + $0xe0] sm:%s4221]
                %4287 = vst [vmem:[%s4229 + $0x1a0] sm:%s4221] %v4286
                %v4288 = vld [vmem:[%s4228 + $0xe8] sm:%s4221]
                %4289 = vst [vmem:[%s4229 + $0x1a8] sm:%s4221] %v4288
                %v4290 = vld [vmem:[%s4228 + $0xf0] sm:%s4221]
                %4291 = vst [vmem:[%s4229 + $0x1b0] sm:%s4221] %v4290
                %v4292 = vld [vmem:[%s4228 + $0xf8] sm:%s4221]
                %4293 = vst [vmem:[%s4229 + $0x1b8] sm:%s4221] %v4292
                %v4294 = vld [vmem:[%s4228 + $0x100] sm:%s4221]
                %4295 = vst [vmem:[%s4229 + $0x200] sm:%s4221] %v4294
                %v4296 = vld [vmem:[%s4228 + $0x108] sm:%s4221]
                %4297 = vst [vmem:[%s4229 + $0x208] sm:%s4221] %v4296
                %v4298 = vld [vmem:[%s4228 + $0x110] sm:%s4221]
                %4299 = vst [vmem:[%s4229 + $0x210] sm:%s4221] %v4298
                %v4300 = vld [vmem:[%s4228 + $0x118] sm:%s4221]
                %4301 = vst [vmem:[%s4229 + $0x218] sm:%s4221] %v4300
                %v4302 = vld [vmem:[%s4228 + $0x120] sm:%s4221]
                %4303 = vst [vmem:[%s4229 + $0x220] sm:%s4221] %v4302
                %v4304 = vld [vmem:[%s4228 + $0x128] sm:%s4221]
                %4305 = vst [vmem:[%s4229 + $0x228] sm:%s4221] %v4304
                %v4306 = vld [vmem:[%s4228 + $0x130] sm:%s4221]
                %4307 = vst [vmem:[%s4229 + $0x230] sm:%s4221] %v4306
                %v4308 = vld [vmem:[%s4228 + $0x138] sm:%s4221]
                %4309 = vst [vmem:[%s4229 + $0x238] sm:%s4221] %v4308
              $region65: #{diff_forward.1} parent=59 // loop_footer
                %s4227 = sadd.s32 1, %s4223
              $region66: #{diff_forward.1} parent=59 // loop_footer_branch
                %4222 = sbr.rel target = $region62
              $region67: #{diff_forward.1} parent=59 // loop_exit
                _
            $region60: #{diff_forward.1} parent=51 // pred_fallthru
              _
          $region52: #{diff_forward.1} parent=47 // pred_fallthru
            _
          %4402 = vnop
        $region48: #{diff_forward.1} parent=31 // pred_fallthru
          _
      $region32: #{diff_forward.1} parent=5 // pred_fallthru
        _
      %p4403 = scmp.le.s32.totalorder 2, %s11
      // Predicated region
      $region83: #{diff_forward.1} parent=5 // pred_check
        %p4404 = pneg %p4403
      $region84: #{diff_forward.1} parent=5 // pred_check_branch
        %4406 = sbr.rel (%p4404) target = $region86
      $region85: #{diff_forward.1} parent=5 // pred_region
        %s4407 = ssub.s32 %s11, 2
        // Predicated region
        $region87: #{diff_forward.1} parent=85 // pred_check
          %p4408 = pneg %p108
        $region88: #{diff_forward.1} parent=85 // pred_check_branch
          %4410 = sbr.rel (%p4408) target = $region90
        $region89: #{diff_forward.1} parent=85 // pred_region
          %s4411 = sand.u32 %s93, 1
          %s4412 = sand.u32 %s93, 1
          %s4413 = smul.addr %s4412, 320
          %s4414 = scalar_lea.vmem [#allocation7], %s4413
        $region90: #{diff_forward.1} parent=85 // pred_fallthru
          _
      $region86: #{diff_forward.1} parent=5 // pred_fallthru
        _
    $region6: #{diff_forward.1} parent=1 // loop_footer
      %s15 = sadd.s32 1, %s11
    $region7: #{diff_forward.1} parent=1 // loop_footer_branch
      %10 = sbr.rel target = $region3
    $region8: #{diff_forward.1} parent=1 // loop_exit
      _
    %4415 = vsyncpa [#allocation3], 1
    %s4416 = scalar_lea.sflag [#allocation3], 1
    %4417 = vsyncpa %s4416, 1
    %4418 = vsyncpa [#allocation5], 1

</llo_original>
